<compile_context>
chip_gen: v6e
topology: v6e:2x2x1
jax: 0.10.0
libtpu: 0.0.40
codegen_flags: <defaults>
</compile_context>

<pallas_src>
import functools

import jax
import jax.numpy as jnp
from jax import lax
from jax.experimental import pallas as pl
from jax.experimental.pallas import tpu as pltpu


# -----------------------------------------------------------------------------
# Fused kernel: embedding-gather + biLSTM + Conv1d bank + ReLU + max pool + FC
# (whole batch in one grid step; all operands are VMEM-trivial at these sizes)
# -----------------------------------------------------------------------------
def _fused_lstm_cnn_kernel(
    ids_ref,          # SMEM (B*S,) int32 token ids (scalar prefetch), id = b*S+s
    tprojf_ref,       # (V, 1, 8H) fwd input projection table (+bias), gate-striped
    tprojb_ref,       # (V, 1, 8H) bwd input projection table (+bias), gate-striped
    whh_ref,          # (2H, 8H)   recurrent weight, gate-striped block diagonal
    wA_ref, bA_ref,   # (5, 2H, 2Fp), (1, 2Fp)  merged fs=3(+zero taps) / fs=5 bank
    wB_ref, bB_ref,   # (4, 2H, Fp),  (1, Fp)   fs=4 bank
    wfcA_ref, wfcB_ref, bfc_ref,   # (2Fp, C), (Fp, C), (1, C)
    logits_ref,       # (B, C)
    xproj_ref,        # scratch (S*R, 8H): gathered per-step input projections
    xpad_ref,         # scratch ((S+2*mp)*R, 2H): biLSTM output with zero halo
    *, batch, seq_len, hidden, rowpad, num_filters_p, max_pad):
  B, S, H, R = batch, seq_len, hidden, rowpad
  H2, H4, H6, H8 = 2 * hidden, 4 * hidden, 6 * hidden, 8 * hidden
  mp, Fp = max_pad, num_filters_p

  # ---- 0. zero scratches (conv halo rows + padded batch rows stay zero) ----
  xpad_ref[...] = jnp.zeros_like(xpad_ref)
  xproj_ref[...] = jnp.zeros_like(xproj_ref)

  # ---- 1. in-kernel embedding + input-projection gather --------------------
  # Step-block s, batch row b holds fwd-proj(tok[b, s]) + bwd-proj(tok[b, S-1-s]).
  # Each table is zero in the other direction's gate stripes, so one add builds
  # the full (1, 8H) row.  Off the recurrence critical path.
  for s in range(S):
    for b in range(B):
      tok_f = ids_ref[b * S + s]
      tok_b = ids_ref[b * S + (S - 1 - s)]
      xproj_ref[pl.ds(s * R + b, 1), :] = tprojf_ref[tok_f] + tprojb_ref[tok_b]

  # ---- 2. fused bidirectional recurrence (one matmul / step, batched) ------
  whh = whh_ref[...]            # hoisted (2H, 8H)

  def step(s, carry):
    h, c = carry                # (R, 2H) each; lanes = [fwd 0:H | bwd H:2H]
    row = pl.multiple_of(s * R, R)
    pre = (xproj_ref[pl.ds(row, R), :]
           + jnp.dot(h, whh, preferred_element_type=jnp.float32))   # (R, 8H)
    # gate-striped layout: [ i | f | g | o ], each 2H wide ([fwd|bwd]).
    sif = jax.nn.sigmoid(pre[:, 0:H4])          # i and f, both dirs, 128 lanes
    i, f = sif[:, 0:H2], sif[:, H2:H4]
    g = jnp.tanh(pre[:, H4:H6])
    o = jax.nn.sigmoid(pre[:, H6:H8])
    c = f * c + i * g
    h = o * jnp.tanh(c)
    rf = pl.multiple_of((mp + s) * R, R)                 # fwd output @ time s
    rb = pl.multiple_of((mp + (S - 1 - s)) * R, R)       # bwd output @ time S-1-s
    xpad_ref[pl.ds(rf, R), 0:H] = h[:, 0:H]
    xpad_ref[pl.ds(rb, R), H:H2] = h[:, H:H2]
    return (h, c)

  zeros = jnp.zeros((R, H2), jnp.float32)
  # unroll=True is fine at S=8; use a partial unroll factor for long sequences.
  lax.fori_loop(0, S, step, (zeros, zeros), unroll=True)

  # ---- 3. Conv1d banks + ReLU + global max pool ----------------------------
  # Bank A: fs=3 (zero-padded symmetrically to 5 taps) merged with fs=5.
  # Both have effective padding 2 and l_out = S; filter cols [0:Fp]=fs3, [Fp:2Fp]=fs5.
  wA = wA_ref[...]
  rowsA = S * R
  accA = (jnp.dot(xpad_ref[pl.ds(0, rowsA), :], wA[0],
                  preferred_element_type=jnp.float32) + bA_ref[...])
  for k in range(1, 5):
    accA = accA + jnp.dot(xpad_ref[pl.ds(k * R, rowsA), :], wA[k],
                          preferred_element_type=jnp.float32)
  pooledA = jnp.max(jnp.maximum(accA, 0.0).reshape(S, R, 2 * Fp), axis=0)

  # Bank B: fs=4 (padding 2, l_out = S + 1).
  wB = wB_ref[...]
  rowsB = (S + 1) * R
  accB = (jnp.dot(xpad_ref[pl.ds(0, rowsB), :], wB[0],
                  preferred_element_type=jnp.float32) + bB_ref[...])
  for k in range(1, 4):
    accB = accB + jnp.dot(xpad_ref[pl.ds(k * R, rowsB), :], wB[k],
                          preferred_element_type=jnp.float32)
  pooledB = jnp.max(jnp.maximum(accB, 0.0).reshape(S + 1, R, Fp), axis=0)

  # ---- 4. dropout (inference identity) + FC --------------------------------
  # FC weight is split to match pooledA ([fs3|fs5]) and pooledB (fs4); padded
  # filter columns have zero FC rows, so no un-padding is needed.
  out = (jnp.dot(pooledA, wfcA_ref[...], preferred_element_type=jnp.float32)
         + jnp.dot(pooledB, wfcB_ref[...], preferred_element_type=jnp.float32)
         + bfc_ref[...])                     # (R, C); rows B:R are padded junk
  logits_ref[...] = out[0:B, :]


# -----------------------------------------------------------------------------
# One-time parameter prepack (hoisted out of the per-call path)
# -----------------------------------------------------------------------------
def prepack_params(params, *, hidden, num_filters, filter_sizes, num_classes):
  assert tuple(filter_sizes) == (3, 4, 5), "kernel is specialized to (3, 4, 5)"
  H = hidden
  F = num_filters
  Fp = ((F + 127) // 128) * 128           # lane-pad the filter dim
  V = params["embedding"].shape[0]

  def stripe(fwd, bwd):
    # (..., 4H) in torch [i|f|g|o] order per direction -> (..., 8H) laid out
    # [i_f i_b | f_f f_b | g_f g_b | o_f o_b].
    pieces = []
    for g in range(4):
      pieces.append(fwd[..., g * H:(g + 1) * H])
      pieces.append(bwd[..., g * H:(g + 1) * H])
    return jnp.concatenate(pieces, axis=-1)

  emb = params["embedding"]
  z_v = jnp.zeros((V, 4 * H), jnp.float32)
  z_h = jnp.zeros((H, 4 * H), jnp.float32)
  tprojf = stripe(emb @ params["wih_f"] + params["b_f"], z_v)       # (V, 8H)
  tprojb = stripe(z_v, emb @ params["wih_b"] + params["b_b"])       # (V, 8H)
  whh = jnp.concatenate([stripe(params["whh_f"], z_h),
                         stripe(z_h, params["whh_b"])], axis=0)     # (2H, 8H)

  def pad_f(w):  # zero-pad filter (last) dim F -> Fp
    return jnp.pad(w, [(0, 0)] * (w.ndim - 1) + [(0, Fp - F)])

  w3 = jnp.pad(pad_f(params["conv_w3"]), ((1, 1), (0, 0), (0, 0)))  # 3 -> 5 taps
  w5 = pad_f(params["conv_w5"])
  wA = jnp.concatenate([w3, w5], axis=-1)                           # (5, 2H, 2Fp)
  bA = jnp.concatenate([pad_f(params["conv_b3"]), pad_f(params["conv_b5"])],
                       axis=-1)                                     # (1, 2Fp)
  wB = pad_f(params["conv_w4"])                                     # (4, 2H, Fp)
  bB = pad_f(params["conv_b4"])                                     # (1, Fp)

  fc = params["fc_w"].reshape(3, F, num_classes)    # conv order: fs3, fs4, fs5
  def pad_rows(w):
    return jnp.pad(w, ((0, Fp - F), (0, 0)))
  wfcA = jnp.concatenate([pad_rows(fc[0]), pad_rows(fc[2])], axis=0)  # (2Fp, C)
  wfcB = pad_rows(fc[1])                                              # (Fp, C)

  return dict(
      tprojf=tprojf.reshape(V, 1, 8 * H),
      tprojb=tprojb.reshape(V, 1, 8 * H),
      whh=whh, wA=wA, bA=bA, wB=wB, bB=bB,
      wfcA=wfcA, wfcB=wfcB, bfc=params["fc_b"])


# -----------------------------------------------------------------------------
# Per-call wrapper (only flattens ids; everything else is prepacked)
# -----------------------------------------------------------------------------
def lstm_cnn_forward(x_tokens, packed, *, hidden, num_filters, filter_sizes,
                     num_classes):
  assert tuple(filter_sizes) == (3, 4, 5)
  B, S = x_tokens.shape
  H = hidden
  Fp = ((num_filters + 127) // 128) * 128
  R = ((B + 7) // 8) * 8                 # sublane-aligned per-timestep row block
  mp = max(fs // 2 for fs in filter_sizes)
  C = num_classes
  V = packed["tprojf"].shape[0]

  ids = x_tokens.astype(jnp.int32).reshape(-1)       # id index = b*S + s

  kernel = functools.partial(
      _fused_lstm_cnn_kernel, batch=B, seq_len=S, hidden=H, rowpad=R,
      num_filters_p=Fp, max_pad=mp)

  def fullspec(shape):
    n = len(shape)
    return pl.BlockSpec(shape, lambda i, ids_ref, n=n: (0,) * n)

  grid_spec = pltpu.PrefetchScalarGridSpec(
      num_scalar_prefetch=1,
      grid=(1,),
      in_specs=[
          fullspec((V, 1, 8 * H)),            # tprojf
          fullspec((V, 1, 8 * H)),            # tprojb
          fullspec((2 * H, 8 * H)),           # whh
          fullspec((5, 2 * H, 2 * Fp)), fullspec((1, 2 * Fp)),   # bank A
          fullspec((4, 2 * H, Fp)), fullspec((1, Fp)),           # bank B
          fullspec((2 * Fp, C)), fullspec((Fp, C)), fullspec((1, C)),
      ],
      out_specs=fullspec((B, C)),
      scratch_shapes=[
          pltpu.VMEM((S * R, 8 * H), jnp.float32),
          pltpu.VMEM(((S + 2 * mp) * R, 2 * H), jnp.float32),
      ])

  # For large B/S/H: add a leading "parallel" batch grid axis (v7x has 2 TCs)
  # and budget per-block scratch against 64 MiB VMEM via vmem_limit_bytes.
  return pl.pallas_call(
      kernel,
      out_shape=jax.ShapeDtypeStruct((B, C), jnp.float32),
      grid_spec=grid_spec,
      compiler_params=pltpu.CompilerParams(
          dimension_semantics=("arbitrary",)),
  )(ids, packed["tprojf"], packed["tprojb"], packed["whh"],
    packed["wA"], packed["bA"], packed["wB"], packed["bB"],
    packed["wfcA"], packed["wfcB"], packed["bfc"])


# -----------------------------------------------------------------------------
# Deterministic synthetic parameters (shapes follow the nn.Module init)
# -----------------------------------------------------------------------------
def make_params(key, *, vocab_size, embed_dim, hidden, num_filters,
                filter_sizes, num_classes):
  H2 = 2 * hidden
  ks = list(jax.random.split(key, 20))

  def rnd(k, shape, scale=0.1):
    return jax.random.normal(k, shape, jnp.float32) * scale

  emb = rnd(ks[0], (vocab_size, embed_dim)).at[0].set(0.0)   # padding_idx = 0

  params = {
      "embedding": emb,
      # LSTM weights pre-transposed (in, 4H); combined bias = b_ih + b_hh
      "wih_f": rnd(ks[1], (embed_dim, 4 * hidden)),
      "whh_f": rnd(ks[2], (hidden, 4 * hidden)),
      "b_f":   rnd(ks[3], (1, 4 * hidden)),
      "wih_b": rnd(ks[4], (embed_dim, 4 * hidden)),
      "whh_b": rnd(ks[5], (hidden, 4 * hidden)),
      "b_b":   rnd(ks[6], (1, 4 * hidden)),
      # FC Linear(3F -> C), pre-transposed
      "fc_w": rnd(ks[7], (num_filters * len(filter_sizes), num_classes)),
      "fc_b": jnp.zeros((1, num_classes), jnp.float32),
  }
  # Conv1d weights repacked (F, C, K) -> (K, C, F); lane-padding to 128 happens
  # once in prepack_params.
  for i, fs in enumerate(filter_sizes):
    params[f"conv_w{fs}"] = rnd(ks[8 + 2 * i], (fs, H2, num_filters))
    params[f"conv_b{fs}"] = rnd(ks[9 + 2 * i], (1, num_filters))
  return params


if __name__ == "__main__":
  B, S = 2, 8
  VOCAB, E, H = 40, 32, 32
  NUM_FILTERS, NUM_CLASSES = 100, 3
  FILTER_SIZES = (3, 4, 5)

  key = jax.random.PRNGKey(0)
  k_par, k_tok = jax.random.split(key)
  params = make_params(k_par, vocab_size=VOCAB, embed_dim=E, hidden=H,
                       num_filters=NUM_FILTERS, filter_sizes=FILTER_SIZES,
                       num_classes=NUM_CLASSES)
  packed = prepack_params(params, hidden=H, num_filters=NUM_FILTERS,
                          filter_sizes=FILTER_SIZES, num_classes=NUM_CLASSES)
  packed = {k: jax.block_until_ready(v) for k, v in packed.items()}  # one-time

  x = jax.random.randint(k_tok, (B, S), 0, VOCAB, dtype=jnp.int32)

  logits = lstm_cnn_forward(x, packed, hidden=H, num_filters=NUM_FILTERS,
                            filter_sizes=FILTER_SIZES,
                            num_classes=NUM_CLASSES)
  jax.block_until_ready(logits)
  assert logits.shape == (B, NUM_CLASSES)
  print("KERNEL_OK")
</pallas_src>

<mosaic_0001>
module attributes {stable_mosaic.version = 11 : i64} {
  func.func @_fused_lstm_cnn_kernel(%arg0: i32, %arg1: memref<16xi32, #tpu.memory_space<smem>>, %arg2: memref<40x1x256xf32, #tpu.memory_space<vmem>>, %arg3: memref<40x1x256xf32, #tpu.memory_space<vmem>>, %arg4: memref<64x256xf32, #tpu.memory_space<vmem>>, %arg5: memref<5x64x256xf32, #tpu.memory_space<vmem>>, %arg6: memref<1x256xf32, #tpu.memory_space<vmem>>, %arg7: memref<4x64x128xf32, #tpu.memory_space<vmem>>, %arg8: memref<1x128xf32, #tpu.memory_space<vmem>>, %arg9: memref<256x3xf32, #tpu.memory_space<vmem>>, %arg10: memref<128x3xf32, #tpu.memory_space<vmem>>, %arg11: memref<1x3xf32, #tpu.memory_space<vmem>>, %arg12: memref<2x3xf32, #tpu.memory_space<vmem>>, %arg13: memref<64x256xf32, #tpu.memory_space<vmem>>, %arg14: memref<96x64xf32, #tpu.memory_space<vmem>>) attributes {dimension_semantics = [#tpu.dimension_semantics<arbitrary>], iteration_bounds = array<i64: 1>, scalar_prefetch = 1 : i64, scratch_operands = 2 : i64, tpu.core_type = #tpu.core_type<tc>, window_params = [{pipeline_mode = #tpu.pipeline_mode<synchronous>, transform_indices = @transform_0, window_bounds = array<i64: 40, 1, 256>}, {pipeline_mode = #tpu.pipeline_mode<synchronous>, transform_indices = @transform_1, window_bounds = array<i64: 40, 1, 256>}, {pipeline_mode = #tpu.pipeline_mode<synchronous>, transform_indices = @transform_2, window_bounds = array<i64: 64, 256>}, {pipeline_mode = #tpu.pipeline_mode<synchronous>, transform_indices = @transform_3, window_bounds = array<i64: 5, 64, 256>}, {pipeline_mode = #tpu.pipeline_mode<synchronous>, transform_indices = @transform_4, window_bounds = array<i64: 1, 256>}, {pipeline_mode = #tpu.pipeline_mode<synchronous>, transform_indices = @transform_5, window_bounds = array<i64: 4, 64, 128>}, {pipeline_mode = #tpu.pipeline_mode<synchronous>, transform_indices = @transform_6, window_bounds = array<i64: 1, 128>}, {pipeline_mode = #tpu.pipeline_mode<synchronous>, transform_indices = @transform_7, window_bounds = array<i64: 256, 3>}, {pipeline_mode = #tpu.pipeline_mode<synchronous>, transform_indices = @transform_8, window_bounds = array<i64: 128, 3>}, {pipeline_mode = #tpu.pipeline_mode<synchronous>, transform_indices = @transform_9, window_bounds = array<i64: 1, 3>}, {pipeline_mode = #tpu.pipeline_mode<synchronous>, transform_indices = @transform_10, window_bounds = array<i64: 2, 3>}]} {
    %cst = arith.constant 0.000000e+00 : f32
    %0 = vector.broadcast %cst : f32 to vector<96x64xf32>
    %c0 = arith.constant 0 : index
    %c0_0 = arith.constant 0 : index
    %1 = vector.load %arg14[%c0, %c0_0] : memref<96x64xf32, #tpu.memory_space<vmem>>, vector<96x64xf32>
    tpu.vector_store %arg14[%c0, %c0_0], %0 {strides = array<i32>} : memref<96x64xf32, #tpu.memory_space<vmem>>, vector<96x64xf32>,
    %cst_1 = arith.constant 0.000000e+00 : f32
    %2 = vector.broadcast %cst_1 : f32 to vector<64x256xf32>
    %c0_2 = arith.constant 0 : index
    %c0_3 = arith.constant 0 : index
    %3 = vector.load %arg13[%c0_2, %c0_3] : memref<64x256xf32, #tpu.memory_space<vmem>>, vector<64x256xf32>
    tpu.vector_store %arg13[%c0_2, %c0_3], %2 {strides = array<i32>} : memref<64x256xf32, #tpu.memory_space<vmem>>, vector<64x256xf32>,
    %c0_4 = arith.constant 0 : index
    %4 = memref.load %arg1[%c0_4] : memref<16xi32, #tpu.memory_space<smem>>
    %c7 = arith.constant 7 : index
    %5 = memref.load %arg1[%c7] : memref<16xi32, #tpu.memory_space<smem>>
    %6 = arith.index_cast %4 : i32 to index
    %c0_5 = arith.constant 0 : index
    %c0_6 = arith.constant 0 : index
    %7 = vector.load %arg2[%6, %c0_5, %c0_6] : memref<40x1x256xf32, #tpu.memory_space<vmem>>, vector<1x1x256xf32>
    %8 = vector.shape_cast %7 : vector<1x1x256xf32> to vector<1x256xf32>
    %9 = arith.index_cast %5 : i32 to index
    %c0_7 = arith.constant 0 : index
    %c0_8 = arith.constant 0 : index
    %10 = vector.load %arg3[%9, %c0_7, %c0_8] : memref<40x1x256xf32, #tpu.memory_space<vmem>>, vector<1x1x256xf32>
    %11 = vector.shape_cast %10 : vector<1x1x256xf32> to vector<1x256xf32>
    %12 = arith.addf %8, %11 : vector<1x256xf32>
    %c0_9 = arith.constant 0 : index
    %c0_10 = arith.constant 0 : index
    %13 = vector.load %arg13[%c0_9, %c0_10] : memref<64x256xf32, #tpu.memory_space<vmem>>, vector<1x256xf32>
    tpu.vector_store %arg13[%c0_9, %c0_10], %12 {strides = array<i32>} : memref<64x256xf32, #tpu.memory_space<vmem>>, vector<1x256xf32>,
    %c8 = arith.constant 8 : index
    %14 = memref.load %arg1[%c8] : memref<16xi32, #tpu.memory_space<smem>>
    %c15 = arith.constant 15 : index
    %15 = memref.load %arg1[%c15] : memref<16xi32, #tpu.memory_space<smem>>
    %16 = arith.index_cast %14 : i32 to index
    %c0_11 = arith.constant 0 : index
    %c0_12 = arith.constant 0 : index
    %17 = vector.load %arg2[%16, %c0_11, %c0_12] : memref<40x1x256xf32, #tpu.memory_space<vmem>>, vector<1x1x256xf32>
    %18 = vector.shape_cast %17 : vector<1x1x256xf32> to vector<1x256xf32>
    %19 = arith.index_cast %15 : i32 to index
    %c0_13 = arith.constant 0 : index
    %c0_14 = arith.constant 0 : index
    %20 = vector.load %arg3[%19, %c0_13, %c0_14] : memref<40x1x256xf32, #tpu.memory_space<vmem>>, vector<1x1x256xf32>
    %21 = vector.shape_cast %20 : vector<1x1x256xf32> to vector<1x256xf32>
    %22 = arith.addf %18, %21 : vector<1x256xf32>
    %c1 = arith.constant 1 : index
    %c0_15 = arith.constant 0 : index
    %23 = vector.load %arg13[%c1, %c0_15] : memref<64x256xf32, #tpu.memory_space<vmem>>, vector<1x256xf32>
    tpu.vector_store %arg13[%c1, %c0_15], %22 {strides = array<i32>} : memref<64x256xf32, #tpu.memory_space<vmem>>, vector<1x256xf32>,
    %c1_16 = arith.constant 1 : index
    %24 = memref.load %arg1[%c1_16] : memref<16xi32, #tpu.memory_space<smem>>
    %c6 = arith.constant 6 : index
    %25 = memref.load %arg1[%c6] : memref<16xi32, #tpu.memory_space<smem>>
    %26 = arith.index_cast %24 : i32 to index
    %c0_17 = arith.constant 0 : index
    %c0_18 = arith.constant 0 : index
    %27 = vector.load %arg2[%26, %c0_17, %c0_18] : memref<40x1x256xf32, #tpu.memory_space<vmem>>, vector<1x1x256xf32>
    %28 = vector.shape_cast %27 : vector<1x1x256xf32> to vector<1x256xf32>
    %29 = arith.index_cast %25 : i32 to index
    %c0_19 = arith.constant 0 : index
    %c0_20 = arith.constant 0 : index
    %30 = vector.load %arg3[%29, %c0_19, %c0_20] : memref<40x1x256xf32, #tpu.memory_space<vmem>>, vector<1x1x256xf32>
    %31 = vector.shape_cast %30 : vector<1x1x256xf32> to vector<1x256xf32>
    %32 = arith.addf %28, %31 : vector<1x256xf32>
    %c8_21 = arith.constant 8 : index
    %c0_22 = arith.constant 0 : index
    %33 = vector.load %arg13[%c8_21, %c0_22] : memref<64x256xf32, #tpu.memory_space<vmem>>, vector<1x256xf32>
    tpu.vector_store %arg13[%c8_21, %c0_22], %32 {strides = array<i32>} : memref<64x256xf32, #tpu.memory_space<vmem>>, vector<1x256xf32>,
    %c9 = arith.constant 9 : index
    %34 = memref.load %arg1[%c9] : memref<16xi32, #tpu.memory_space<smem>>
    %c14 = arith.constant 14 : index
    %35 = memref.load %arg1[%c14] : memref<16xi32, #tpu.memory_space<smem>>
    %36 = arith.index_cast %34 : i32 to index
    %c0_23 = arith.constant 0 : index
    %c0_24 = arith.constant 0 : index
    %37 = vector.load %arg2[%36, %c0_23, %c0_24] : memref<40x1x256xf32, #tpu.memory_space<vmem>>, vector<1x1x256xf32>
    %38 = vector.shape_cast %37 : vector<1x1x256xf32> to vector<1x256xf32>
    %39 = arith.index_cast %35 : i32 to index
    %c0_25 = arith.constant 0 : index
    %c0_26 = arith.constant 0 : index
    %40 = vector.load %arg3[%39, %c0_25, %c0_26] : memref<40x1x256xf32, #tpu.memory_space<vmem>>, vector<1x1x256xf32>
    %41 = vector.shape_cast %40 : vector<1x1x256xf32> to vector<1x256xf32>
    %42 = arith.addf %38, %41 : vector<1x256xf32>
    %c9_27 = arith.constant 9 : index
    %c0_28 = arith.constant 0 : index
    %43 = vector.load %arg13[%c9_27, %c0_28] : memref<64x256xf32, #tpu.memory_space<vmem>>, vector<1x256xf32>
    tpu.vector_store %arg13[%c9_27, %c0_28], %42 {strides = array<i32>} : memref<64x256xf32, #tpu.memory_space<vmem>>, vector<1x256xf32>,
    %c2 = arith.constant 2 : index
    %44 = memref.load %arg1[%c2] : memref<16xi32, #tpu.memory_space<smem>>
    %c5 = arith.constant 5 : index
    %45 = memref.load %arg1[%c5] : memref<16xi32, #tpu.memory_space<smem>>
    %46 = arith.index_cast %44 : i32 to index
    %c0_29 = arith.constant 0 : index
    %c0_30 = arith.constant 0 : index
    %47 = vector.load %arg2[%46, %c0_29, %c0_30] : memref<40x1x256xf32, #tpu.memory_space<vmem>>, vector<1x1x256xf32>
    %48 = vector.shape_cast %47 : vector<1x1x256xf32> to vector<1x256xf32>
    %49 = arith.index_cast %45 : i32 to index
    %c0_31 = arith.constant 0 : index
    %c0_32 = arith.constant 0 : index
    %50 = vector.load %arg3[%49, %c0_31, %c0_32] : memref<40x1x256xf32, #tpu.memory_space<vmem>>, vector<1x1x256xf32>
    %51 = vector.shape_cast %50 : vector<1x1x256xf32> to vector<1x256xf32>
    %52 = arith.addf %48, %51 : vector<1x256xf32>
    %c16 = arith.constant 16 : index
    %c0_33 = arith.constant 0 : index
    %53 = vector.load %arg13[%c16, %c0_33] : memref<64x256xf32, #tpu.memory_space<vmem>>, vector<1x256xf32>
    tpu.vector_store %arg13[%c16, %c0_33], %52 {strides = array<i32>} : memref<64x256xf32, #tpu.memory_space<vmem>>, vector<1x256xf32>,
    %c10 = arith.constant 10 : index
    %54 = memref.load %arg1[%c10] : memref<16xi32, #tpu.memory_space<smem>>
    %c13 = arith.constant 13 : index
    %55 = memref.load %arg1[%c13] : memref<16xi32, #tpu.memory_space<smem>>
    %56 = arith.index_cast %54 : i32 to index
    %c0_34 = arith.constant 0 : index
    %c0_35 = arith.constant 0 : index
    %57 = vector.load %arg2[%56, %c0_34, %c0_35] : memref<40x1x256xf32, #tpu.memory_space<vmem>>, vector<1x1x256xf32>
    %58 = vector.shape_cast %57 : vector<1x1x256xf32> to vector<1x256xf32>
    %59 = arith.index_cast %55 : i32 to index
    %c0_36 = arith.constant 0 : index
    %c0_37 = arith.constant 0 : index
    %60 = vector.load %arg3[%59, %c0_36, %c0_37] : memref<40x1x256xf32, #tpu.memory_space<vmem>>, vector<1x1x256xf32>
    %61 = vector.shape_cast %60 : vector<1x1x256xf32> to vector<1x256xf32>
    %62 = arith.addf %58, %61 : vector<1x256xf32>
    %c17 = arith.constant 17 : index
    %c0_38 = arith.constant 0 : index
    %63 = vector.load %arg13[%c17, %c0_38] : memref<64x256xf32, #tpu.memory_space<vmem>>, vector<1x256xf32>
    tpu.vector_store %arg13[%c17, %c0_38], %62 {strides = array<i32>} : memref<64x256xf32, #tpu.memory_space<vmem>>, vector<1x256xf32>,
    %c3 = arith.constant 3 : index
    %64 = memref.load %arg1[%c3] : memref<16xi32, #tpu.memory_space<smem>>
    %c4 = arith.constant 4 : index
    %65 = memref.load %arg1[%c4] : memref<16xi32, #tpu.memory_space<smem>>
    %66 = arith.index_cast %64 : i32 to index
    %c0_39 = arith.constant 0 : index
    %c0_40 = arith.constant 0 : index
    %67 = vector.load %arg2[%66, %c0_39, %c0_40] : memref<40x1x256xf32, #tpu.memory_space<vmem>>, vector<1x1x256xf32>
    %68 = vector.shape_cast %67 : vector<1x1x256xf32> to vector<1x256xf32>
    %69 = arith.index_cast %65 : i32 to index
    %c0_41 = arith.constant 0 : index
    %c0_42 = arith.constant 0 : index
    %70 = vector.load %arg3[%69, %c0_41, %c0_42] : memref<40x1x256xf32, #tpu.memory_space<vmem>>, vector<1x1x256xf32>
    %71 = vector.shape_cast %70 : vector<1x1x256xf32> to vector<1x256xf32>
    %72 = arith.addf %68, %71 : vector<1x256xf32>
    %c24 = arith.constant 24 : index
    %c0_43 = arith.constant 0 : index
    %73 = vector.load %arg13[%c24, %c0_43] : memref<64x256xf32, #tpu.memory_space<vmem>>, vector<1x256xf32>
    tpu.vector_store %arg13[%c24, %c0_43], %72 {strides = array<i32>} : memref<64x256xf32, #tpu.memory_space<vmem>>, vector<1x256xf32>,
    %c11 = arith.constant 11 : index
    %74 = memref.load %arg1[%c11] : memref<16xi32, #tpu.memory_space<smem>>
    %c12 = arith.constant 12 : index
    %75 = memref.load %arg1[%c12] : memref<16xi32, #tpu.memory_space<smem>>
    %76 = arith.index_cast %74 : i32 to index
    %c0_44 = arith.constant 0 : index
    %c0_45 = arith.constant 0 : index
    %77 = vector.load %arg2[%76, %c0_44, %c0_45] : memref<40x1x256xf32, #tpu.memory_space<vmem>>, vector<1x1x256xf32>
    %78 = vector.shape_cast %77 : vector<1x1x256xf32> to vector<1x256xf32>
    %79 = arith.index_cast %75 : i32 to index
    %c0_46 = arith.constant 0 : index
    %c0_47 = arith.constant 0 : index
    %80 = vector.load %arg3[%79, %c0_46, %c0_47] : memref<40x1x256xf32, #tpu.memory_space<vmem>>, vector<1x1x256xf32>
    %81 = vector.shape_cast %80 : vector<1x1x256xf32> to vector<1x256xf32>
    %82 = arith.addf %78, %81 : vector<1x256xf32>
    %c25 = arith.constant 25 : index
    %c0_48 = arith.constant 0 : index
    %83 = vector.load %arg13[%c25, %c0_48] : memref<64x256xf32, #tpu.memory_space<vmem>>, vector<1x256xf32>
    tpu.vector_store %arg13[%c25, %c0_48], %82 {strides = array<i32>} : memref<64x256xf32, #tpu.memory_space<vmem>>, vector<1x256xf32>,
    %c4_49 = arith.constant 4 : index
    %84 = memref.load %arg1[%c4_49] : memref<16xi32, #tpu.memory_space<smem>>
    %c3_50 = arith.constant 3 : index
    %85 = memref.load %arg1[%c3_50] : memref<16xi32, #tpu.memory_space<smem>>
    %86 = arith.index_cast %84 : i32 to index
    %c0_51 = arith.constant 0 : index
    %c0_52 = arith.constant 0 : index
    %87 = vector.load %arg2[%86, %c0_51, %c0_52] : memref<40x1x256xf32, #tpu.memory_space<vmem>>, vector<1x1x256xf32>
    %88 = vector.shape_cast %87 : vector<1x1x256xf32> to vector<1x256xf32>
    %89 = arith.index_cast %85 : i32 to index
    %c0_53 = arith.constant 0 : index
    %c0_54 = arith.constant 0 : index
    %90 = vector.load %arg3[%89, %c0_53, %c0_54] : memref<40x1x256xf32, #tpu.memory_space<vmem>>, vector<1x1x256xf32>
    %91 = vector.shape_cast %90 : vector<1x1x256xf32> to vector<1x256xf32>
    %92 = arith.addf %88, %91 : vector<1x256xf32>
    %c32 = arith.constant 32 : index
    %c0_55 = arith.constant 0 : index
    %93 = vector.load %arg13[%c32, %c0_55] : memref<64x256xf32, #tpu.memory_space<vmem>>, vector<1x256xf32>
    tpu.vector_store %arg13[%c32, %c0_55], %92 {strides = array<i32>} : memref<64x256xf32, #tpu.memory_space<vmem>>, vector<1x256xf32>,
    %c12_56 = arith.constant 12 : index
    %94 = memref.load %arg1[%c12_56] : memref<16xi32, #tpu.memory_space<smem>>
    %c11_57 = arith.constant 11 : index
    %95 = memref.load %arg1[%c11_57] : memref<16xi32, #tpu.memory_space<smem>>
    %96 = arith.index_cast %94 : i32 to index
    %c0_58 = arith.constant 0 : index
    %c0_59 = arith.constant 0 : index
    %97 = vector.load %arg2[%96, %c0_58, %c0_59] : memref<40x1x256xf32, #tpu.memory_space<vmem>>, vector<1x1x256xf32>
    %98 = vector.shape_cast %97 : vector<1x1x256xf32> to vector<1x256xf32>
    %99 = arith.index_cast %95 : i32 to index
    %c0_60 = arith.constant 0 : index
    %c0_61 = arith.constant 0 : index
    %100 = vector.load %arg3[%99, %c0_60, %c0_61] : memref<40x1x256xf32, #tpu.memory_space<vmem>>, vector<1x1x256xf32>
    %101 = vector.shape_cast %100 : vector<1x1x256xf32> to vector<1x256xf32>
    %102 = arith.addf %98, %101 : vector<1x256xf32>
    %c33 = arith.constant 33 : index
    %c0_62 = arith.constant 0 : index
    %103 = vector.load %arg13[%c33, %c0_62] : memref<64x256xf32, #tpu.memory_space<vmem>>, vector<1x256xf32>
    tpu.vector_store %arg13[%c33, %c0_62], %102 {strides = array<i32>} : memref<64x256xf32, #tpu.memory_space<vmem>>, vector<1x256xf32>,
    %c5_63 = arith.constant 5 : index
    %104 = memref.load %arg1[%c5_63] : memref<16xi32, #tpu.memory_space<smem>>
    %c2_64 = arith.constant 2 : index
    %105 = memref.load %arg1[%c2_64] : memref<16xi32, #tpu.memory_space<smem>>
    %106 = arith.index_cast %104 : i32 to index
    %c0_65 = arith.constant 0 : index
    %c0_66 = arith.constant 0 : index
    %107 = vector.load %arg2[%106, %c0_65, %c0_66] : memref<40x1x256xf32, #tpu.memory_space<vmem>>, vector<1x1x256xf32>
    %108 = vector.shape_cast %107 : vector<1x1x256xf32> to vector<1x256xf32>
    %109 = arith.index_cast %105 : i32 to index
    %c0_67 = arith.constant 0 : index
    %c0_68 = arith.constant 0 : index
    %110 = vector.load %arg3[%109, %c0_67, %c0_68] : memref<40x1x256xf32, #tpu.memory_space<vmem>>, vector<1x1x256xf32>
    %111 = vector.shape_cast %110 : vector<1x1x256xf32> to vector<1x256xf32>
    %112 = arith.addf %108, %111 : vector<1x256xf32>
    %c40 = arith.constant 40 : index
    %c0_69 = arith.constant 0 : index
    %113 = vector.load %arg13[%c40, %c0_69] : memref<64x256xf32, #tpu.memory_space<vmem>>, vector<1x256xf32>
    tpu.vector_store %arg13[%c40, %c0_69], %112 {strides = array<i32>} : memref<64x256xf32, #tpu.memory_space<vmem>>, vector<1x256xf32>,
    %c13_70 = arith.constant 13 : index
    %114 = memref.load %arg1[%c13_70] : memref<16xi32, #tpu.memory_space<smem>>
    %c10_71 = arith.constant 10 : index
    %115 = memref.load %arg1[%c10_71] : memref<16xi32, #tpu.memory_space<smem>>
    %116 = arith.index_cast %114 : i32 to index
    %c0_72 = arith.constant 0 : index
    %c0_73 = arith.constant 0 : index
    %117 = vector.load %arg2[%116, %c0_72, %c0_73] : memref<40x1x256xf32, #tpu.memory_space<vmem>>, vector<1x1x256xf32>
    %118 = vector.shape_cast %117 : vector<1x1x256xf32> to vector<1x256xf32>
    %119 = arith.index_cast %115 : i32 to index
    %c0_74 = arith.constant 0 : index
    %c0_75 = arith.constant 0 : index
    %120 = vector.load %arg3[%119, %c0_74, %c0_75] : memref<40x1x256xf32, #tpu.memory_space<vmem>>, vector<1x1x256xf32>
    %121 = vector.shape_cast %120 : vector<1x1x256xf32> to vector<1x256xf32>
    %122 = arith.addf %118, %121 : vector<1x256xf32>
    %c41 = arith.constant 41 : index
    %c0_76 = arith.constant 0 : index
    %123 = vector.load %arg13[%c41, %c0_76] : memref<64x256xf32, #tpu.memory_space<vmem>>, vector<1x256xf32>
    tpu.vector_store %arg13[%c41, %c0_76], %122 {strides = array<i32>} : memref<64x256xf32, #tpu.memory_space<vmem>>, vector<1x256xf32>,
    %c6_77 = arith.constant 6 : index
    %124 = memref.load %arg1[%c6_77] : memref<16xi32, #tpu.memory_space<smem>>
    %c1_78 = arith.constant 1 : index
    %125 = memref.load %arg1[%c1_78] : memref<16xi32, #tpu.memory_space<smem>>
    %126 = arith.index_cast %124 : i32 to index
    %c0_79 = arith.constant 0 : index
    %c0_80 = arith.constant 0 : index
    %127 = vector.load %arg2[%126, %c0_79, %c0_80] : memref<40x1x256xf32, #tpu.memory_space<vmem>>, vector<1x1x256xf32>
    %128 = vector.shape_cast %127 : vector<1x1x256xf32> to vector<1x256xf32>
    %129 = arith.index_cast %125 : i32 to index
    %c0_81 = arith.constant 0 : index
    %c0_82 = arith.constant 0 : index
    %130 = vector.load %arg3[%129, %c0_81, %c0_82] : memref<40x1x256xf32, #tpu.memory_space<vmem>>, vector<1x1x256xf32>
    %131 = vector.shape_cast %130 : vector<1x1x256xf32> to vector<1x256xf32>
    %132 = arith.addf %128, %131 : vector<1x256xf32>
    %c48 = arith.constant 48 : index
    %c0_83 = arith.constant 0 : index
    %133 = vector.load %arg13[%c48, %c0_83] : memref<64x256xf32, #tpu.memory_space<vmem>>, vector<1x256xf32>
    tpu.vector_store %arg13[%c48, %c0_83], %132 {strides = array<i32>} : memref<64x256xf32, #tpu.memory_space<vmem>>, vector<1x256xf32>,
    %c14_84 = arith.constant 14 : index
    %134 = memref.load %arg1[%c14_84] : memref<16xi32, #tpu.memory_space<smem>>
    %c9_85 = arith.constant 9 : index
    %135 = memref.load %arg1[%c9_85] : memref<16xi32, #tpu.memory_space<smem>>
    %136 = arith.index_cast %134 : i32 to index
    %c0_86 = arith.constant 0 : index
    %c0_87 = arith.constant 0 : index
    %137 = vector.load %arg2[%136, %c0_86, %c0_87] : memref<40x1x256xf32, #tpu.memory_space<vmem>>, vector<1x1x256xf32>
    %138 = vector.shape_cast %137 : vector<1x1x256xf32> to vector<1x256xf32>
    %139 = arith.index_cast %135 : i32 to index
    %c0_88 = arith.constant 0 : index
    %c0_89 = arith.constant 0 : index
    %140 = vector.load %arg3[%139, %c0_88, %c0_89] : memref<40x1x256xf32, #tpu.memory_space<vmem>>, vector<1x1x256xf32>
    %141 = vector.shape_cast %140 : vector<1x1x256xf32> to vector<1x256xf32>
    %142 = arith.addf %138, %141 : vector<1x256xf32>
    %c49 = arith.constant 49 : index
    %c0_90 = arith.constant 0 : index
    %143 = vector.load %arg13[%c49, %c0_90] : memref<64x256xf32, #tpu.memory_space<vmem>>, vector<1x256xf32>
    tpu.vector_store %arg13[%c49, %c0_90], %142 {strides = array<i32>} : memref<64x256xf32, #tpu.memory_space<vmem>>, vector<1x256xf32>,
    %c7_91 = arith.constant 7 : index
    %144 = memref.load %arg1[%c7_91] : memref<16xi32, #tpu.memory_space<smem>>
    %c0_92 = arith.constant 0 : index
    %145 = memref.load %arg1[%c0_92] : memref<16xi32, #tpu.memory_space<smem>>
    %146 = arith.index_cast %144 : i32 to index
    %c0_93 = arith.constant 0 : index
    %c0_94 = arith.constant 0 : index
    %147 = vector.load %arg2[%146, %c0_93, %c0_94] : memref<40x1x256xf32, #tpu.memory_space<vmem>>, vector<1x1x256xf32>
    %148 = vector.shape_cast %147 : vector<1x1x256xf32> to vector<1x256xf32>
    %149 = arith.index_cast %145 : i32 to index
    %c0_95 = arith.constant 0 : index
    %c0_96 = arith.constant 0 : index
    %150 = vector.load %arg3[%149, %c0_95, %c0_96] : memref<40x1x256xf32, #tpu.memory_space<vmem>>, vector<1x1x256xf32>
    %151 = vector.shape_cast %150 : vector<1x1x256xf32> to vector<1x256xf32>
    %152 = arith.addf %148, %151 : vector<1x256xf32>
    %c56 = arith.constant 56 : index
    %c0_97 = arith.constant 0 : index
    %153 = vector.load %arg13[%c56, %c0_97] : memref<64x256xf32, #tpu.memory_space<vmem>>, vector<1x256xf32>
    tpu.vector_store %arg13[%c56, %c0_97], %152 {strides = array<i32>} : memref<64x256xf32, #tpu.memory_space<vmem>>, vector<1x256xf32>,
    %c15_98 = arith.constant 15 : index
    %154 = memref.load %arg1[%c15_98] : memref<16xi32, #tpu.memory_space<smem>>
    %c8_99 = arith.constant 8 : index
    %155 = memref.load %arg1[%c8_99] : memref<16xi32, #tpu.memory_space<smem>>
    %156 = arith.index_cast %154 : i32 to index
    %c0_100 = arith.constant 0 : index
    %c0_101 = arith.constant 0 : index
    %157 = vector.load %arg2[%156, %c0_100, %c0_101] : memref<40x1x256xf32, #tpu.memory_space<vmem>>, vector<1x1x256xf32>
    %158 = vector.shape_cast %157 : vector<1x1x256xf32> to vector<1x256xf32>
    %159 = arith.index_cast %155 : i32 to index
    %c0_102 = arith.constant 0 : index
    %c0_103 = arith.constant 0 : index
    %160 = vector.load %arg3[%159, %c0_102, %c0_103] : memref<40x1x256xf32, #tpu.memory_space<vmem>>, vector<1x1x256xf32>
    %161 = vector.shape_cast %160 : vector<1x1x256xf32> to vector<1x256xf32>
    %162 = arith.addf %158, %161 : vector<1x256xf32>
    %c57 = arith.constant 57 : index
    %c0_104 = arith.constant 0 : index
    %163 = vector.load %arg13[%c57, %c0_104] : memref<64x256xf32, #tpu.memory_space<vmem>>, vector<1x256xf32>
    tpu.vector_store %arg13[%c57, %c0_104], %162 {strides = array<i32>} : memref<64x256xf32, #tpu.memory_space<vmem>>, vector<1x256xf32>,
    %c0_105 = arith.constant 0 : index
    %c0_106 = arith.constant 0 : index
    %164 = vector.load %arg4[%c0_105, %c0_106] : memref<64x256xf32, #tpu.memory_space<vmem>>, vector<64x256xf32>
    %cst_107 = arith.constant 0.000000e+00 : f32
    %165 = vector.broadcast %cst_107 : f32 to vector<8x64xf32>
    %c0_i32 = arith.constant 0 : i32
    %c8_i32 = arith.constant 8 : i32
    %166 = arith.muli %c0_i32, %c8_i32 : i32
    %167 = tpu.assume_multiple %166, 8 : i32
    %168 = arith.index_cast %167 : i32 to index
    %c0_108 = arith.constant 0 : index
    %169 = vector.load %arg13[%168, %c0_108] : memref<64x256xf32, #tpu.memory_space<vmem>>, vector<8x256xf32>
    %cst_109 = arith.constant dense<0.000000e+00> : vector<8x256xf32>
    %170 = tpu.matmul %165, %164, %cst_109 {dimension_numbers = #tpu.dot_dimension_numbers<[1], [0], [0], [1], [0, 0, 1, 1], [], []>} : vector<8x64xf32>, vector<64x256xf32>, vector<8x256xf32> -> vector<8x256xf32>
    %171 = arith.addf %169, %170 : vector<8x256xf32>
    %172 = vector.extract_strided_slice %171 {offsets = [0, 0], sizes = [8, 128], strides = [1, 1]} : vector<8x256xf32> to vector<8x128xf32>
    %173 = arith.negf %172 : vector<8x128xf32>
    %174 = math.exp %173 : vector<8x128xf32>
    %cst_110 = arith.constant 1.000000e+00 : f32
    %175 = vector.broadcast %cst_110 : f32 to vector<8x128xf32>
    %176 = arith.addf %175, %174 : vector<8x128xf32>
    %177 = arith.divf %175, %176 : vector<8x128xf32>
    %178 = vector.extract_strided_slice %177 {offsets = [0, 0], sizes = [8, 64], strides = [1, 1]} : vector<8x128xf32> to vector<8x64xf32>
    %179 = vector.extract_strided_slice %177 {offsets = [0, 64], sizes = [8, 64], strides = [1, 1]} : vector<8x128xf32> to vector<8x64xf32>
    %180 = vector.extract_strided_slice %171 {offsets = [0, 128], sizes = [8, 64], strides = [1, 1]} : vector<8x256xf32> to vector<8x64xf32>
    %181 = math.tanh %180 : vector<8x64xf32>
    %182 = vector.extract_strided_slice %171 {offsets = [0, 192], sizes = [8, 64], strides = [1, 1]} : vector<8x256xf32> to vector<8x64xf32>
    %183 = arith.negf %182 : vector<8x64xf32>
    %184 = math.exp %183 : vector<8x64xf32>
    %cst_111 = arith.constant 1.000000e+00 : f32
    %185 = vector.broadcast %cst_111 : f32 to vector<8x64xf32>
    %186 = arith.addf %185, %184 : vector<8x64xf32>
    %187 = arith.divf %185, %186 : vector<8x64xf32>
    %188 = arith.mulf %179, %165 : vector<8x64xf32>
    %189 = arith.mulf %178, %181 : vector<8x64xf32>
    %190 = arith.addf %188, %189 : vector<8x64xf32>
    %191 = math.tanh %190 : vector<8x64xf32>
    %192 = arith.mulf %187, %191 : vector<8x64xf32>
    %c2_i32 = arith.constant 2 : i32
    %193 = arith.addi %c2_i32, %c0_i32 : i32
    %c8_i32_112 = arith.constant 8 : i32
    %194 = arith.muli %193, %c8_i32_112 : i32
    %195 = tpu.assume_multiple %194, 8 : i32
    %c7_i32 = arith.constant 7 : i32
    %196 = arith.subi %c7_i32, %c0_i32 : i32
    %c2_i32_113 = arith.constant 2 : i32
    %197 = arith.addi %c2_i32_113, %196 : i32
    %c8_i32_114 = arith.constant 8 : i32
    %198 = arith.muli %197, %c8_i32_114 : i32
    %199 = tpu.assume_multiple %198, 8 : i32
    %200 = vector.extract_strided_slice %192 {offsets = [0, 0], sizes = [8, 32], strides = [1, 1]} : vector<8x64xf32> to vector<8x32xf32>
    %201 = arith.index_cast %195 : i32 to index
    %c0_115 = arith.constant 0 : index
    %202 = vector.load %arg14[%201, %c0_115] : memref<96x64xf32, #tpu.memory_space<vmem>>, vector<8x32xf32>
    tpu.vector_store %arg14[%201, %c0_115], %200 {strides = array<i32>} : memref<96x64xf32, #tpu.memory_space<vmem>>, vector<8x32xf32>,
    %203 = vector.extract_strided_slice %192 {offsets = [0, 32], sizes = [8, 32], strides = [1, 1]} : vector<8x64xf32> to vector<8x32xf32>
    %204 = arith.index_cast %199 : i32 to index
    %c32_116 = arith.constant 32 : index
    %205 = vector.load %arg14[%204, %c32_116] : memref<96x64xf32, #tpu.memory_space<vmem>>, vector<8x32xf32>
    tpu.vector_store %arg14[%204, %c32_116], %203 {strides = array<i32>} : memref<96x64xf32, #tpu.memory_space<vmem>>, vector<8x32xf32>,
    %c1_i32 = arith.constant 1 : i32
    %c8_i32_117 = arith.constant 8 : i32
    %206 = arith.muli %c1_i32, %c8_i32_117 : i32
    %207 = tpu.assume_multiple %206, 8 : i32
    %208 = arith.index_cast %207 : i32 to index
    %c0_118 = arith.constant 0 : index
    %209 = vector.load %arg13[%208, %c0_118] : memref<64x256xf32, #tpu.memory_space<vmem>>, vector<8x256xf32>
    %cst_119 = arith.constant dense<0.000000e+00> : vector<8x256xf32>
    %210 = tpu.matmul %192, %164, %cst_119 {dimension_numbers = #tpu.dot_dimension_numbers<[1], [0], [0], [1], [0, 0, 1, 1], [], []>} : vector<8x64xf32>, vector<64x256xf32>, vector<8x256xf32> -> vector<8x256xf32>
    %211 = arith.addf %209, %210 : vector<8x256xf32>
    %212 = vector.extract_strided_slice %211 {offsets = [0, 0], sizes = [8, 128], strides = [1, 1]} : vector<8x256xf32> to vector<8x128xf32>
    %213 = arith.negf %212 : vector<8x128xf32>
    %214 = math.exp %213 : vector<8x128xf32>
    %cst_120 = arith.constant 1.000000e+00 : f32
    %215 = vector.broadcast %cst_120 : f32 to vector<8x128xf32>
    %216 = arith.addf %215, %214 : vector<8x128xf32>
    %217 = arith.divf %215, %216 : vector<8x128xf32>
    %218 = vector.extract_strided_slice %217 {offsets = [0, 0], sizes = [8, 64], strides = [1, 1]} : vector<8x128xf32> to vector<8x64xf32>
    %219 = vector.extract_strided_slice %217 {offsets = [0, 64], sizes = [8, 64], strides = [1, 1]} : vector<8x128xf32> to vector<8x64xf32>
    %220 = vector.extract_strided_slice %211 {offsets = [0, 128], sizes = [8, 64], strides = [1, 1]} : vector<8x256xf32> to vector<8x64xf32>
    %221 = math.tanh %220 : vector<8x64xf32>
    %222 = vector.extract_strided_slice %211 {offsets = [0, 192], sizes = [8, 64], strides = [1, 1]} : vector<8x256xf32> to vector<8x64xf32>
    %223 = arith.negf %222 : vector<8x64xf32>
    %224 = math.exp %223 : vector<8x64xf32>
    %cst_121 = arith.constant 1.000000e+00 : f32
    %225 = vector.broadcast %cst_121 : f32 to vector<8x64xf32>
    %226 = arith.addf %225, %224 : vector<8x64xf32>
    %227 = arith.divf %225, %226 : vector<8x64xf32>
    %228 = arith.mulf %219, %190 : vector<8x64xf32>
    %229 = arith.mulf %218, %221 : vector<8x64xf32>
    %230 = arith.addf %228, %229 : vector<8x64xf32>
    %231 = math.tanh %230 : vector<8x64xf32>
    %232 = arith.mulf %227, %231 : vector<8x64xf32>
    %c2_i32_122 = arith.constant 2 : i32
    %233 = arith.addi %c2_i32_122, %c1_i32 : i32
    %c8_i32_123 = arith.constant 8 : i32
    %234 = arith.muli %233, %c8_i32_123 : i32
    %235 = tpu.assume_multiple %234, 8 : i32
    %c7_i32_124 = arith.constant 7 : i32
    %236 = arith.subi %c7_i32_124, %c1_i32 : i32
    %c2_i32_125 = arith.constant 2 : i32
    %237 = arith.addi %c2_i32_125, %236 : i32
    %c8_i32_126 = arith.constant 8 : i32
    %238 = arith.muli %237, %c8_i32_126 : i32
    %239 = tpu.assume_multiple %238, 8 : i32
    %240 = vector.extract_strided_slice %232 {offsets = [0, 0], sizes = [8, 32], strides = [1, 1]} : vector<8x64xf32> to vector<8x32xf32>
    %241 = arith.index_cast %235 : i32 to index
    %c0_127 = arith.constant 0 : index
    %242 = vector.load %arg14[%241, %c0_127] : memref<96x64xf32, #tpu.memory_space<vmem>>, vector<8x32xf32>
    tpu.vector_store %arg14[%241, %c0_127], %240 {strides = array<i32>} : memref<96x64xf32, #tpu.memory_space<vmem>>, vector<8x32xf32>,
    %243 = vector.extract_strided_slice %232 {offsets = [0, 32], sizes = [8, 32], strides = [1, 1]} : vector<8x64xf32> to vector<8x32xf32>
    %244 = arith.index_cast %239 : i32 to index
    %c32_128 = arith.constant 32 : index
    %245 = vector.load %arg14[%244, %c32_128] : memref<96x64xf32, #tpu.memory_space<vmem>>, vector<8x32xf32>
    tpu.vector_store %arg14[%244, %c32_128], %243 {strides = array<i32>} : memref<96x64xf32, #tpu.memory_space<vmem>>, vector<8x32xf32>,
    %c2_i32_129 = arith.constant 2 : i32
    %c8_i32_130 = arith.constant 8 : i32
    %246 = arith.muli %c2_i32_129, %c8_i32_130 : i32
    %247 = tpu.assume_multiple %246, 8 : i32
    %248 = arith.index_cast %247 : i32 to index
    %c0_131 = arith.constant 0 : index
    %249 = vector.load %arg13[%248, %c0_131] : memref<64x256xf32, #tpu.memory_space<vmem>>, vector<8x256xf32>
    %cst_132 = arith.constant dense<0.000000e+00> : vector<8x256xf32>
    %250 = tpu.matmul %232, %164, %cst_132 {dimension_numbers = #tpu.dot_dimension_numbers<[1], [0], [0], [1], [0, 0, 1, 1], [], []>} : vector<8x64xf32>, vector<64x256xf32>, vector<8x256xf32> -> vector<8x256xf32>
    %251 = arith.addf %249, %250 : vector<8x256xf32>
    %252 = vector.extract_strided_slice %251 {offsets = [0, 0], sizes = [8, 128], strides = [1, 1]} : vector<8x256xf32> to vector<8x128xf32>
    %253 = arith.negf %252 : vector<8x128xf32>
    %254 = math.exp %253 : vector<8x128xf32>
    %cst_133 = arith.constant 1.000000e+00 : f32
    %255 = vector.broadcast %cst_133 : f32 to vector<8x128xf32>
    %256 = arith.addf %255, %254 : vector<8x128xf32>
    %257 = arith.divf %255, %256 : vector<8x128xf32>
    %258 = vector.extract_strided_slice %257 {offsets = [0, 0], sizes = [8, 64], strides = [1, 1]} : vector<8x128xf32> to vector<8x64xf32>
    %259 = vector.extract_strided_slice %257 {offsets = [0, 64], sizes = [8, 64], strides = [1, 1]} : vector<8x128xf32> to vector<8x64xf32>
    %260 = vector.extract_strided_slice %251 {offsets = [0, 128], sizes = [8, 64], strides = [1, 1]} : vector<8x256xf32> to vector<8x64xf32>
    %261 = math.tanh %260 : vector<8x64xf32>
    %262 = vector.extract_strided_slice %251 {offsets = [0, 192], sizes = [8, 64], strides = [1, 1]} : vector<8x256xf32> to vector<8x64xf32>
    %263 = arith.negf %262 : vector<8x64xf32>
    %264 = math.exp %263 : vector<8x64xf32>
    %cst_134 = arith.constant 1.000000e+00 : f32
    %265 = vector.broadcast %cst_134 : f32 to vector<8x64xf32>
    %266 = arith.addf %265, %264 : vector<8x64xf32>
    %267 = arith.divf %265, %266 : vector<8x64xf32>
    %268 = arith.mulf %259, %230 : vector<8x64xf32>
    %269 = arith.mulf %258, %261 : vector<8x64xf32>
    %270 = arith.addf %268, %269 : vector<8x64xf32>
    %271 = math.tanh %270 : vector<8x64xf32>
    %272 = arith.mulf %267, %271 : vector<8x64xf32>
    %c2_i32_135 = arith.constant 2 : i32
    %273 = arith.addi %c2_i32_135, %c2_i32_129 : i32
    %c8_i32_136 = arith.constant 8 : i32
    %274 = arith.muli %273, %c8_i32_136 : i32
    %275 = tpu.assume_multiple %274, 8 : i32
    %c7_i32_137 = arith.constant 7 : i32
    %276 = arith.subi %c7_i32_137, %c2_i32_129 : i32
    %c2_i32_138 = arith.constant 2 : i32
    %277 = arith.addi %c2_i32_138, %276 : i32
    %c8_i32_139 = arith.constant 8 : i32
    %278 = arith.muli %277, %c8_i32_139 : i32
    %279 = tpu.assume_multiple %278, 8 : i32
    %280 = vector.extract_strided_slice %272 {offsets = [0, 0], sizes = [8, 32], strides = [1, 1]} : vector<8x64xf32> to vector<8x32xf32>
    %281 = arith.index_cast %275 : i32 to index
    %c0_140 = arith.constant 0 : index
    %282 = vector.load %arg14[%281, %c0_140] : memref<96x64xf32, #tpu.memory_space<vmem>>, vector<8x32xf32>
    tpu.vector_store %arg14[%281, %c0_140], %280 {strides = array<i32>} : memref<96x64xf32, #tpu.memory_space<vmem>>, vector<8x32xf32>,
    %283 = vector.extract_strided_slice %272 {offsets = [0, 32], sizes = [8, 32], strides = [1, 1]} : vector<8x64xf32> to vector<8x32xf32>
    %284 = arith.index_cast %279 : i32 to index
    %c32_141 = arith.constant 32 : index
    %285 = vector.load %arg14[%284, %c32_141] : memref<96x64xf32, #tpu.memory_space<vmem>>, vector<8x32xf32>
    tpu.vector_store %arg14[%284, %c32_141], %283 {strides = array<i32>} : memref<96x64xf32, #tpu.memory_space<vmem>>, vector<8x32xf32>,
    %c3_i32 = arith.constant 3 : i32
    %c8_i32_142 = arith.constant 8 : i32
    %286 = arith.muli %c3_i32, %c8_i32_142 : i32
    %287 = tpu.assume_multiple %286, 8 : i32
    %288 = arith.index_cast %287 : i32 to index
    %c0_143 = arith.constant 0 : index
    %289 = vector.load %arg13[%288, %c0_143] : memref<64x256xf32, #tpu.memory_space<vmem>>, vector<8x256xf32>
    %cst_144 = arith.constant dense<0.000000e+00> : vector<8x256xf32>
    %290 = tpu.matmul %272, %164, %cst_144 {dimension_numbers = #tpu.dot_dimension_numbers<[1], [0], [0], [1], [0, 0, 1, 1], [], []>} : vector<8x64xf32>, vector<64x256xf32>, vector<8x256xf32> -> vector<8x256xf32>
    %291 = arith.addf %289, %290 : vector<8x256xf32>
    %292 = vector.extract_strided_slice %291 {offsets = [0, 0], sizes = [8, 128], strides = [1, 1]} : vector<8x256xf32> to vector<8x128xf32>
    %293 = arith.negf %292 : vector<8x128xf32>
    %294 = math.exp %293 : vector<8x128xf32>
    %cst_145 = arith.constant 1.000000e+00 : f32
    %295 = vector.broadcast %cst_145 : f32 to vector<8x128xf32>
    %296 = arith.addf %295, %294 : vector<8x128xf32>
    %297 = arith.divf %295, %296 : vector<8x128xf32>
    %298 = vector.extract_strided_slice %297 {offsets = [0, 0], sizes = [8, 64], strides = [1, 1]} : vector<8x128xf32> to vector<8x64xf32>
    %299 = vector.extract_strided_slice %297 {offsets = [0, 64], sizes = [8, 64], strides = [1, 1]} : vector<8x128xf32> to vector<8x64xf32>
    %300 = vector.extract_strided_slice %291 {offsets = [0, 128], sizes = [8, 64], strides = [1, 1]} : vector<8x256xf32> to vector<8x64xf32>
    %301 = math.tanh %300 : vector<8x64xf32>
    %302 = vector.extract_strided_slice %291 {offsets = [0, 192], sizes = [8, 64], strides = [1, 1]} : vector<8x256xf32> to vector<8x64xf32>
    %303 = arith.negf %302 : vector<8x64xf32>
    %304 = math.exp %303 : vector<8x64xf32>
    %cst_146 = arith.constant 1.000000e+00 : f32
    %305 = vector.broadcast %cst_146 : f32 to vector<8x64xf32>
    %306 = arith.addf %305, %304 : vector<8x64xf32>
    %307 = arith.divf %305, %306 : vector<8x64xf32>
    %308 = arith.mulf %299, %270 : vector<8x64xf32>
    %309 = arith.mulf %298, %301 : vector<8x64xf32>
    %310 = arith.addf %308, %309 : vector<8x64xf32>
    %311 = math.tanh %310 : vector<8x64xf32>
    %312 = arith.mulf %307, %311 : vector<8x64xf32>
    %c2_i32_147 = arith.constant 2 : i32
    %313 = arith.addi %c2_i32_147, %c3_i32 : i32
    %c8_i32_148 = arith.constant 8 : i32
    %314 = arith.muli %313, %c8_i32_148 : i32
    %315 = tpu.assume_multiple %314, 8 : i32
    %c7_i32_149 = arith.constant 7 : i32
    %316 = arith.subi %c7_i32_149, %c3_i32 : i32
    %c2_i32_150 = arith.constant 2 : i32
    %317 = arith.addi %c2_i32_150, %316 : i32
    %c8_i32_151 = arith.constant 8 : i32
    %318 = arith.muli %317, %c8_i32_151 : i32
    %319 = tpu.assume_multiple %318, 8 : i32
    %320 = vector.extract_strided_slice %312 {offsets = [0, 0], sizes = [8, 32], strides = [1, 1]} : vector<8x64xf32> to vector<8x32xf32>
    %321 = arith.index_cast %315 : i32 to index
    %c0_152 = arith.constant 0 : index
    %322 = vector.load %arg14[%321, %c0_152] : memref<96x64xf32, #tpu.memory_space<vmem>>, vector<8x32xf32>
    tpu.vector_store %arg14[%321, %c0_152], %320 {strides = array<i32>} : memref<96x64xf32, #tpu.memory_space<vmem>>, vector<8x32xf32>,
    %323 = vector.extract_strided_slice %312 {offsets = [0, 32], sizes = [8, 32], strides = [1, 1]} : vector<8x64xf32> to vector<8x32xf32>
    %324 = arith.index_cast %319 : i32 to index
    %c32_153 = arith.constant 32 : index
    %325 = vector.load %arg14[%324, %c32_153] : memref<96x64xf32, #tpu.memory_space<vmem>>, vector<8x32xf32>
    tpu.vector_store %arg14[%324, %c32_153], %323 {strides = array<i32>} : memref<96x64xf32, #tpu.memory_space<vmem>>, vector<8x32xf32>,
    %c4_i32 = arith.constant 4 : i32
    %c8_i32_154 = arith.constant 8 : i32
    %326 = arith.muli %c4_i32, %c8_i32_154 : i32
    %327 = tpu.assume_multiple %326, 8 : i32
    %328 = arith.index_cast %327 : i32 to index
    %c0_155 = arith.constant 0 : index
    %329 = vector.load %arg13[%328, %c0_155] : memref<64x256xf32, #tpu.memory_space<vmem>>, vector<8x256xf32>
    %cst_156 = arith.constant dense<0.000000e+00> : vector<8x256xf32>
    %330 = tpu.matmul %312, %164, %cst_156 {dimension_numbers = #tpu.dot_dimension_numbers<[1], [0], [0], [1], [0, 0, 1, 1], [], []>} : vector<8x64xf32>, vector<64x256xf32>, vector<8x256xf32> -> vector<8x256xf32>
    %331 = arith.addf %329, %330 : vector<8x256xf32>
    %332 = vector.extract_strided_slice %331 {offsets = [0, 0], sizes = [8, 128], strides = [1, 1]} : vector<8x256xf32> to vector<8x128xf32>
    %333 = arith.negf %332 : vector<8x128xf32>
    %334 = math.exp %333 : vector<8x128xf32>
    %cst_157 = arith.constant 1.000000e+00 : f32
    %335 = vector.broadcast %cst_157 : f32 to vector<8x128xf32>
    %336 = arith.addf %335, %334 : vector<8x128xf32>
    %337 = arith.divf %335, %336 : vector<8x128xf32>
    %338 = vector.extract_strided_slice %337 {offsets = [0, 0], sizes = [8, 64], strides = [1, 1]} : vector<8x128xf32> to vector<8x64xf32>
    %339 = vector.extract_strided_slice %337 {offsets = [0, 64], sizes = [8, 64], strides = [1, 1]} : vector<8x128xf32> to vector<8x64xf32>
    %340 = vector.extract_strided_slice %331 {offsets = [0, 128], sizes = [8, 64], strides = [1, 1]} : vector<8x256xf32> to vector<8x64xf32>
    %341 = math.tanh %340 : vector<8x64xf32>
    %342 = vector.extract_strided_slice %331 {offsets = [0, 192], sizes = [8, 64], strides = [1, 1]} : vector<8x256xf32> to vector<8x64xf32>
    %343 = arith.negf %342 : vector<8x64xf32>
    %344 = math.exp %343 : vector<8x64xf32>
    %cst_158 = arith.constant 1.000000e+00 : f32
    %345 = vector.broadcast %cst_158 : f32 to vector<8x64xf32>
    %346 = arith.addf %345, %344 : vector<8x64xf32>
    %347 = arith.divf %345, %346 : vector<8x64xf32>
    %348 = arith.mulf %339, %310 : vector<8x64xf32>
    %349 = arith.mulf %338, %341 : vector<8x64xf32>
    %350 = arith.addf %348, %349 : vector<8x64xf32>
    %351 = math.tanh %350 : vector<8x64xf32>
    %352 = arith.mulf %347, %351 : vector<8x64xf32>
    %c2_i32_159 = arith.constant 2 : i32
    %353 = arith.addi %c2_i32_159, %c4_i32 : i32
    %c8_i32_160 = arith.constant 8 : i32
    %354 = arith.muli %353, %c8_i32_160 : i32
    %355 = tpu.assume_multiple %354, 8 : i32
    %c7_i32_161 = arith.constant 7 : i32
    %356 = arith.subi %c7_i32_161, %c4_i32 : i32
    %c2_i32_162 = arith.constant 2 : i32
    %357 = arith.addi %c2_i32_162, %356 : i32
    %c8_i32_163 = arith.constant 8 : i32
    %358 = arith.muli %357, %c8_i32_163 : i32
    %359 = tpu.assume_multiple %358, 8 : i32
    %360 = vector.extract_strided_slice %352 {offsets = [0, 0], sizes = [8, 32], strides = [1, 1]} : vector<8x64xf32> to vector<8x32xf32>
    %361 = arith.index_cast %355 : i32 to index
    %c0_164 = arith.constant 0 : index
    %362 = vector.load %arg14[%361, %c0_164] : memref<96x64xf32, #tpu.memory_space<vmem>>, vector<8x32xf32>
    tpu.vector_store %arg14[%361, %c0_164], %360 {strides = array<i32>} : memref<96x64xf32, #tpu.memory_space<vmem>>, vector<8x32xf32>,
    %363 = vector.extract_strided_slice %352 {offsets = [0, 32], sizes = [8, 32], strides = [1, 1]} : vector<8x64xf32> to vector<8x32xf32>
    %364 = arith.index_cast %359 : i32 to index
    %c32_165 = arith.constant 32 : index
    %365 = vector.load %arg14[%364, %c32_165] : memref<96x64xf32, #tpu.memory_space<vmem>>, vector<8x32xf32>
    tpu.vector_store %arg14[%364, %c32_165], %363 {strides = array<i32>} : memref<96x64xf32, #tpu.memory_space<vmem>>, vector<8x32xf32>,
    %c5_i32 = arith.constant 5 : i32
    %c8_i32_166 = arith.constant 8 : i32
    %366 = arith.muli %c5_i32, %c8_i32_166 : i32
    %367 = tpu.assume_multiple %366, 8 : i32
    %368 = arith.index_cast %367 : i32 to index
    %c0_167 = arith.constant 0 : index
    %369 = vector.load %arg13[%368, %c0_167] : memref<64x256xf32, #tpu.memory_space<vmem>>, vector<8x256xf32>
    %cst_168 = arith.constant dense<0.000000e+00> : vector<8x256xf32>
    %370 = tpu.matmul %352, %164, %cst_168 {dimension_numbers = #tpu.dot_dimension_numbers<[1], [0], [0], [1], [0, 0, 1, 1], [], []>} : vector<8x64xf32>, vector<64x256xf32>, vector<8x256xf32> -> vector<8x256xf32>
    %371 = arith.addf %369, %370 : vector<8x256xf32>
    %372 = vector.extract_strided_slice %371 {offsets = [0, 0], sizes = [8, 128], strides = [1, 1]} : vector<8x256xf32> to vector<8x128xf32>
    %373 = arith.negf %372 : vector<8x128xf32>
    %374 = math.exp %373 : vector<8x128xf32>
    %cst_169 = arith.constant 1.000000e+00 : f32
    %375 = vector.broadcast %cst_169 : f32 to vector<8x128xf32>
    %376 = arith.addf %375, %374 : vector<8x128xf32>
    %377 = arith.divf %375, %376 : vector<8x128xf32>
    %378 = vector.extract_strided_slice %377 {offsets = [0, 0], sizes = [8, 64], strides = [1, 1]} : vector<8x128xf32> to vector<8x64xf32>
    %379 = vector.extract_strided_slice %377 {offsets = [0, 64], sizes = [8, 64], strides = [1, 1]} : vector<8x128xf32> to vector<8x64xf32>
    %380 = vector.extract_strided_slice %371 {offsets = [0, 128], sizes = [8, 64], strides = [1, 1]} : vector<8x256xf32> to vector<8x64xf32>
    %381 = math.tanh %380 : vector<8x64xf32>
    %382 = vector.extract_strided_slice %371 {offsets = [0, 192], sizes = [8, 64], strides = [1, 1]} : vector<8x256xf32> to vector<8x64xf32>
    %383 = arith.negf %382 : vector<8x64xf32>
    %384 = math.exp %383 : vector<8x64xf32>
    %cst_170 = arith.constant 1.000000e+00 : f32
    %385 = vector.broadcast %cst_170 : f32 to vector<8x64xf32>
    %386 = arith.addf %385, %384 : vector<8x64xf32>
    %387 = arith.divf %385, %386 : vector<8x64xf32>
    %388 = arith.mulf %379, %350 : vector<8x64xf32>
    %389 = arith.mulf %378, %381 : vector<8x64xf32>
    %390 = arith.addf %388, %389 : vector<8x64xf32>
    %391 = math.tanh %390 : vector<8x64xf32>
    %392 = arith.mulf %387, %391 : vector<8x64xf32>
    %c2_i32_171 = arith.constant 2 : i32
    %393 = arith.addi %c2_i32_171, %c5_i32 : i32
    %c8_i32_172 = arith.constant 8 : i32
    %394 = arith.muli %393, %c8_i32_172 : i32
    %395 = tpu.assume_multiple %394, 8 : i32
    %c7_i32_173 = arith.constant 7 : i32
    %396 = arith.subi %c7_i32_173, %c5_i32 : i32
    %c2_i32_174 = arith.constant 2 : i32
    %397 = arith.addi %c2_i32_174, %396 : i32
    %c8_i32_175 = arith.constant 8 : i32
    %398 = arith.muli %397, %c8_i32_175 : i32
    %399 = tpu.assume_multiple %398, 8 : i32
    %400 = vector.extract_strided_slice %392 {offsets = [0, 0], sizes = [8, 32], strides = [1, 1]} : vector<8x64xf32> to vector<8x32xf32>
    %401 = arith.index_cast %395 : i32 to index
    %c0_176 = arith.constant 0 : index
    %402 = vector.load %arg14[%401, %c0_176] : memref<96x64xf32, #tpu.memory_space<vmem>>, vector<8x32xf32>
    tpu.vector_store %arg14[%401, %c0_176], %400 {strides = array<i32>} : memref<96x64xf32, #tpu.memory_space<vmem>>, vector<8x32xf32>,
    %403 = vector.extract_strided_slice %392 {offsets = [0, 32], sizes = [8, 32], strides = [1, 1]} : vector<8x64xf32> to vector<8x32xf32>
    %404 = arith.index_cast %399 : i32 to index
    %c32_177 = arith.constant 32 : index
    %405 = vector.load %arg14[%404, %c32_177] : memref<96x64xf32, #tpu.memory_space<vmem>>, vector<8x32xf32>
    tpu.vector_store %arg14[%404, %c32_177], %403 {strides = array<i32>} : memref<96x64xf32, #tpu.memory_space<vmem>>, vector<8x32xf32>,
    %c6_i32 = arith.constant 6 : i32
    %c8_i32_178 = arith.constant 8 : i32
    %406 = arith.muli %c6_i32, %c8_i32_178 : i32
    %407 = tpu.assume_multiple %406, 8 : i32
    %408 = arith.index_cast %407 : i32 to index
    %c0_179 = arith.constant 0 : index
    %409 = vector.load %arg13[%408, %c0_179] : memref<64x256xf32, #tpu.memory_space<vmem>>, vector<8x256xf32>
    %cst_180 = arith.constant dense<0.000000e+00> : vector<8x256xf32>
    %410 = tpu.matmul %392, %164, %cst_180 {dimension_numbers = #tpu.dot_dimension_numbers<[1], [0], [0], [1], [0, 0, 1, 1], [], []>} : vector<8x64xf32>, vector<64x256xf32>, vector<8x256xf32> -> vector<8x256xf32>
    %411 = arith.addf %409, %410 : vector<8x256xf32>
    %412 = vector.extract_strided_slice %411 {offsets = [0, 0], sizes = [8, 128], strides = [1, 1]} : vector<8x256xf32> to vector<8x128xf32>
    %413 = arith.negf %412 : vector<8x128xf32>
    %414 = math.exp %413 : vector<8x128xf32>
    %cst_181 = arith.constant 1.000000e+00 : f32
    %415 = vector.broadcast %cst_181 : f32 to vector<8x128xf32>
    %416 = arith.addf %415, %414 : vector<8x128xf32>
    %417 = arith.divf %415, %416 : vector<8x128xf32>
    %418 = vector.extract_strided_slice %417 {offsets = [0, 0], sizes = [8, 64], strides = [1, 1]} : vector<8x128xf32> to vector<8x64xf32>
    %419 = vector.extract_strided_slice %417 {offsets = [0, 64], sizes = [8, 64], strides = [1, 1]} : vector<8x128xf32> to vector<8x64xf32>
    %420 = vector.extract_strided_slice %411 {offsets = [0, 128], sizes = [8, 64], strides = [1, 1]} : vector<8x256xf32> to vector<8x64xf32>
    %421 = math.tanh %420 : vector<8x64xf32>
    %422 = vector.extract_strided_slice %411 {offsets = [0, 192], sizes = [8, 64], strides = [1, 1]} : vector<8x256xf32> to vector<8x64xf32>
    %423 = arith.negf %422 : vector<8x64xf32>
    %424 = math.exp %423 : vector<8x64xf32>
    %cst_182 = arith.constant 1.000000e+00 : f32
    %425 = vector.broadcast %cst_182 : f32 to vector<8x64xf32>
    %426 = arith.addf %425, %424 : vector<8x64xf32>
    %427 = arith.divf %425, %426 : vector<8x64xf32>
    %428 = arith.mulf %419, %390 : vector<8x64xf32>
    %429 = arith.mulf %418, %421 : vector<8x64xf32>
    %430 = arith.addf %428, %429 : vector<8x64xf32>
    %431 = math.tanh %430 : vector<8x64xf32>
    %432 = arith.mulf %427, %431 : vector<8x64xf32>
    %c2_i32_183 = arith.constant 2 : i32
    %433 = arith.addi %c2_i32_183, %c6_i32 : i32
    %c8_i32_184 = arith.constant 8 : i32
    %434 = arith.muli %433, %c8_i32_184 : i32
    %435 = tpu.assume_multiple %434, 8 : i32
    %c7_i32_185 = arith.constant 7 : i32
    %436 = arith.subi %c7_i32_185, %c6_i32 : i32
    %c2_i32_186 = arith.constant 2 : i32
    %437 = arith.addi %c2_i32_186, %436 : i32
    %c8_i32_187 = arith.constant 8 : i32
    %438 = arith.muli %437, %c8_i32_187 : i32
    %439 = tpu.assume_multiple %438, 8 : i32
    %440 = vector.extract_strided_slice %432 {offsets = [0, 0], sizes = [8, 32], strides = [1, 1]} : vector<8x64xf32> to vector<8x32xf32>
    %441 = arith.index_cast %435 : i32 to index
    %c0_188 = arith.constant 0 : index
    %442 = vector.load %arg14[%441, %c0_188] : memref<96x64xf32, #tpu.memory_space<vmem>>, vector<8x32xf32>
    tpu.vector_store %arg14[%441, %c0_188], %440 {strides = array<i32>} : memref<96x64xf32, #tpu.memory_space<vmem>>, vector<8x32xf32>,
    %443 = vector.extract_strided_slice %432 {offsets = [0, 32], sizes = [8, 32], strides = [1, 1]} : vector<8x64xf32> to vector<8x32xf32>
    %444 = arith.index_cast %439 : i32 to index
    %c32_189 = arith.constant 32 : index
    %445 = vector.load %arg14[%444, %c32_189] : memref<96x64xf32, #tpu.memory_space<vmem>>, vector<8x32xf32>
    tpu.vector_store %arg14[%444, %c32_189], %443 {strides = array<i32>} : memref<96x64xf32, #tpu.memory_space<vmem>>, vector<8x32xf32>,
    %c7_i32_190 = arith.constant 7 : i32
    %c8_i32_191 = arith.constant 8 : i32
    %446 = arith.muli %c7_i32_190, %c8_i32_191 : i32
    %447 = tpu.assume_multiple %446, 8 : i32
    %448 = arith.index_cast %447 : i32 to index
    %c0_192 = arith.constant 0 : index
    %449 = vector.load %arg13[%448, %c0_192] : memref<64x256xf32, #tpu.memory_space<vmem>>, vector<8x256xf32>
    %cst_193 = arith.constant dense<0.000000e+00> : vector<8x256xf32>
    %450 = tpu.matmul %432, %164, %cst_193 {dimension_numbers = #tpu.dot_dimension_numbers<[1], [0], [0], [1], [0, 0, 1, 1], [], []>} : vector<8x64xf32>, vector<64x256xf32>, vector<8x256xf32> -> vector<8x256xf32>
    %451 = arith.addf %449, %450 : vector<8x256xf32>
    %452 = vector.extract_strided_slice %451 {offsets = [0, 0], sizes = [8, 128], strides = [1, 1]} : vector<8x256xf32> to vector<8x128xf32>
    %453 = arith.negf %452 : vector<8x128xf32>
    %454 = math.exp %453 : vector<8x128xf32>
    %cst_194 = arith.constant 1.000000e+00 : f32
    %455 = vector.broadcast %cst_194 : f32 to vector<8x128xf32>
    %456 = arith.addf %455, %454 : vector<8x128xf32>
    %457 = arith.divf %455, %456 : vector<8x128xf32>
    %458 = vector.extract_strided_slice %457 {offsets = [0, 0], sizes = [8, 64], strides = [1, 1]} : vector<8x128xf32> to vector<8x64xf32>
    %459 = vector.extract_strided_slice %457 {offsets = [0, 64], sizes = [8, 64], strides = [1, 1]} : vector<8x128xf32> to vector<8x64xf32>
    %460 = vector.extract_strided_slice %451 {offsets = [0, 128], sizes = [8, 64], strides = [1, 1]} : vector<8x256xf32> to vector<8x64xf32>
    %461 = math.tanh %460 : vector<8x64xf32>
    %462 = vector.extract_strided_slice %451 {offsets = [0, 192], sizes = [8, 64], strides = [1, 1]} : vector<8x256xf32> to vector<8x64xf32>
    %463 = arith.negf %462 : vector<8x64xf32>
    %464 = math.exp %463 : vector<8x64xf32>
    %cst_195 = arith.constant 1.000000e+00 : f32
    %465 = vector.broadcast %cst_195 : f32 to vector<8x64xf32>
    %466 = arith.addf %465, %464 : vector<8x64xf32>
    %467 = arith.divf %465, %466 : vector<8x64xf32>
    %468 = arith.mulf %459, %430 : vector<8x64xf32>
    %469 = arith.mulf %458, %461 : vector<8x64xf32>
    %470 = arith.addf %468, %469 : vector<8x64xf32>
    %471 = math.tanh %470 : vector<8x64xf32>
    %472 = arith.mulf %467, %471 : vector<8x64xf32>
    %c2_i32_196 = arith.constant 2 : i32
    %473 = arith.addi %c2_i32_196, %c7_i32_190 : i32
    %c8_i32_197 = arith.constant 8 : i32
    %474 = arith.muli %473, %c8_i32_197 : i32
    %475 = tpu.assume_multiple %474, 8 : i32
    %c7_i32_198 = arith.constant 7 : i32
    %476 = arith.subi %c7_i32_198, %c7_i32_190 : i32
    %c2_i32_199 = arith.constant 2 : i32
    %477 = arith.addi %c2_i32_199, %476 : i32
    %c8_i32_200 = arith.constant 8 : i32
    %478 = arith.muli %477, %c8_i32_200 : i32
    %479 = tpu.assume_multiple %478, 8 : i32
    %480 = vector.extract_strided_slice %472 {offsets = [0, 0], sizes = [8, 32], strides = [1, 1]} : vector<8x64xf32> to vector<8x32xf32>
    %481 = arith.index_cast %475 : i32 to index
    %c0_201 = arith.constant 0 : index
    %482 = vector.load %arg14[%481, %c0_201] : memref<96x64xf32, #tpu.memory_space<vmem>>, vector<8x32xf32>
    tpu.vector_store %arg14[%481, %c0_201], %480 {strides = array<i32>} : memref<96x64xf32, #tpu.memory_space<vmem>>, vector<8x32xf32>,
    %483 = vector.extract_strided_slice %472 {offsets = [0, 32], sizes = [8, 32], strides = [1, 1]} : vector<8x64xf32> to vector<8x32xf32>
    %484 = arith.index_cast %479 : i32 to index
    %c32_202 = arith.constant 32 : index
    %485 = vector.load %arg14[%484, %c32_202] : memref<96x64xf32, #tpu.memory_space<vmem>>, vector<8x32xf32>
    tpu.vector_store %arg14[%484, %c32_202], %483 {strides = array<i32>} : memref<96x64xf32, #tpu.memory_space<vmem>>, vector<8x32xf32>,
    %c8_i32_203 = arith.constant 8 : i32
    %c0_204 = arith.constant 0 : index
    %c0_205 = arith.constant 0 : index
    %c0_206 = arith.constant 0 : index
    %486 = vector.load %arg5[%c0_204, %c0_205, %c0_206] : memref<5x64x256xf32, #tpu.memory_space<vmem>>, vector<5x64x256xf32>
    %c0_207 = arith.constant 0 : index
    %c0_208 = arith.constant 0 : index
    %487 = vector.load %arg14[%c0_207, %c0_208] : memref<96x64xf32, #tpu.memory_space<vmem>>, vector<64x64xf32>
    %488 = vector.extract_strided_slice %486 {offsets = [0, 0, 0], sizes = [1, 64, 256], strides = [1, 1, 1]} : vector<5x64x256xf32> to vector<1x64x256xf32>
    %489 = vector.shape_cast %488 : vector<1x64x256xf32> to vector<64x256xf32>
    %cst_209 = arith.constant dense<0.000000e+00> : vector<64x256xf32>
    %490 = tpu.matmul %487, %489, %cst_209 {dimension_numbers = #tpu.dot_dimension_numbers<[1], [0], [0], [1], [0, 0, 1, 1], [], []>} : vector<64x64xf32>, vector<64x256xf32>, vector<64x256xf32> -> vector<64x256xf32>
    %c0_210 = arith.constant 0 : index
    %c0_211 = arith.constant 0 : index
    %491 = vector.load %arg6[%c0_210, %c0_211] : memref<1x256xf32, #tpu.memory_space<vmem>>, vector<1x256xf32>
    %492 = vector.broadcast %491 : vector<1x256xf32> to vector<64x256xf32>
    %493 = arith.addf %490, %492 : vector<64x256xf32>
    %c8_212 = arith.constant 8 : index
    %c0_213 = arith.constant 0 : index
    %494 = vector.load %arg14[%c8_212, %c0_213] : memref<96x64xf32, #tpu.memory_space<vmem>>, vector<64x64xf32>
    %495 = vector.extract_strided_slice %486 {offsets = [1, 0, 0], sizes = [1, 64, 256], strides = [1, 1, 1]} : vector<5x64x256xf32> to vector<1x64x256xf32>
    %496 = vector.shape_cast %495 : vector<1x64x256xf32> to vector<64x256xf32>
    %cst_214 = arith.constant dense<0.000000e+00> : vector<64x256xf32>
    %497 = tpu.matmul %494, %496, %cst_214 {dimension_numbers = #tpu.dot_dimension_numbers<[1], [0], [0], [1], [0, 0, 1, 1], [], []>} : vector<64x64xf32>, vector<64x256xf32>, vector<64x256xf32> -> vector<64x256xf32>
    %498 = arith.addf %493, %497 : vector<64x256xf32>
    %c16_215 = arith.constant 16 : index
    %c0_216 = arith.constant 0 : index
    %499 = vector.load %arg14[%c16_215, %c0_216] : memref<96x64xf32, #tpu.memory_space<vmem>>, vector<64x64xf32>
    %500 = vector.extract_strided_slice %486 {offsets = [2, 0, 0], sizes = [1, 64, 256], strides = [1, 1, 1]} : vector<5x64x256xf32> to vector<1x64x256xf32>
    %501 = vector.shape_cast %500 : vector<1x64x256xf32> to vector<64x256xf32>
    %cst_217 = arith.constant dense<0.000000e+00> : vector<64x256xf32>
    %502 = tpu.matmul %499, %501, %cst_217 {dimension_numbers = #tpu.dot_dimension_numbers<[1], [0], [0], [1], [0, 0, 1, 1], [], []>} : vector<64x64xf32>, vector<64x256xf32>, vector<64x256xf32> -> vector<64x256xf32>
    %503 = arith.addf %498, %502 : vector<64x256xf32>
    %c24_218 = arith.constant 24 : index
    %c0_219 = arith.constant 0 : index
    %504 = vector.load %arg14[%c24_218, %c0_219] : memref<96x64xf32, #tpu.memory_space<vmem>>, vector<64x64xf32>
    %505 = vector.extract_strided_slice %486 {offsets = [3, 0, 0], sizes = [1, 64, 256], strides = [1, 1, 1]} : vector<5x64x256xf32> to vector<1x64x256xf32>
    %506 = vector.shape_cast %505 : vector<1x64x256xf32> to vector<64x256xf32>
    %cst_220 = arith.constant dense<0.000000e+00> : vector<64x256xf32>
    %507 = tpu.matmul %504, %506, %cst_220 {dimension_numbers = #tpu.dot_dimension_numbers<[1], [0], [0], [1], [0, 0, 1, 1], [], []>} : vector<64x64xf32>, vector<64x256xf32>, vector<64x256xf32> -> vector<64x256xf32>
    %508 = arith.addf %503, %507 : vector<64x256xf32>
    %c32_221 = arith.constant 32 : index
    %c0_222 = arith.constant 0 : index
    %509 = vector.load %arg14[%c32_221, %c0_222] : memref<96x64xf32, #tpu.memory_space<vmem>>, vector<64x64xf32>
    %510 = vector.extract_strided_slice %486 {offsets = [4, 0, 0], sizes = [1, 64, 256], strides = [1, 1, 1]} : vector<5x64x256xf32> to vector<1x64x256xf32>
    %511 = vector.shape_cast %510 : vector<1x64x256xf32> to vector<64x256xf32>
    %cst_223 = arith.constant dense<0.000000e+00> : vector<64x256xf32>
    %512 = tpu.matmul %509, %511, %cst_223 {dimension_numbers = #tpu.dot_dimension_numbers<[1], [0], [0], [1], [0, 0, 1, 1], [], []>} : vector<64x64xf32>, vector<64x256xf32>, vector<64x256xf32> -> vector<64x256xf32>
    %513 = arith.addf %508, %512 : vector<64x256xf32>
    %cst_224 = arith.constant 0.000000e+00 : f32
    %514 = vector.broadcast %cst_224 : f32 to vector<64x256xf32>
    %515 = arith.maximumf %513, %514 : vector<64x256xf32>
    %516 = vector.shape_cast %515 : vector<64x256xf32> to vector<8x8x256xf32>
    %cst_225 = arith.constant dense<0xFF800000> : vector<8x256xf32>
    %517 = vector.multi_reduction <maximumf>, %516, %cst_225 [0] : vector<8x8x256xf32> to vector<8x256xf32>
    %c0_226 = arith.constant 0 : index
    %c0_227 = arith.constant 0 : index
    %c0_228 = arith.constant 0 : index
    %518 = vector.load %arg7[%c0_226, %c0_227, %c0_228] : memref<4x64x128xf32, #tpu.memory_space<vmem>>, vector<4x64x128xf32>
    %c0_229 = arith.constant 0 : index
    %c0_230 = arith.constant 0 : index
    %519 = vector.load %arg14[%c0_229, %c0_230] : memref<96x64xf32, #tpu.memory_space<vmem>>, vector<72x64xf32>
    %520 = vector.extract_strided_slice %518 {offsets = [0, 0, 0], sizes = [1, 64, 128], strides = [1, 1, 1]} : vector<4x64x128xf32> to vector<1x64x128xf32>
    %521 = vector.shape_cast %520 : vector<1x64x128xf32> to vector<64x128xf32>
    %cst_231 = arith.constant dense<0.000000e+00> : vector<72x128xf32>
    %522 = tpu.matmul %519, %521, %cst_231 {dimension_numbers = #tpu.dot_dimension_numbers<[1], [0], [0], [1], [0, 0, 1, 1], [], []>} : vector<72x64xf32>, vector<64x128xf32>, vector<72x128xf32> -> vector<72x128xf32>
    %c0_232 = arith.constant 0 : index
    %c0_233 = arith.constant 0 : index
    %523 = vector.load %arg8[%c0_232, %c0_233] : memref<1x128xf32, #tpu.memory_space<vmem>>, vector<1x128xf32>
    %524 = vector.broadcast %523 : vector<1x128xf32> to vector<72x128xf32>
    %525 = arith.addf %522, %524 : vector<72x128xf32>
    %c8_234 = arith.constant 8 : index
    %c0_235 = arith.constant 0 : index
    %526 = vector.load %arg14[%c8_234, %c0_235] : memref<96x64xf32, #tpu.memory_space<vmem>>, vector<72x64xf32>
    %527 = vector.extract_strided_slice %518 {offsets = [1, 0, 0], sizes = [1, 64, 128], strides = [1, 1, 1]} : vector<4x64x128xf32> to vector<1x64x128xf32>
    %528 = vector.shape_cast %527 : vector<1x64x128xf32> to vector<64x128xf32>
    %cst_236 = arith.constant dense<0.000000e+00> : vector<72x128xf32>
    %529 = tpu.matmul %526, %528, %cst_236 {dimension_numbers = #tpu.dot_dimension_numbers<[1], [0], [0], [1], [0, 0, 1, 1], [], []>} : vector<72x64xf32>, vector<64x128xf32>, vector<72x128xf32> -> vector<72x128xf32>
    %530 = arith.addf %525, %529 : vector<72x128xf32>
    %c16_237 = arith.constant 16 : index
    %c0_238 = arith.constant 0 : index
    %531 = vector.load %arg14[%c16_237, %c0_238] : memref<96x64xf32, #tpu.memory_space<vmem>>, vector<72x64xf32>
    %532 = vector.extract_strided_slice %518 {offsets = [2, 0, 0], sizes = [1, 64, 128], strides = [1, 1, 1]} : vector<4x64x128xf32> to vector<1x64x128xf32>
    %533 = vector.shape_cast %532 : vector<1x64x128xf32> to vector<64x128xf32>
    %cst_239 = arith.constant dense<0.000000e+00> : vector<72x128xf32>
    %534 = tpu.matmul %531, %533, %cst_239 {dimension_numbers = #tpu.dot_dimension_numbers<[1], [0], [0], [1], [0, 0, 1, 1], [], []>} : vector<72x64xf32>, vector<64x128xf32>, vector<72x128xf32> -> vector<72x128xf32>
    %535 = arith.addf %530, %534 : vector<72x128xf32>
    %c24_240 = arith.constant 24 : index
    %c0_241 = arith.constant 0 : index
    %536 = vector.load %arg14[%c24_240, %c0_241] : memref<96x64xf32, #tpu.memory_space<vmem>>, vector<72x64xf32>
    %537 = vector.extract_strided_slice %518 {offsets = [3, 0, 0], sizes = [1, 64, 128], strides = [1, 1, 1]} : vector<4x64x128xf32> to vector<1x64x128xf32>
    %538 = vector.shape_cast %537 : vector<1x64x128xf32> to vector<64x128xf32>
    %cst_242 = arith.constant dense<0.000000e+00> : vector<72x128xf32>
    %539 = tpu.matmul %536, %538, %cst_242 {dimension_numbers = #tpu.dot_dimension_numbers<[1], [0], [0], [1], [0, 0, 1, 1], [], []>} : vector<72x64xf32>, vector<64x128xf32>, vector<72x128xf32> -> vector<72x128xf32>
    %540 = arith.addf %535, %539 : vector<72x128xf32>
    %cst_243 = arith.constant 0.000000e+00 : f32
    %541 = vector.broadcast %cst_243 : f32 to vector<72x128xf32>
    %542 = arith.maximumf %540, %541 : vector<72x128xf32>
    %543 = vector.shape_cast %542 : vector<72x128xf32> to vector<9x8x128xf32>
    %cst_244 = arith.constant dense<0xFF800000> : vector<8x128xf32>
    %544 = vector.multi_reduction <maximumf>, %543, %cst_244 [0] : vector<9x8x128xf32> to vector<8x128xf32>
    %c0_245 = arith.constant 0 : index
    %c0_246 = arith.constant 0 : index
    %545 = vector.load %arg9[%c0_245, %c0_246] : memref<256x3xf32, #tpu.memory_space<vmem>>, vector<256x3xf32>
    %cst_247 = arith.constant dense<0.000000e+00> : vector<8x3xf32>
    %546 = tpu.matmul %517, %545, %cst_247 {dimension_numbers = #tpu.dot_dimension_numbers<[1], [0], [0], [1], [0, 0, 1, 1], [], []>} : vector<8x256xf32>, vector<256x3xf32>, vector<8x3xf32> -> vector<8x3xf32>
    %c0_248 = arith.constant 0 : index
    %c0_249 = arith.constant 0 : index
    %547 = vector.load %arg10[%c0_248, %c0_249] : memref<128x3xf32, #tpu.memory_space<vmem>>, vector<128x3xf32>
    %cst_250 = arith.constant dense<0.000000e+00> : vector<8x3xf32>
    %548 = tpu.matmul %544, %547, %cst_250 {dimension_numbers = #tpu.dot_dimension_numbers<[1], [0], [0], [1], [0, 0, 1, 1], [], []>} : vector<8x128xf32>, vector<128x3xf32>, vector<8x3xf32> -> vector<8x3xf32>
    %549 = arith.addf %546, %548 : vector<8x3xf32>
    %c0_251 = arith.constant 0 : index
    %c0_252 = arith.constant 0 : index
    %550 = vector.load %arg11[%c0_251, %c0_252] : memref<1x3xf32, #tpu.memory_space<vmem>>, vector<1x3xf32>
    %551 = vector.broadcast %550 : vector<1x3xf32> to vector<8x3xf32>
    %552 = arith.addf %549, %551 : vector<8x3xf32>
    %553 = vector.extract_strided_slice %552 {offsets = [0, 0], sizes = [2, 3], strides = [1, 1]} : vector<8x3xf32> to vector<2x3xf32>
    %c0_253 = arith.constant 0 : index
    %c0_254 = arith.constant 0 : index
    %554 = vector.load %arg12[%c0_253, %c0_254] : memref<2x3xf32, #tpu.memory_space<vmem>>, vector<2x3xf32>
    tpu.vector_store %arg12[%c0_253, %c0_254], %553 {strides = array<i32>} : memref<2x3xf32, #tpu.memory_space<vmem>>, vector<2x3xf32>,
    return
  }
  func.func @transform_0(%arg0: i32, %arg1: memref<16xi32, #tpu.memory_space<smem>>) -> (i32, i32, i32) {
    %c0_i32 = arith.constant 0 : i32
    %c0_i32_0 = arith.constant 0 : i32
    %c0_i32_1 = arith.constant 0 : i32
    %c0_i32_2 = arith.constant 0 : i32
    return %c0_i32, %c0_i32_0, %c0_i32_1 : i32, i32, i32
  }
  func.func @transform_1(%arg0: i32, %arg1: memref<16xi32, #tpu.memory_space<smem>>) -> (i32, i32, i32) {
    %c0_i32 = arith.constant 0 : i32
    %c0_i32_0 = arith.constant 0 : i32
    %c0_i32_1 = arith.constant 0 : i32
    %c0_i32_2 = arith.constant 0 : i32
    return %c0_i32, %c0_i32_0, %c0_i32_1 : i32, i32, i32
  }
  func.func @transform_2(%arg0: i32, %arg1: memref<16xi32, #tpu.memory_space<smem>>) -> (i32, i32) {
    %c0_i32 = arith.constant 0 : i32
    %c0_i32_0 = arith.constant 0 : i32
    %c0_i32_1 = arith.constant 0 : i32
    return %c0_i32, %c0_i32_0 : i32, i32
  }
  func.func @transform_3(%arg0: i32, %arg1: memref<16xi32, #tpu.memory_space<smem>>) -> (i32, i32, i32) {
    %c0_i32 = arith.constant 0 : i32
    %c0_i32_0 = arith.constant 0 : i32
    %c0_i32_1 = arith.constant 0 : i32
    %c0_i32_2 = arith.constant 0 : i32
    return %c0_i32, %c0_i32_0, %c0_i32_1 : i32, i32, i32
  }
  func.func @transform_4(%arg0: i32, %arg1: memref<16xi32, #tpu.memory_space<smem>>) -> (i32, i32) {
    %c0_i32 = arith.constant 0 : i32
    %c0_i32_0 = arith.constant 0 : i32
    %c0_i32_1 = arith.constant 0 : i32
    return %c0_i32, %c0_i32_0 : i32, i32
  }
  func.func @transform_5(%arg0: i32, %arg1: memref<16xi32, #tpu.memory_space<smem>>) -> (i32, i32, i32) {
    %c0_i32 = arith.constant 0 : i32
    %c0_i32_0 = arith.constant 0 : i32
    %c0_i32_1 = arith.constant 0 : i32
    %c0_i32_2 = arith.constant 0 : i32
    return %c0_i32, %c0_i32_0, %c0_i32_1 : i32, i32, i32
  }
  func.func @transform_6(%arg0: i32, %arg1: memref<16xi32, #tpu.memory_space<smem>>) -> (i32, i32) {
    %c0_i32 = arith.constant 0 : i32
    %c0_i32_0 = arith.constant 0 : i32
    %c0_i32_1 = arith.constant 0 : i32
    return %c0_i32, %c0_i32_0 : i32, i32
  }
  func.func @transform_7(%arg0: i32, %arg1: memref<16xi32, #tpu.memory_space<smem>>) -> (i32, i32) {
    %c0_i32 = arith.constant 0 : i32
    %c0_i32_0 = arith.constant 0 : i32
    %c0_i32_1 = arith.constant 0 : i32
    return %c0_i32, %c0_i32_0 : i32, i32
  }
  func.func @transform_8(%arg0: i32, %arg1: memref<16xi32, #tpu.memory_space<smem>>) -> (i32, i32) {
    %c0_i32 = arith.constant 0 : i32
    %c0_i32_0 = arith.constant 0 : i32
    %c0_i32_1 = arith.constant 0 : i32
    return %c0_i32, %c0_i32_0 : i32, i32
  }
  func.func @transform_9(%arg0: i32, %arg1: memref<16xi32, #tpu.memory_space<smem>>) -> (i32, i32) {
    %c0_i32 = arith.constant 0 : i32
    %c0_i32_0 = arith.constant 0 : i32
    %c0_i32_1 = arith.constant 0 : i32
    return %c0_i32, %c0_i32_0 : i32, i32
  }
  func.func @transform_10(%arg0: i32, %arg1: memref<16xi32, #tpu.memory_space<smem>>) -> (i32, i32) {
    %c0_i32 = arith.constant 0 : i32
    %c0_i32_0 = arith.constant 0 : i32
    %c0_i32_1 = arith.constant 0 : i32
    return %c0_i32, %c0_i32_0 : i32, i32
  }
}

</mosaic_0001>

<llo_original>
// kernel: tpu_custom_call.1
$region0: #{tpu_custom_call.1}
  #allocation0 [shape = 'u32[]', space=smem, size = 0x4, offset = 0x4, fixed_abs, tag = 'smem constant byte address 0x4 - core index']
  #allocation1 [shape = 'u32[144,128]{1,0:T(1,128)}', space=vmem, size = 0x12000, scoped, tag = 'internal scratch']
  #allocation2 [shape = 'f32[64,256]{1,0:T(8,128)}', space=vmem, size = 0x10000, scoped, tag = 'scratch operand']
  #allocation3 [shape = 'f32[96,64]{1,0:T(8,128)}', space=vmem, size = 0xc000, scoped, tag = 'scratch operand']
  #allocation4 [shape = 's32[1]{0}', space=sflag, size = 0x4, scoped, tag = 'scoped memory for tpu_custom_call.1']
  #allocation5 [shape = 'u8[512]{0}', space=smem, size = 0x200, scoped, tag = 'prefetched SMEM operand 0']
  %s0 = inlined_call_operand.vmem [shape: s32[16], index: 0, kind: input, shape index: {}]
  %s1 = inlined_call_operand.hbm [shape: f32[40,1,256], index: 1, kind: input, shape index: {}]
  %s2 = inlined_call_operand.hbm [shape: f32[40,1,256], index: 2, kind: input, shape index: {}]
  %s3 = inlined_call_operand.vmem [shape: f32[64,256], index: 3, kind: input, shape index: {}]
  %s4 = inlined_call_operand.hbm [shape: f32[5,64,256], index: 4, kind: input, shape index: {}]
  %s5 = inlined_call_operand.vmem [shape: f32[1,256], index: 5, kind: input, shape index: {}]
  %s6 = inlined_call_operand.vmem [shape: f32[4,64,128], index: 6, kind: input, shape index: {}]
  %s7 = inlined_call_operand.vmem [shape: f32[1,128], index: 7, kind: input, shape index: {}]
  %s8 = inlined_call_operand.vmem [shape: f32[256,3], index: 8, kind: input, shape index: {}]
  %s9 = inlined_call_operand.vmem [shape: f32[128,3], index: 9, kind: input, shape index: {}]
  %s10 = inlined_call_operand.vmem [shape: f32[1,3], index: 10, kind: input, shape index: {}]
  %s11 = inlined_call_operand.hbm [shape: f32[2,3], index: 11, kind: output, shape index: {}]
  %s12 = sld [smem:[#allocation0]]
  $region62: #{tpu_custom_call.1} parent=0
    _
  %s14 = ssub.s32 1, %s12
  %s15 = scalar_select 0, %s14, %s12
  %s16 = sshll.u32 %s0, 4
  %s17 = int_to_ptr.vmem [resolvable:$true] %s16
  %19 = dma.vmem_to_smem %s17, 16, [#allocation5], [#allocation4]
  %20 = dma.done [#allocation4], 16
  %21 = sfence
  $region1: #{tpu_custom_call.1} parent=0
    #allocation6 [shape = 'u8[40960]{0}', space=vmem, size = 0xa000, scoped, tag = 'input window, operand 1, single buffered']
    #allocation7 [shape = 's32[1]{0}', space=sflag, size = 0x4, scoped, tag = 'scoped memory for tpu_custom_call.1']
    #allocation8 [shape = 's32[1]{0}', space=sflag, size = 0x4, scoped, tag = 'scoped memory for tpu_custom_call.1']
    #allocation9 [shape = 'u8[40960]{0}', space=vmem, size = 0xa000, scoped, tag = 'input window, operand 2, single buffered']
    #allocation10 [shape = 's32[1]{0}', space=sflag, size = 0x4, scoped, tag = 'scoped memory for tpu_custom_call.1']
    #allocation11 [shape = 'u8[327680]{0}', space=vmem, size = 0x50000, scoped, tag = 'input window, operand 4, single buffered']
    #allocation12 [shape = 'u8[1024]{0}', space=vmem, size = 0x400, scoped, tag = 'output window, operand 0, single buffered']
    %22 = vsyncpa [#allocation7], 0
    %23 = vsyncpa [#allocation10], 0
    %24 = vsyncpa [#allocation8], 0
    // Predicated region
    $region2: #{tpu_custom_call.1} parent=1 // pred_check
      _
    $region3: #{tpu_custom_call.1} parent=1 // pred_check_branch
      %26 = sbr.rel (0) target = $region5
    $region4: #{tpu_custom_call.1} parent=1 // pred_region
      %s28 = ssub.s32 1280, 1280
      %29 = vsyncadd [#allocation7], %s28
      %s30 = sshll.u32 [#allocation6], 4
      %s31 = int_to_ptr.vmem [resolvable:$true] %s30
      %36 = dma.hbm_to_vmem [thread:$0]  %s1, 1280, %s31, [#allocation7], 32, 32, 2
    $region5: #{tpu_custom_call.1} parent=1 // pred_fallthru
      _
    // Predicated region
    $region6: #{tpu_custom_call.1} parent=1 // pred_check
      _
    $region7: #{tpu_custom_call.1} parent=1 // pred_check_branch
      %38 = sbr.rel (0) target = $region9
    $region8: #{tpu_custom_call.1} parent=1 // pred_region
      %s40 = ssub.s32 1280, 1280
      %41 = vsyncadd [#allocation10], %s40
      %s42 = sshll.u32 [#allocation9], 4
      %s43 = int_to_ptr.vmem [resolvable:$true] %s42
      %48 = dma.hbm_to_vmem [thread:$0]  %s2, 1280, %s43, [#allocation10], 32, 32, 2
    $region9: #{tpu_custom_call.1} parent=1 // pred_fallthru
      _
    // Predicated region
    $region10: #{tpu_custom_call.1} parent=1 // pred_check
      _
    $region11: #{tpu_custom_call.1} parent=1 // pred_check_branch
      %50 = sbr.rel (0) target = $region13
    $region12: #{tpu_custom_call.1} parent=1 // pred_region
      _
    $region13: #{tpu_custom_call.1} parent=1 // pred_fallthru
      _
    // Predicated region
    $region14: #{tpu_custom_call.1} parent=1 // pred_check
      _
    $region15: #{tpu_custom_call.1} parent=1 // pred_check_branch
      %52 = sbr.rel (0) target = $region17
    $region16: #{tpu_custom_call.1} parent=1 // pred_region
      %s54 = ssub.s32 10240, 10240
      %55 = vsyncadd [#allocation10], %s54
      %s56 = sshll.u32 [#allocation11], 4
      %s57 = int_to_ptr.vmem [resolvable:$true] %s56
      %62 = dma.hbm_to_vmem [thread:$0]  %s4, 10240, %s57, [#allocation10], 256, 256, 16
    $region17: #{tpu_custom_call.1} parent=1 // pred_fallthru
      _
    // Predicated region
    $region18: #{tpu_custom_call.1} parent=1 // pred_check
      _
    $region19: #{tpu_custom_call.1} parent=1 // pred_check_branch
      %64 = sbr.rel (0) target = $region21
    $region20: #{tpu_custom_call.1} parent=1 // pred_region
      _
    $region21: #{tpu_custom_call.1} parent=1 // pred_fallthru
      _
    // Predicated region
    $region22: #{tpu_custom_call.1} parent=1 // pred_check
      _
    $region23: #{tpu_custom_call.1} parent=1 // pred_check_branch
      %66 = sbr.rel (0) target = $region25
    $region24: #{tpu_custom_call.1} parent=1 // pred_region
      _
    $region25: #{tpu_custom_call.1} parent=1 // pred_fallthru
      _
    // Predicated region
    $region26: #{tpu_custom_call.1} parent=1 // pred_check
      _
    $region27: #{tpu_custom_call.1} parent=1 // pred_check_branch
      %68 = sbr.rel (0) target = $region29
    $region28: #{tpu_custom_call.1} parent=1 // pred_region
      _
    $region29: #{tpu_custom_call.1} parent=1 // pred_fallthru
      _
    // Predicated region
    $region30: #{tpu_custom_call.1} parent=1 // pred_check
      _
    $region31: #{tpu_custom_call.1} parent=1 // pred_check_branch
      %70 = sbr.rel (0) target = $region33
    $region32: #{tpu_custom_call.1} parent=1 // pred_region
      _
    $region33: #{tpu_custom_call.1} parent=1 // pred_fallthru
      _
    // Predicated region
    $region34: #{tpu_custom_call.1} parent=1 // pred_check
      _
    $region35: #{tpu_custom_call.1} parent=1 // pred_check_branch
      %72 = sbr.rel (0) target = $region37
    $region36: #{tpu_custom_call.1} parent=1 // pred_region
      _
    $region37: #{tpu_custom_call.1} parent=1 // pred_fallthru
      _
    // Predicated region
    $region38: #{tpu_custom_call.1} parent=1 // pred_check
      _
    $region39: #{tpu_custom_call.1} parent=1 // pred_check_branch
      %74 = sbr.rel (0) target = $region41
    $region40: #{tpu_custom_call.1} parent=1 // pred_region
      _
    $region41: #{tpu_custom_call.1} parent=1 // pred_fallthru
      _
    // Predicated region
    $region42: #{tpu_custom_call.1} parent=1 // pred_check
      _
    $region43: #{tpu_custom_call.1} parent=1 // pred_check_branch
      %76 = sbr.rel (0) target = $region45
    $region44: #{tpu_custom_call.1} parent=1 // pred_region
      %77 = dma.done [#allocation7], 1280
    $region45: #{tpu_custom_call.1} parent=1 // pred_fallthru
      _
    // Predicated region
    $region46: #{tpu_custom_call.1} parent=1 // pred_check
      _
    $region47: #{tpu_custom_call.1} parent=1 // pred_check_branch
      %79 = sbr.rel (0) target = $region49
    $region48: #{tpu_custom_call.1} parent=1 // pred_region
      %80 = dma.done [#allocation10], 1280
    $region49: #{tpu_custom_call.1} parent=1 // pred_fallthru
      _
    // Predicated region
    $region50: #{tpu_custom_call.1} parent=1 // pred_check
      _
    $region51: #{tpu_custom_call.1} parent=1 // pred_check_branch
      %82 = sbr.rel (0) target = $region53
    $region52: #{tpu_custom_call.1} parent=1 // pred_region
      %83 = dma.done [#allocation10], 10240
    $region53: #{tpu_custom_call.1} parent=1 // pred_fallthru
      _
    %vm84 = vcmask 523264
    %85 = vst.msk [vmem:[#allocation3] sm:$0xff] %vm84, 0.0
    %86 = vst.msk [vmem:[#allocation3 + $0x8] sm:$0xff] %vm84, 0.0
    %87 = vst.msk [vmem:[#allocation3 + $0x10] sm:$0xff] %vm84, 0.0
    %88 = vst.msk [vmem:[#allocation3 + $0x18] sm:$0xff] %vm84, 0.0
    %89 = vst.msk [vmem:[#allocation3 + $0x20] sm:$0xff] %vm84, 0.0
    %90 = vst.msk [vmem:[#allocation3 + $0x28] sm:$0xff] %vm84, 0.0
    %91 = vst.msk [vmem:[#allocation3 + $0x30] sm:$0xff] %vm84, 0.0
    %92 = vst.msk [vmem:[#allocation3 + $0x38] sm:$0xff] %vm84, 0.0
    %93 = vst.msk [vmem:[#allocation3 + $0x40] sm:$0xff] %vm84, 0.0
    %94 = vst.msk [vmem:[#allocation3 + $0x48] sm:$0xff] %vm84, 0.0
    %95 = vst.msk [vmem:[#allocation3 + $0x50] sm:$0xff] %vm84, 0.0
    %96 = vst.msk [vmem:[#allocation3 + $0x58] sm:$0xff] %vm84, 0.0
    %97 = vst [vmem:[#allocation2] sm:$0xff] 0.0
    %98 = vst [vmem:[#allocation2 + $0x8] sm:$0xff] 0.0
    %99 = vst [vmem:[#allocation2 + $0x10] sm:$0xff] 0.0
    %100 = vst [vmem:[#allocation2 + $0x18] sm:$0xff] 0.0
    %101 = vst [vmem:[#allocation2 + $0x20] sm:$0xff] 0.0
    %102 = vst [vmem:[#allocation2 + $0x28] sm:$0xff] 0.0
    %103 = vst [vmem:[#allocation2 + $0x30] sm:$0xff] 0.0
    %104 = vst [vmem:[#allocation2 + $0x38] sm:$0xff] 0.0
    %105 = vst [vmem:[#allocation2 + $0x40] sm:$0xff] 0.0
    %106 = vst [vmem:[#allocation2 + $0x48] sm:$0xff] 0.0
    %107 = vst [vmem:[#allocation2 + $0x50] sm:$0xff] 0.0
    %108 = vst [vmem:[#allocation2 + $0x58] sm:$0xff] 0.0
    %109 = vst [vmem:[#allocation2 + $0x60] sm:$0xff] 0.0
    %110 = vst [vmem:[#allocation2 + $0x68] sm:$0xff] 0.0
    %111 = vst [vmem:[#allocation2 + $0x70] sm:$0xff] 0.0
    %112 = vst [vmem:[#allocation2 + $0x78] sm:$0xff] 0.0
    %s113 = sld [smem:[#allocation5]]
    %s114 = sld [smem:[#allocation5 + $0x7]]
    %s115 = smul.u32 %s113, 2
    %s116 = scalar_lea.vmem [#allocation6], %s115
    %v117 = vld [vmem:[%s116] sm:$0x3]
    %s118 = smul.u32 %s114, 2
    %s119 = scalar_lea.vmem [#allocation9], %s118
    %v120 = vld [vmem:[%s119] sm:$0x3]
    %v121 = vadd.f32 %v117, %v120
    %v122 = vlaneseq
    %vm123 = vcmp.ge.s32.totalorder %v122, 0
    %vm124 = vcmp.lt.s32.totalorder %v122, 256
    %vm125 = vmand %vm123, %vm124
    %126 = vst.msk [vmem:[#allocation2] ss:$8 sm:$0x3] %vm125, %v121
    %127 = vst.msk [vmem:[#allocation2] ss:$8 sm:$0x0] %vm125, %v121
    %s128 = sld [smem:[#allocation5 + $0x8]]
    %s129 = sld [smem:[#allocation5 + $0xf]]
    %s130 = smul.u32 %s128, 2
    %s131 = scalar_lea.vmem [#allocation6], %s130
    %v132 = vld [vmem:[%s131] sm:$0x3]
    %s133 = smul.u32 %s129, 2
    %s134 = scalar_lea.vmem [#allocation9], %s133
    %v135 = vld [vmem:[%s134] sm:$0x3]
    %v136 = vadd.f32 %v132, %v135
    %s137 = scalar_lea.vmem [#allocation2], 1
    %138 = vst.msk [vmem:[%s137] ss:$8 sm:$0x3] %vm125, %v136
    %139 = vst.msk [vmem:[%s137] ss:$8 sm:$0x0] %vm125, %v136
    %s140 = sld [smem:[#allocation5 + $0x1]]
    %s141 = sld [smem:[#allocation5 + $0x6]]
    %s142 = smul.u32 %s140, 2
    %s143 = scalar_lea.vmem [#allocation6], %s142
    %v144 = vld [vmem:[%s143] sm:$0x3]
    %s145 = smul.u32 %s141, 2
    %s146 = scalar_lea.vmem [#allocation9], %s145
    %v147 = vld [vmem:[%s146] sm:$0x3]
    %v148 = vadd.f32 %v144, %v147
    %s149 = scalar_lea.vmem [#allocation2], 16
    %150 = vst.msk [vmem:[%s149] ss:$8 sm:$0x3] %vm125, %v148
    %151 = vst.msk [vmem:[%s149] ss:$8 sm:$0x0] %vm125, %v148
    %s152 = sld [smem:[#allocation5 + $0x9]]
    %s153 = sld [smem:[#allocation5 + $0xe]]
    %s154 = smul.u32 %s152, 2
    %s155 = scalar_lea.vmem [#allocation6], %s154
    %v156 = vld [vmem:[%s155] sm:$0x3]
    %s157 = smul.u32 %s153, 2
    %s158 = scalar_lea.vmem [#allocation9], %s157
    %v159 = vld [vmem:[%s158] sm:$0x3]
    %v160 = vadd.f32 %v156, %v159
    %s161 = scalar_lea.vmem [#allocation2], 17
    %162 = vst.msk [vmem:[%s161] ss:$8 sm:$0x3] %vm125, %v160
    %163 = vst.msk [vmem:[%s161] ss:$8 sm:$0x0] %vm125, %v160
    %s164 = sld [smem:[#allocation5 + $0x2]]
    %s165 = sld [smem:[#allocation5 + $0x5]]
    %s166 = smul.u32 %s164, 2
    %s167 = scalar_lea.vmem [#allocation6], %s166
    %v168 = vld [vmem:[%s167] sm:$0x3]
    %s169 = smul.u32 %s165, 2
    %s170 = scalar_lea.vmem [#allocation9], %s169
    %v171 = vld [vmem:[%s170] sm:$0x3]
    %v172 = vadd.f32 %v168, %v171
    %s173 = scalar_lea.vmem [#allocation2], 32
    %174 = vst.msk [vmem:[%s173] ss:$8 sm:$0x3] %vm125, %v172
    %175 = vst.msk [vmem:[%s173] ss:$8 sm:$0x0] %vm125, %v172
    %s176 = sld [smem:[#allocation5 + $0xa]]
    %s177 = sld [smem:[#allocation5 + $0xd]]
    %s178 = smul.u32 %s176, 2
    %s179 = scalar_lea.vmem [#allocation6], %s178
    %v180 = vld [vmem:[%s179] sm:$0x3]
    %s181 = smul.u32 %s177, 2
    %s182 = scalar_lea.vmem [#allocation9], %s181
    %v183 = vld [vmem:[%s182] sm:$0x3]
    %v184 = vadd.f32 %v180, %v183
    %s185 = scalar_lea.vmem [#allocation2], 33
    %186 = vst.msk [vmem:[%s185] ss:$8 sm:$0x3] %vm125, %v184
    %187 = vst.msk [vmem:[%s185] ss:$8 sm:$0x0] %vm125, %v184
    %s188 = sld [smem:[#allocation5 + $0x3]]
    %s189 = sld [smem:[#allocation5 + $0x4]]
    %s190 = smul.u32 %s188, 2
    %s191 = scalar_lea.vmem [#allocation6], %s190
    %v192 = vld [vmem:[%s191] sm:$0x3]
    %s193 = smul.u32 %s189, 2
    %s194 = scalar_lea.vmem [#allocation9], %s193
    %v195 = vld [vmem:[%s194] sm:$0x3]
    %v196 = vadd.f32 %v192, %v195
    %s197 = scalar_lea.vmem [#allocation2], 48
    %198 = vst.msk [vmem:[%s197] ss:$8 sm:$0x3] %vm125, %v196
    %199 = vst.msk [vmem:[%s197] ss:$8 sm:$0x0] %vm125, %v196
    %s200 = sld [smem:[#allocation5 + $0xb]]
    %s201 = sld [smem:[#allocation5 + $0xc]]
    %s202 = smul.u32 %s200, 2
    %s203 = scalar_lea.vmem [#allocation6], %s202
    %v204 = vld [vmem:[%s203] sm:$0x3]
    %s205 = smul.u32 %s201, 2
    %s206 = scalar_lea.vmem [#allocation9], %s205
    %v207 = vld [vmem:[%s206] sm:$0x3]
    %v208 = vadd.f32 %v204, %v207
    %s209 = scalar_lea.vmem [#allocation2], 49
    %210 = vst.msk [vmem:[%s209] ss:$8 sm:$0x3] %vm125, %v208
    %211 = vst.msk [vmem:[%s209] ss:$8 sm:$0x0] %vm125, %v208
    %s212 = sld [smem:[#allocation5 + $0x4]]
    %s213 = sld [smem:[#allocation5 + $0x3]]
    %s214 = smul.u32 %s212, 2
    %s215 = scalar_lea.vmem [#allocation6], %s214
    %v216 = vld [vmem:[%s215] sm:$0x3]
    %s217 = smul.u32 %s213, 2
    %s218 = scalar_lea.vmem [#allocation9], %s217
    %v219 = vld [vmem:[%s218] sm:$0x3]
    %v220 = vadd.f32 %v216, %v219
    %s221 = scalar_lea.vmem [#allocation2], 64
    %222 = vst.msk [vmem:[%s221] ss:$8 sm:$0x3] %vm125, %v220
    %223 = vst.msk [vmem:[%s221] ss:$8 sm:$0x0] %vm125, %v220
    %s224 = sld [smem:[#allocation5 + $0xc]]
    %s225 = sld [smem:[#allocation5 + $0xb]]
    %s226 = smul.u32 %s224, 2
    %s227 = scalar_lea.vmem [#allocation6], %s226
    %v228 = vld [vmem:[%s227] sm:$0x3]
    %s229 = smul.u32 %s225, 2
    %s230 = scalar_lea.vmem [#allocation9], %s229
    %v231 = vld [vmem:[%s230] sm:$0x3]
    %v232 = vadd.f32 %v228, %v231
    %s233 = scalar_lea.vmem [#allocation2], 65
    %234 = vst.msk [vmem:[%s233] ss:$8 sm:$0x3] %vm125, %v232
    %235 = vst.msk [vmem:[%s233] ss:$8 sm:$0x0] %vm125, %v232
    %s236 = sld [smem:[#allocation5 + $0x5]]
    %s237 = sld [smem:[#allocation5 + $0x2]]
    %s238 = smul.u32 %s236, 2
    %s239 = scalar_lea.vmem [#allocation6], %s238
    %v240 = vld [vmem:[%s239] sm:$0x3]
    %s241 = smul.u32 %s237, 2
    %s242 = scalar_lea.vmem [#allocation9], %s241
    %v243 = vld [vmem:[%s242] sm:$0x3]
    %v244 = vadd.f32 %v240, %v243
    %s245 = scalar_lea.vmem [#allocation2], 80
    %246 = vst.msk [vmem:[%s245] ss:$8 sm:$0x3] %vm125, %v244
    %247 = vst.msk [vmem:[%s245] ss:$8 sm:$0x0] %vm125, %v244
    %s248 = sld [smem:[#allocation5 + $0xd]]
    %s249 = sld [smem:[#allocation5 + $0xa]]
    %s250 = smul.u32 %s248, 2
    %s251 = scalar_lea.vmem [#allocation6], %s250
    %v252 = vld [vmem:[%s251] sm:$0x3]
    %s253 = smul.u32 %s249, 2
    %s254 = scalar_lea.vmem [#allocation9], %s253
    %v255 = vld [vmem:[%s254] sm:$0x3]
    %v256 = vadd.f32 %v252, %v255
    %s257 = scalar_lea.vmem [#allocation2], 81
    %258 = vst.msk [vmem:[%s257] ss:$8 sm:$0x3] %vm125, %v256
    %259 = vst.msk [vmem:[%s257] ss:$8 sm:$0x0] %vm125, %v256
    %s260 = sld [smem:[#allocation5 + $0x6]]
    %s261 = sld [smem:[#allocation5 + $0x1]]
    %s262 = smul.u32 %s260, 2
    %s263 = scalar_lea.vmem [#allocation6], %s262
    %v264 = vld [vmem:[%s263] sm:$0x3]
    %s265 = smul.u32 %s261, 2
    %s266 = scalar_lea.vmem [#allocation9], %s265
    %v267 = vld [vmem:[%s266] sm:$0x3]
    %v268 = vadd.f32 %v264, %v267
    %s269 = scalar_lea.vmem [#allocation2], 96
    %270 = vst.msk [vmem:[%s269] ss:$8 sm:$0x3] %vm125, %v268
    %271 = vst.msk [vmem:[%s269] ss:$8 sm:$0x0] %vm125, %v268
    %s272 = sld [smem:[#allocation5 + $0xe]]
    %s273 = sld [smem:[#allocation5 + $0x9]]
    %s274 = smul.u32 %s272, 2
    %s275 = scalar_lea.vmem [#allocation6], %s274
    %v276 = vld [vmem:[%s275] sm:$0x3]
    %s277 = smul.u32 %s273, 2
    %s278 = scalar_lea.vmem [#allocation9], %s277
    %v279 = vld [vmem:[%s278] sm:$0x3]
    %v280 = vadd.f32 %v276, %v279
    %s281 = scalar_lea.vmem [#allocation2], 97
    %282 = vst.msk [vmem:[%s281] ss:$8 sm:$0x3] %vm125, %v280
    %283 = vst.msk [vmem:[%s281] ss:$8 sm:$0x0] %vm125, %v280
    %s284 = sld [smem:[#allocation5 + $0x7]]
    %s285 = sld [smem:[#allocation5]]
    %s286 = smul.u32 %s284, 2
    %s287 = scalar_lea.vmem [#allocation6], %s286
    %v288 = vld [vmem:[%s287] sm:$0x3]
    %s289 = smul.u32 %s285, 2
    %s290 = scalar_lea.vmem [#allocation9], %s289
    %v291 = vld [vmem:[%s290] sm:$0x3]
    %v292 = vadd.f32 %v288, %v291
    %s293 = scalar_lea.vmem [#allocation2], 112
    %294 = vst.msk [vmem:[%s293] ss:$8 sm:$0x3] %vm125, %v292
    %295 = vst.msk [vmem:[%s293] ss:$8 sm:$0x0] %vm125, %v292
    %s296 = sld [smem:[#allocation5 + $0xf]]
    %s297 = sld [smem:[#allocation5 + $0x8]]
    %s298 = smul.u32 %s296, 2
    %s299 = scalar_lea.vmem [#allocation6], %s298
    %v300 = vld [vmem:[%s299] sm:$0x3]
    %s301 = smul.u32 %s297, 2
    %s302 = scalar_lea.vmem [#allocation9], %s301
    %v303 = vld [vmem:[%s302] sm:$0x3]
    %v304 = vadd.f32 %v300, %v303
    %s305 = scalar_lea.vmem [#allocation2], 113
    %306 = vst.msk [vmem:[%s305] ss:$8 sm:$0x3] %vm125, %v304
    %307 = vst.msk [vmem:[%s305] ss:$8 sm:$0x0] %vm125, %v304
    %v308 = vld [vmem:[%s3] sm:$0xff]
    %v309 = vld [vmem:[%s3 + $0x8] sm:$0xff]
    %v310 = vld [vmem:[%s3 + $0x10] sm:$0xff]
    %v311 = vld [vmem:[%s3 + $0x18] sm:$0xff]
    %v312 = vld [vmem:[%s3 + $0x20] sm:$0xff]
    %v313 = vld [vmem:[%s3 + $0x28] sm:$0xff]
    %v314 = vld [vmem:[%s3 + $0x30] sm:$0xff]
    %v315 = vld [vmem:[%s3 + $0x38] sm:$0xff]
    %v316 = vld [vmem:[%s3 + $0x40] sm:$0xff]
    %v317 = vld [vmem:[%s3 + $0x48] sm:$0xff]
    %v318 = vld [vmem:[%s3 + $0x50] sm:$0xff]
    %v319 = vld [vmem:[%s3 + $0x58] sm:$0xff]
    %v320 = vld [vmem:[%s3 + $0x60] sm:$0xff]
    %v321 = vld [vmem:[%s3 + $0x68] sm:$0xff]
    %v322 = vld [vmem:[%s3 + $0x70] sm:$0xff]
    %v323 = vld [vmem:[%s3 + $0x78] sm:$0xff]
    %s324 = smul.u32 0, 2
    %s325 = smul.addr %s324, 8
    %s326 = scalar_lea.vmem [#allocation2], %s325
    %v327 = vld [vmem:[%s326] sm:$0xff]
    %v328 = vld [vmem:[%s326 + $0x8] sm:$0xff]
    %v330 = vsel %vm84, 0.0, 0
    %332 = vmatprep.subr.mxu0 0.0
    %333 = vmatpush1.msra.mxu0 0.0
    %334 = vmatprep.subr.mxu0 0.0
    %335 = vmatpush1.msra.mxu0 0.0
    %336 = vmatprep.subr.mxu0 0.0
    %337 = vmatpush1.msra.mxu0 0.0
    %338 = vmatprep.subr.mxu0 0.0
    %339 = vmatpush1.msra.mxu0 0.0
    %340 = vmatprep.subr.mxu0 0.0
    %341 = vmatpush1.msra.mxu0 0.0
    %342 = vmatprep.subr.mxu0 0.0
    %343 = vmatpush1.msra.mxu0 0.0
    %344 = vmatprep.subr.mxu0 0.0
    %345 = vmatpush1.msra.mxu0 0.0
    %346 = vmatprep.subr.mxu0 0.0
    %347 = vmatpush1.msra.mxu0 0.0
    %348 = vmatprep.subr.mxu0 %v323
    %349 = vmatpush1.msra.mxu0 %v322
    %350 = vmatprep.subr.mxu0 %v321
    %351 = vmatpush1.msra.mxu0 %v320
    %352 = vmatprep.subr.mxu0 %v319
    %353 = vmatpush1.msra.mxu0 %v318
    %354 = vmatprep.subr.mxu0 %v317
    %355 = vmatpush1.msra.mxu0 %v316
    %356 = vmatprep.subr.mxu0 %v315
    %357 = vmatpush1.msra.mxu0 %v314
    %358 = vmatprep.subr.mxu0 %v313
    %359 = vmatpush1.msra.mxu0 %v312
    %360 = vmatprep.subr.mxu0 %v311
    %361 = vmatpush1.msra.mxu0 %v310
    %362 = vmatprep.subr.mxu0 %v309
    %363 = vmatpush1.msra.mxu0 %v308
    %364 = vmatprep.subr.mxu0 0.0
    %365 = vmatpush2.msra.mxu0 0.0
    %366 = vmatprep.subr.mxu0 0.0
    %367 = vmatpush2.msra.mxu0 0.0
    %368 = vmatprep.subr.mxu0 0.0
    %369 = vmatpush2.msra.mxu0 0.0
    %370 = vmatprep.subr.mxu0 0.0
    %371 = vmatpush2.msra.mxu0 0.0
    %372 = vmatprep.subr.mxu0 0.0
    %373 = vmatpush2.msra.mxu0 0.0
    %374 = vmatprep.subr.mxu0 0.0
    %375 = vmatpush2.msra.mxu0 0.0
    %376 = vmatprep.subr.mxu0 0.0
    %377 = vmatpush2.msra.mxu0 0.0
    %378 = vmatprep.subr.mxu0 0.0
    %379 = vmatpush2.msra.mxu0 0.0
    %380 = vmatprep.subr.mxu0 0.0
    %381 = vmatpush2.msra.mxu0 0.0
    %382 = vmatprep.subr.mxu0 0.0
    %383 = vmatpush2.msra.mxu0 0.0
    %384 = vmatprep.subr.mxu0 0.0
    %385 = vmatpush2.msra.mxu0 0.0
    %386 = vmatprep.subr.mxu0 0.0
    %387 = vmatpush2.msra.mxu0 0.0
    %388 = vmatprep.subr.mxu0 0.0
    %389 = vmatpush2.msra.mxu0 0.0
    %390 = vmatprep.subr.mxu0 0.0
    %391 = vmatpush2.msra.mxu0 0.0
    %392 = vmatprep.subr.mxu0 0.0
    %393 = vmatpush2.msra.mxu0 0.0
    %394 = vmatprep.subr.mxu0 0.0
    %395 = vmatpush2.msra.mxu0 0.0
    %396 = vmatprep.mubr.f32.mxu0 0.0
    %397 = vmatmul.mubr.f32.gmra.mxu0 %v330
    %v398 = vpop.f32.mrf.mxu0
    %v399 = vadd.f32 0.0, %v398
    %v400 = vpop.f32.mrf.mxu0
    %v401 = vadd.f32 0.0, %v400
    %402 = vdwg.mxu0
    %v403 = vadd.f32 %v327, %v399
    %v404 = vadd.f32 %v328, %v401
    %v405 = vxor.u32 %v403, 2147483648
    %v406 = vmul.f32 %v405, 1.442695
    %v407 = vpow.pop %v406
    %v408 = vadd.f32 %v407, 1.0
    %v409 = vrcp.pop %v408
    %v410 = vmul.f32 1.0, %v409
    %v411 = vtanh.pop %v404
    %v412 = vxor.u32 %v404, 2147483648
    %v413 = vmul.f32 %v412, 1.442695
    %v414 = vpow.pop %v413
    %v415 = vadd.f32 %v414, 1.0
    %v416 = vrcp.pop %v415
    %v417 = vmul.f32 1.0, %v416
    %v418 = vmul.f32 %v410, 0.0
    %v419 = vmul.f32 %v410, %v411
    %421 = vrot.lane.b32.xlu0 %v419, 64
    %v422 = vpop.permute.xlu0 %421
    %v424 = vadd.f32 %v418, %v422
    %v425 = vtanh.pop %v424
    %v426 = vmul.f32 %v417, %v425
    %428 = vrot.lane.b32.xlu0 %v426, 64
    %v429 = vpop.permute.xlu0 %428
    %s431 = scalar_lea.vmem [#allocation3], 16
    %vm432 = vcmask 261120
    %433 = vst.msk [vmem:[%s431] sm:$0xff] %vm432, %v429
    %s434 = scalar_lea.vmem [#allocation3], 72
    %vm435 = vcmask 523520
    %436 = vst.msk [vmem:[%s434] sm:$0xff] %vm435, %v429
    %s437 = smul.u32 1, 2
    %s438 = smul.addr %s437, 8
    %s439 = scalar_lea.vmem [#allocation2], %s438
    %v440 = vld [vmem:[%s439] sm:$0xff]
    %v441 = vld [vmem:[%s439 + $0x8] sm:$0xff]
    %v442 = vsel %vm84, %v429, 0
    %444 = vmatprep.subr.mxu0 0.0
    %445 = vmatpush1.msra.mxu0 0.0
    %446 = vmatprep.subr.mxu0 0.0
    %447 = vmatpush1.msra.mxu0 0.0
    %448 = vmatprep.subr.mxu0 0.0
    %449 = vmatpush1.msra.mxu0 0.0
    %450 = vmatprep.subr.mxu0 0.0
    %451 = vmatpush1.msra.mxu0 0.0
    %452 = vmatprep.subr.mxu0 0.0
    %453 = vmatpush1.msra.mxu0 0.0
    %454 = vmatprep.subr.mxu0 0.0
    %455 = vmatpush1.msra.mxu0 0.0
    %456 = vmatprep.subr.mxu0 0.0
    %457 = vmatpush1.msra.mxu0 0.0
    %458 = vmatprep.subr.mxu0 0.0
    %459 = vmatpush1.msra.mxu0 0.0
    %460 = vmatprep.subr.mxu0 %v323
    %461 = vmatpush1.msra.mxu0 %v322
    %462 = vmatprep.subr.mxu0 %v321
    %463 = vmatpush1.msra.mxu0 %v320
    %464 = vmatprep.subr.mxu0 %v319
    %465 = vmatpush1.msra.mxu0 %v318
    %466 = vmatprep.subr.mxu0 %v317
    %467 = vmatpush1.msra.mxu0 %v316
    %468 = vmatprep.subr.mxu0 %v315
    %469 = vmatpush1.msra.mxu0 %v314
    %470 = vmatprep.subr.mxu0 %v313
    %471 = vmatpush1.msra.mxu0 %v312
    %472 = vmatprep.subr.mxu0 %v311
    %473 = vmatpush1.msra.mxu0 %v310
    %474 = vmatprep.subr.mxu0 %v309
    %475 = vmatpush1.msra.mxu0 %v308
    %476 = vmatprep.subr.mxu0 0.0
    %477 = vmatpush2.msra.mxu0 0.0
    %478 = vmatprep.subr.mxu0 0.0
    %479 = vmatpush2.msra.mxu0 0.0
    %480 = vmatprep.subr.mxu0 0.0
    %481 = vmatpush2.msra.mxu0 0.0
    %482 = vmatprep.subr.mxu0 0.0
    %483 = vmatpush2.msra.mxu0 0.0
    %484 = vmatprep.subr.mxu0 0.0
    %485 = vmatpush2.msra.mxu0 0.0
    %486 = vmatprep.subr.mxu0 0.0
    %487 = vmatpush2.msra.mxu0 0.0
    %488 = vmatprep.subr.mxu0 0.0
    %489 = vmatpush2.msra.mxu0 0.0
    %490 = vmatprep.subr.mxu0 0.0
    %491 = vmatpush2.msra.mxu0 0.0
    %492 = vmatprep.subr.mxu0 0.0
    %493 = vmatpush2.msra.mxu0 0.0
    %494 = vmatprep.subr.mxu0 0.0
    %495 = vmatpush2.msra.mxu0 0.0
    %496 = vmatprep.subr.mxu0 0.0
    %497 = vmatpush2.msra.mxu0 0.0
    %498 = vmatprep.subr.mxu0 0.0
    %499 = vmatpush2.msra.mxu0 0.0
    %500 = vmatprep.subr.mxu0 0.0
    %501 = vmatpush2.msra.mxu0 0.0
    %502 = vmatprep.subr.mxu0 0.0
    %503 = vmatpush2.msra.mxu0 0.0
    %504 = vmatprep.subr.mxu0 0.0
    %505 = vmatpush2.msra.mxu0 0.0
    %506 = vmatprep.subr.mxu0 0.0
    %507 = vmatpush2.msra.mxu0 0.0
    %508 = vmatprep.mubr.f32.mxu0 0.0
    %509 = vmatmul.mubr.f32.gmra.mxu0 %v442
    %v510 = vpop.f32.mrf.mxu0
    %v511 = vadd.f32 0.0, %v510
    %v512 = vpop.f32.mrf.mxu0
    %v513 = vadd.f32 0.0, %v512
    %514 = vdwg.mxu0
    %v515 = vadd.f32 %v440, %v511
    %v516 = vadd.f32 %v441, %v513
    %v517 = vxor.u32 %v515, 2147483648
    %v518 = vmul.f32 %v517, 1.442695
    %v519 = vpow.pop %v518
    %v520 = vadd.f32 %v519, 1.0
    %v521 = vrcp.pop %v520
    %v522 = vmul.f32 1.0, %v521
    %v523 = vtanh.pop %v516
    %v524 = vxor.u32 %v516, 2147483648
    %v525 = vmul.f32 %v524, 1.442695
    %v526 = vpow.pop %v525
    %v527 = vadd.f32 %v526, 1.0
    %v528 = vrcp.pop %v527
    %v529 = vmul.f32 1.0, %v528
    %v530 = vmul.f32 %v522, %v424
    %v531 = vmul.f32 %v522, %v523
    %533 = vrot.lane.b32.xlu0 %v531, 64
    %v534 = vpop.permute.xlu0 %533
    %v536 = vadd.f32 %v530, %v534
    %v537 = vtanh.pop %v536
    %v538 = vmul.f32 %v529, %v537
    %540 = vrot.lane.b32.xlu0 %v538, 64
    %v541 = vpop.permute.xlu0 %540
    %s543 = scalar_lea.vmem [#allocation3], 24
    %544 = vst.msk [vmem:[%s543] sm:$0xff] %vm432, %v541
    %s545 = scalar_lea.vmem [#allocation3], 64
    %546 = vst.msk [vmem:[%s545] sm:$0xff] %vm435, %v541
    %s547 = smul.u32 2, 2
    %s548 = smul.addr %s547, 8
    %s549 = scalar_lea.vmem [#allocation2], %s548
    %v550 = vld [vmem:[%s549] sm:$0xff]
    %v551 = vld [vmem:[%s549 + $0x8] sm:$0xff]
    %v552 = vsel %vm84, %v541, 0
    %554 = vmatprep.subr.mxu0 0.0
    %555 = vmatpush1.msra.mxu0 0.0
    %556 = vmatprep.subr.mxu0 0.0
    %557 = vmatpush1.msra.mxu0 0.0
    %558 = vmatprep.subr.mxu0 0.0
    %559 = vmatpush1.msra.mxu0 0.0
    %560 = vmatprep.subr.mxu0 0.0
    %561 = vmatpush1.msra.mxu0 0.0
    %562 = vmatprep.subr.mxu0 0.0
    %563 = vmatpush1.msra.mxu0 0.0
    %564 = vmatprep.subr.mxu0 0.0
    %565 = vmatpush1.msra.mxu0 0.0
    %566 = vmatprep.subr.mxu0 0.0
    %567 = vmatpush1.msra.mxu0 0.0
    %568 = vmatprep.subr.mxu0 0.0
    %569 = vmatpush1.msra.mxu0 0.0
    %570 = vmatprep.subr.mxu0 %v323
    %571 = vmatpush1.msra.mxu0 %v322
    %572 = vmatprep.subr.mxu0 %v321
    %573 = vmatpush1.msra.mxu0 %v320
    %574 = vmatprep.subr.mxu0 %v319
    %575 = vmatpush1.msra.mxu0 %v318
    %576 = vmatprep.subr.mxu0 %v317
    %577 = vmatpush1.msra.mxu0 %v316
    %578 = vmatprep.subr.mxu0 %v315
    %579 = vmatpush1.msra.mxu0 %v314
    %580 = vmatprep.subr.mxu0 %v313
    %581 = vmatpush1.msra.mxu0 %v312
    %582 = vmatprep.subr.mxu0 %v311
    %583 = vmatpush1.msra.mxu0 %v310
    %584 = vmatprep.subr.mxu0 %v309
    %585 = vmatpush1.msra.mxu0 %v308
    %586 = vmatprep.subr.mxu0 0.0
    %587 = vmatpush2.msra.mxu0 0.0
    %588 = vmatprep.subr.mxu0 0.0
    %589 = vmatpush2.msra.mxu0 0.0
    %590 = vmatprep.subr.mxu0 0.0
    %591 = vmatpush2.msra.mxu0 0.0
    %592 = vmatprep.subr.mxu0 0.0
    %593 = vmatpush2.msra.mxu0 0.0
    %594 = vmatprep.subr.mxu0 0.0
    %595 = vmatpush2.msra.mxu0 0.0
    %596 = vmatprep.subr.mxu0 0.0
    %597 = vmatpush2.msra.mxu0 0.0
    %598 = vmatprep.subr.mxu0 0.0
    %599 = vmatpush2.msra.mxu0 0.0
    %600 = vmatprep.subr.mxu0 0.0
    %601 = vmatpush2.msra.mxu0 0.0
    %602 = vmatprep.subr.mxu0 0.0
    %603 = vmatpush2.msra.mxu0 0.0
    %604 = vmatprep.subr.mxu0 0.0
    %605 = vmatpush2.msra.mxu0 0.0
    %606 = vmatprep.subr.mxu0 0.0
    %607 = vmatpush2.msra.mxu0 0.0
    %608 = vmatprep.subr.mxu0 0.0
    %609 = vmatpush2.msra.mxu0 0.0
    %610 = vmatprep.subr.mxu0 0.0
    %611 = vmatpush2.msra.mxu0 0.0
    %612 = vmatprep.subr.mxu0 0.0
    %613 = vmatpush2.msra.mxu0 0.0
    %614 = vmatprep.subr.mxu0 0.0
    %615 = vmatpush2.msra.mxu0 0.0
    %616 = vmatprep.subr.mxu0 0.0
    %617 = vmatpush2.msra.mxu0 0.0
    %618 = vmatprep.mubr.f32.mxu0 0.0
    %619 = vmatmul.mubr.f32.gmra.mxu0 %v552
    %v620 = vpop.f32.mrf.mxu0
    %v621 = vadd.f32 0.0, %v620
    %v622 = vpop.f32.mrf.mxu0
    %v623 = vadd.f32 0.0, %v622
    %624 = vdwg.mxu0
    %v625 = vadd.f32 %v550, %v621
    %v626 = vadd.f32 %v551, %v623
    %v627 = vxor.u32 %v625, 2147483648
    %v628 = vmul.f32 %v627, 1.442695
    %v629 = vpow.pop %v628
    %v630 = vadd.f32 %v629, 1.0
    %v631 = vrcp.pop %v630
    %v632 = vmul.f32 1.0, %v631
    %v633 = vtanh.pop %v626
    %v634 = vxor.u32 %v626, 2147483648
    %v635 = vmul.f32 %v634, 1.442695
    %v636 = vpow.pop %v635
    %v637 = vadd.f32 %v636, 1.0
    %v638 = vrcp.pop %v637
    %v639 = vmul.f32 1.0, %v638
    %v640 = vmul.f32 %v632, %v536
    %v641 = vmul.f32 %v632, %v633
    %643 = vrot.lane.b32.xlu0 %v641, 64
    %v644 = vpop.permute.xlu0 %643
    %v646 = vadd.f32 %v640, %v644
    %v647 = vtanh.pop %v646
    %v648 = vmul.f32 %v639, %v647
    %650 = vrot.lane.b32.xlu0 %v648, 64
    %v651 = vpop.permute.xlu0 %650
    %s653 = scalar_lea.vmem [#allocation3], 32
    %654 = vst.msk [vmem:[%s653] sm:$0xff] %vm432, %v651
    %s655 = scalar_lea.vmem [#allocation3], 56
    %656 = vst.msk [vmem:[%s655] sm:$0xff] %vm435, %v651
    %s657 = smul.u32 3, 2
    %s658 = smul.addr %s657, 8
    %s659 = scalar_lea.vmem [#allocation2], %s658
    %v660 = vld [vmem:[%s659] sm:$0xff]
    %v661 = vld [vmem:[%s659 + $0x8] sm:$0xff]
    %v662 = vsel %vm84, %v651, 0
    %664 = vmatprep.subr.mxu0 0.0
    %665 = vmatpush1.msra.mxu0 0.0
    %666 = vmatprep.subr.mxu0 0.0
    %667 = vmatpush1.msra.mxu0 0.0
    %668 = vmatprep.subr.mxu0 0.0
    %669 = vmatpush1.msra.mxu0 0.0
    %670 = vmatprep.subr.mxu0 0.0
    %671 = vmatpush1.msra.mxu0 0.0
    %672 = vmatprep.subr.mxu0 0.0
    %673 = vmatpush1.msra.mxu0 0.0
    %674 = vmatprep.subr.mxu0 0.0
    %675 = vmatpush1.msra.mxu0 0.0
    %676 = vmatprep.subr.mxu0 0.0
    %677 = vmatpush1.msra.mxu0 0.0
    %678 = vmatprep.subr.mxu0 0.0
    %679 = vmatpush1.msra.mxu0 0.0
    %680 = vmatprep.subr.mxu0 %v323
    %681 = vmatpush1.msra.mxu0 %v322
    %682 = vmatprep.subr.mxu0 %v321
    %683 = vmatpush1.msra.mxu0 %v320
    %684 = vmatprep.subr.mxu0 %v319
    %685 = vmatpush1.msra.mxu0 %v318
    %686 = vmatprep.subr.mxu0 %v317
    %687 = vmatpush1.msra.mxu0 %v316
    %688 = vmatprep.subr.mxu0 %v315
    %689 = vmatpush1.msra.mxu0 %v314
    %690 = vmatprep.subr.mxu0 %v313
    %691 = vmatpush1.msra.mxu0 %v312
    %692 = vmatprep.subr.mxu0 %v311
    %693 = vmatpush1.msra.mxu0 %v310
    %694 = vmatprep.subr.mxu0 %v309
    %695 = vmatpush1.msra.mxu0 %v308
    %696 = vmatprep.subr.mxu0 0.0
    %697 = vmatpush2.msra.mxu0 0.0
    %698 = vmatprep.subr.mxu0 0.0
    %699 = vmatpush2.msra.mxu0 0.0
    %700 = vmatprep.subr.mxu0 0.0
    %701 = vmatpush2.msra.mxu0 0.0
    %702 = vmatprep.subr.mxu0 0.0
    %703 = vmatpush2.msra.mxu0 0.0
    %704 = vmatprep.subr.mxu0 0.0
    %705 = vmatpush2.msra.mxu0 0.0
    %706 = vmatprep.subr.mxu0 0.0
    %707 = vmatpush2.msra.mxu0 0.0
    %708 = vmatprep.subr.mxu0 0.0
    %709 = vmatpush2.msra.mxu0 0.0
    %710 = vmatprep.subr.mxu0 0.0
    %711 = vmatpush2.msra.mxu0 0.0
    %712 = vmatprep.subr.mxu0 0.0
    %713 = vmatpush2.msra.mxu0 0.0
    %714 = vmatprep.subr.mxu0 0.0
    %715 = vmatpush2.msra.mxu0 0.0
    %716 = vmatprep.subr.mxu0 0.0
    %717 = vmatpush2.msra.mxu0 0.0
    %718 = vmatprep.subr.mxu0 0.0
    %719 = vmatpush2.msra.mxu0 0.0
    %720 = vmatprep.subr.mxu0 0.0
    %721 = vmatpush2.msra.mxu0 0.0
    %722 = vmatprep.subr.mxu0 0.0
    %723 = vmatpush2.msra.mxu0 0.0
    %724 = vmatprep.subr.mxu0 0.0
    %725 = vmatpush2.msra.mxu0 0.0
    %726 = vmatprep.subr.mxu0 0.0
    %727 = vmatpush2.msra.mxu0 0.0
    %728 = vmatprep.mubr.f32.mxu0 0.0
    %729 = vmatmul.mubr.f32.gmra.mxu0 %v662
    %v730 = vpop.f32.mrf.mxu0
    %v731 = vadd.f32 0.0, %v730
    %v732 = vpop.f32.mrf.mxu0
    %v733 = vadd.f32 0.0, %v732
    %734 = vdwg.mxu0
    %v735 = vadd.f32 %v660, %v731
    %v736 = vadd.f32 %v661, %v733
    %v737 = vxor.u32 %v735, 2147483648
    %v738 = vmul.f32 %v737, 1.442695
    %v739 = vpow.pop %v738
    %v740 = vadd.f32 %v739, 1.0
    %v741 = vrcp.pop %v740
    %v742 = vmul.f32 1.0, %v741
    %v743 = vtanh.pop %v736
    %v744 = vxor.u32 %v736, 2147483648
    %v745 = vmul.f32 %v744, 1.442695
    %v746 = vpow.pop %v745
    %v747 = vadd.f32 %v746, 1.0
    %v748 = vrcp.pop %v747
    %v749 = vmul.f32 1.0, %v748
    %v750 = vmul.f32 %v742, %v646
    %v751 = vmul.f32 %v742, %v743
    %753 = vrot.lane.b32.xlu0 %v751, 64
    %v754 = vpop.permute.xlu0 %753
    %v756 = vadd.f32 %v750, %v754
    %v757 = vtanh.pop %v756
    %v758 = vmul.f32 %v749, %v757
    %760 = vrot.lane.b32.xlu0 %v758, 64
    %v761 = vpop.permute.xlu0 %760
    %s763 = scalar_lea.vmem [#allocation3], 40
    %764 = vst.msk [vmem:[%s763] sm:$0xff] %vm432, %v761
    %s765 = scalar_lea.vmem [#allocation3], 48
    %766 = vst.msk [vmem:[%s765] sm:$0xff] %vm435, %v761
    %s767 = smul.u32 4, 2
    %s768 = smul.addr %s767, 8
    %s769 = scalar_lea.vmem [#allocation2], %s768
    %v770 = vld [vmem:[%s769] sm:$0xff]
    %v771 = vld [vmem:[%s769 + $0x8] sm:$0xff]
    %v772 = vsel %vm84, %v761, 0
    %774 = vmatprep.subr.mxu0 0.0
    %775 = vmatpush1.msra.mxu0 0.0
    %776 = vmatprep.subr.mxu0 0.0
    %777 = vmatpush1.msra.mxu0 0.0
    %778 = vmatprep.subr.mxu0 0.0
    %779 = vmatpush1.msra.mxu0 0.0
    %780 = vmatprep.subr.mxu0 0.0
    %781 = vmatpush1.msra.mxu0 0.0
    %782 = vmatprep.subr.mxu0 0.0
    %783 = vmatpush1.msra.mxu0 0.0
    %784 = vmatprep.subr.mxu0 0.0
    %785 = vmatpush1.msra.mxu0 0.0
    %786 = vmatprep.subr.mxu0 0.0
    %787 = vmatpush1.msra.mxu0 0.0
    %788 = vmatprep.subr.mxu0 0.0
    %789 = vmatpush1.msra.mxu0 0.0
    %790 = vmatprep.subr.mxu0 %v323
    %791 = vmatpush1.msra.mxu0 %v322
    %792 = vmatprep.subr.mxu0 %v321
    %793 = vmatpush1.msra.mxu0 %v320
    %794 = vmatprep.subr.mxu0 %v319
    %795 = vmatpush1.msra.mxu0 %v318
    %796 = vmatprep.subr.mxu0 %v317
    %797 = vmatpush1.msra.mxu0 %v316
    %798 = vmatprep.subr.mxu0 %v315
    %799 = vmatpush1.msra.mxu0 %v314
    %800 = vmatprep.subr.mxu0 %v313
    %801 = vmatpush1.msra.mxu0 %v312
    %802 = vmatprep.subr.mxu0 %v311
    %803 = vmatpush1.msra.mxu0 %v310
    %804 = vmatprep.subr.mxu0 %v309
    %805 = vmatpush1.msra.mxu0 %v308
    %806 = vmatprep.subr.mxu0 0.0
    %807 = vmatpush2.msra.mxu0 0.0
    %808 = vmatprep.subr.mxu0 0.0
    %809 = vmatpush2.msra.mxu0 0.0
    %810 = vmatprep.subr.mxu0 0.0
    %811 = vmatpush2.msra.mxu0 0.0
    %812 = vmatprep.subr.mxu0 0.0
    %813 = vmatpush2.msra.mxu0 0.0
    %814 = vmatprep.subr.mxu0 0.0
    %815 = vmatpush2.msra.mxu0 0.0
    %816 = vmatprep.subr.mxu0 0.0
    %817 = vmatpush2.msra.mxu0 0.0
    %818 = vmatprep.subr.mxu0 0.0
    %819 = vmatpush2.msra.mxu0 0.0
    %820 = vmatprep.subr.mxu0 0.0
    %821 = vmatpush2.msra.mxu0 0.0
    %822 = vmatprep.subr.mxu0 0.0
    %823 = vmatpush2.msra.mxu0 0.0
    %824 = vmatprep.subr.mxu0 0.0
    %825 = vmatpush2.msra.mxu0 0.0
    %826 = vmatprep.subr.mxu0 0.0
    %827 = vmatpush2.msra.mxu0 0.0
    %828 = vmatprep.subr.mxu0 0.0
    %829 = vmatpush2.msra.mxu0 0.0
    %830 = vmatprep.subr.mxu0 0.0
    %831 = vmatpush2.msra.mxu0 0.0
    %832 = vmatprep.subr.mxu0 0.0
    %833 = vmatpush2.msra.mxu0 0.0
    %834 = vmatprep.subr.mxu0 0.0
    %835 = vmatpush2.msra.mxu0 0.0
    %836 = vmatprep.subr.mxu0 0.0
    %837 = vmatpush2.msra.mxu0 0.0
    %838 = vmatprep.mubr.f32.mxu0 0.0
    %839 = vmatmul.mubr.f32.gmra.mxu0 %v772
    %v840 = vpop.f32.mrf.mxu0
    %v841 = vadd.f32 0.0, %v840
    %v842 = vpop.f32.mrf.mxu0
    %v843 = vadd.f32 0.0, %v842
    %844 = vdwg.mxu0
    %v845 = vadd.f32 %v770, %v841
    %v846 = vadd.f32 %v771, %v843
    %v847 = vxor.u32 %v845, 2147483648
    %v848 = vmul.f32 %v847, 1.442695
    %v849 = vpow.pop %v848
    %v850 = vadd.f32 %v849, 1.0
    %v851 = vrcp.pop %v850
    %v852 = vmul.f32 1.0, %v851
    %v853 = vtanh.pop %v846
    %v854 = vxor.u32 %v846, 2147483648
    %v855 = vmul.f32 %v854, 1.442695
    %v856 = vpow.pop %v855
    %v857 = vadd.f32 %v856, 1.0
    %v858 = vrcp.pop %v857
    %v859 = vmul.f32 1.0, %v858
    %v860 = vmul.f32 %v852, %v756
    %v861 = vmul.f32 %v852, %v853
    %863 = vrot.lane.b32.xlu0 %v861, 64
    %v864 = vpop.permute.xlu0 %863
    %v866 = vadd.f32 %v860, %v864
    %v867 = vtanh.pop %v866
    %v868 = vmul.f32 %v859, %v867
    %870 = vrot.lane.b32.xlu0 %v868, 64
    %v871 = vpop.permute.xlu0 %870
    %873 = vst.msk [vmem:[%s765] sm:$0xff] %vm432, %v871
    %874 = vst.msk [vmem:[%s763] sm:$0xff] %vm435, %v871
    %s875 = smul.u32 5, 2
    %s876 = smul.addr %s875, 8
    %s877 = scalar_lea.vmem [#allocation2], %s876
    %v878 = vld [vmem:[%s877] sm:$0xff]
    %v879 = vld [vmem:[%s877 + $0x8] sm:$0xff]
    %v880 = vsel %vm84, %v871, 0
    %882 = vmatprep.subr.mxu0 0.0
    %883 = vmatpush1.msra.mxu0 0.0
    %884 = vmatprep.subr.mxu0 0.0
    %885 = vmatpush1.msra.mxu0 0.0
    %886 = vmatprep.subr.mxu0 0.0
    %887 = vmatpush1.msra.mxu0 0.0
    %888 = vmatprep.subr.mxu0 0.0
    %889 = vmatpush1.msra.mxu0 0.0
    %890 = vmatprep.subr.mxu0 0.0
    %891 = vmatpush1.msra.mxu0 0.0
    %892 = vmatprep.subr.mxu0 0.0
    %893 = vmatpush1.msra.mxu0 0.0
    %894 = vmatprep.subr.mxu0 0.0
    %895 = vmatpush1.msra.mxu0 0.0
    %896 = vmatprep.subr.mxu0 0.0
    %897 = vmatpush1.msra.mxu0 0.0
    %898 = vmatprep.subr.mxu0 %v323
    %899 = vmatpush1.msra.mxu0 %v322
    %900 = vmatprep.subr.mxu0 %v321
    %901 = vmatpush1.msra.mxu0 %v320
    %902 = vmatprep.subr.mxu0 %v319
    %903 = vmatpush1.msra.mxu0 %v318
    %904 = vmatprep.subr.mxu0 %v317
    %905 = vmatpush1.msra.mxu0 %v316
    %906 = vmatprep.subr.mxu0 %v315
    %907 = vmatpush1.msra.mxu0 %v314
    %908 = vmatprep.subr.mxu0 %v313
    %909 = vmatpush1.msra.mxu0 %v312
    %910 = vmatprep.subr.mxu0 %v311
    %911 = vmatpush1.msra.mxu0 %v310
    %912 = vmatprep.subr.mxu0 %v309
    %913 = vmatpush1.msra.mxu0 %v308
    %914 = vmatprep.subr.mxu0 0.0
    %915 = vmatpush2.msra.mxu0 0.0
    %916 = vmatprep.subr.mxu0 0.0
    %917 = vmatpush2.msra.mxu0 0.0
    %918 = vmatprep.subr.mxu0 0.0
    %919 = vmatpush2.msra.mxu0 0.0
    %920 = vmatprep.subr.mxu0 0.0
    %921 = vmatpush2.msra.mxu0 0.0
    %922 = vmatprep.subr.mxu0 0.0
    %923 = vmatpush2.msra.mxu0 0.0
    %924 = vmatprep.subr.mxu0 0.0
    %925 = vmatpush2.msra.mxu0 0.0
    %926 = vmatprep.subr.mxu0 0.0
    %927 = vmatpush2.msra.mxu0 0.0
    %928 = vmatprep.subr.mxu0 0.0
    %929 = vmatpush2.msra.mxu0 0.0
    %930 = vmatprep.subr.mxu0 0.0
    %931 = vmatpush2.msra.mxu0 0.0
    %932 = vmatprep.subr.mxu0 0.0
    %933 = vmatpush2.msra.mxu0 0.0
    %934 = vmatprep.subr.mxu0 0.0
    %935 = vmatpush2.msra.mxu0 0.0
    %936 = vmatprep.subr.mxu0 0.0
    %937 = vmatpush2.msra.mxu0 0.0
    %938 = vmatprep.subr.mxu0 0.0
    %939 = vmatpush2.msra.mxu0 0.0
    %940 = vmatprep.subr.mxu0 0.0
    %941 = vmatpush2.msra.mxu0 0.0
    %942 = vmatprep.subr.mxu0 0.0
    %943 = vmatpush2.msra.mxu0 0.0
    %944 = vmatprep.subr.mxu0 0.0
    %945 = vmatpush2.msra.mxu0 0.0
    %946 = vmatprep.mubr.f32.mxu0 0.0
    %947 = vmatmul.mubr.f32.gmra.mxu0 %v880
    %v948 = vpop.f32.mrf.mxu0
    %v949 = vadd.f32 0.0, %v948
    %v950 = vpop.f32.mrf.mxu0
    %v951 = vadd.f32 0.0, %v950
    %952 = vdwg.mxu0
    %v953 = vadd.f32 %v878, %v949
    %v954 = vadd.f32 %v879, %v951
    %v955 = vxor.u32 %v953, 2147483648
    %v956 = vmul.f32 %v955, 1.442695
    %v957 = vpow.pop %v956
    %v958 = vadd.f32 %v957, 1.0
    %v959 = vrcp.pop %v958
    %v960 = vmul.f32 1.0, %v959
    %v961 = vtanh.pop %v954
    %v962 = vxor.u32 %v954, 2147483648
    %v963 = vmul.f32 %v962, 1.442695
    %v964 = vpow.pop %v963
    %v965 = vadd.f32 %v964, 1.0
    %v966 = vrcp.pop %v965
    %v967 = vmul.f32 1.0, %v966
    %v968 = vmul.f32 %v960, %v866
    %v969 = vmul.f32 %v960, %v961
    %971 = vrot.lane.b32.xlu0 %v969, 64
    %v972 = vpop.permute.xlu0 %971
    %v974 = vadd.f32 %v968, %v972
    %v975 = vtanh.pop %v974
    %v976 = vmul.f32 %v967, %v975
    %978 = vrot.lane.b32.xlu0 %v976, 64
    %v979 = vpop.permute.xlu0 %978
    %981 = vst.msk [vmem:[%s655] sm:$0xff] %vm432, %v979
    %982 = vst.msk [vmem:[%s653] sm:$0xff] %vm435, %v979
    %s983 = smul.u32 6, 2
    %s984 = smul.addr %s983, 8
    %s985 = scalar_lea.vmem [#allocation2], %s984
    %v986 = vld [vmem:[%s985] sm:$0xff]
    %v987 = vld [vmem:[%s985 + $0x8] sm:$0xff]
    %v988 = vsel %vm84, %v979, 0
    %990 = vmatprep.subr.mxu0 0.0
    %991 = vmatpush1.msra.mxu0 0.0
    %992 = vmatprep.subr.mxu0 0.0
    %993 = vmatpush1.msra.mxu0 0.0
    %994 = vmatprep.subr.mxu0 0.0
    %995 = vmatpush1.msra.mxu0 0.0
    %996 = vmatprep.subr.mxu0 0.0
    %997 = vmatpush1.msra.mxu0 0.0
    %998 = vmatprep.subr.mxu0 0.0
    %999 = vmatpush1.msra.mxu0 0.0
    %1000 = vmatprep.subr.mxu0 0.0
    %1001 = vmatpush1.msra.mxu0 0.0
    %1002 = vmatprep.subr.mxu0 0.0
    %1003 = vmatpush1.msra.mxu0 0.0
    %1004 = vmatprep.subr.mxu0 0.0
    %1005 = vmatpush1.msra.mxu0 0.0
    %1006 = vmatprep.subr.mxu0 %v323
    %1007 = vmatpush1.msra.mxu0 %v322
    %1008 = vmatprep.subr.mxu0 %v321
    %1009 = vmatpush1.msra.mxu0 %v320
    %1010 = vmatprep.subr.mxu0 %v319
    %1011 = vmatpush1.msra.mxu0 %v318
    %1012 = vmatprep.subr.mxu0 %v317
    %1013 = vmatpush1.msra.mxu0 %v316
    %1014 = vmatprep.subr.mxu0 %v315
    %1015 = vmatpush1.msra.mxu0 %v314
    %1016 = vmatprep.subr.mxu0 %v313
    %1017 = vmatpush1.msra.mxu0 %v312
    %1018 = vmatprep.subr.mxu0 %v311
    %1019 = vmatpush1.msra.mxu0 %v310
    %1020 = vmatprep.subr.mxu0 %v309
    %1021 = vmatpush1.msra.mxu0 %v308
    %1022 = vmatprep.subr.mxu0 0.0
    %1023 = vmatpush2.msra.mxu0 0.0
    %1024 = vmatprep.subr.mxu0 0.0
    %1025 = vmatpush2.msra.mxu0 0.0
    %1026 = vmatprep.subr.mxu0 0.0
    %1027 = vmatpush2.msra.mxu0 0.0
    %1028 = vmatprep.subr.mxu0 0.0
    %1029 = vmatpush2.msra.mxu0 0.0
    %1030 = vmatprep.subr.mxu0 0.0
    %1031 = vmatpush2.msra.mxu0 0.0
    %1032 = vmatprep.subr.mxu0 0.0
    %1033 = vmatpush2.msra.mxu0 0.0
    %1034 = vmatprep.subr.mxu0 0.0
    %1035 = vmatpush2.msra.mxu0 0.0
    %1036 = vmatprep.subr.mxu0 0.0
    %1037 = vmatpush2.msra.mxu0 0.0
    %1038 = vmatprep.subr.mxu0 0.0
    %1039 = vmatpush2.msra.mxu0 0.0
    %1040 = vmatprep.subr.mxu0 0.0
    %1041 = vmatpush2.msra.mxu0 0.0
    %1042 = vmatprep.subr.mxu0 0.0
    %1043 = vmatpush2.msra.mxu0 0.0
    %1044 = vmatprep.subr.mxu0 0.0
    %1045 = vmatpush2.msra.mxu0 0.0
    %1046 = vmatprep.subr.mxu0 0.0
    %1047 = vmatpush2.msra.mxu0 0.0
    %1048 = vmatprep.subr.mxu0 0.0
    %1049 = vmatpush2.msra.mxu0 0.0
    %1050 = vmatprep.subr.mxu0 0.0
    %1051 = vmatpush2.msra.mxu0 0.0
    %1052 = vmatprep.subr.mxu0 0.0
    %1053 = vmatpush2.msra.mxu0 0.0
    %1054 = vmatprep.mubr.f32.mxu0 0.0
    %1055 = vmatmul.mubr.f32.gmra.mxu0 %v988
    %v1056 = vpop.f32.mrf.mxu0
    %v1057 = vadd.f32 0.0, %v1056
    %v1058 = vpop.f32.mrf.mxu0
    %v1059 = vadd.f32 0.0, %v1058
    %1060 = vdwg.mxu0
    %v1061 = vadd.f32 %v986, %v1057
    %v1062 = vadd.f32 %v987, %v1059
    %v1063 = vxor.u32 %v1061, 2147483648
    %v1064 = vmul.f32 %v1063, 1.442695
    %v1065 = vpow.pop %v1064
    %v1066 = vadd.f32 %v1065, 1.0
    %v1067 = vrcp.pop %v1066
    %v1068 = vmul.f32 1.0, %v1067
    %v1069 = vtanh.pop %v1062
    %v1070 = vxor.u32 %v1062, 2147483648
    %v1071 = vmul.f32 %v1070, 1.442695
    %v1072 = vpow.pop %v1071
    %v1073 = vadd.f32 %v1072, 1.0
    %v1074 = vrcp.pop %v1073
    %v1075 = vmul.f32 1.0, %v1074
    %v1076 = vmul.f32 %v1068, %v974
    %v1077 = vmul.f32 %v1068, %v1069
    %1079 = vrot.lane.b32.xlu0 %v1077, 64
    %v1080 = vpop.permute.xlu0 %1079
    %v1082 = vadd.f32 %v1076, %v1080
    %v1083 = vtanh.pop %v1082
    %v1084 = vmul.f32 %v1075, %v1083
    %1086 = vrot.lane.b32.xlu0 %v1084, 64
    %v1087 = vpop.permute.xlu0 %1086
    %1089 = vst.msk [vmem:[%s545] sm:$0xff] %vm432, %v1087
    %1090 = vst.msk [vmem:[%s543] sm:$0xff] %vm435, %v1087
    %s1091 = smul.u32 7, 2
    %s1092 = smul.addr %s1091, 8
    %s1093 = scalar_lea.vmem [#allocation2], %s1092
    %v1094 = vld [vmem:[%s1093] sm:$0xff]
    %v1095 = vld [vmem:[%s1093 + $0x8] sm:$0xff]
    %v1096 = vsel %vm84, %v1087, 0
    %1098 = vmatprep.subr.mxu0 0.0
    %1099 = vmatpush1.msra.mxu0 0.0
    %1100 = vmatprep.subr.mxu0 0.0
    %1101 = vmatpush1.msra.mxu0 0.0
    %1102 = vmatprep.subr.mxu0 0.0
    %1103 = vmatpush1.msra.mxu0 0.0
    %1104 = vmatprep.subr.mxu0 0.0
    %1105 = vmatpush1.msra.mxu0 0.0
    %1106 = vmatprep.subr.mxu0 0.0
    %1107 = vmatpush1.msra.mxu0 0.0
    %1108 = vmatprep.subr.mxu0 0.0
    %1109 = vmatpush1.msra.mxu0 0.0
    %1110 = vmatprep.subr.mxu0 0.0
    %1111 = vmatpush1.msra.mxu0 0.0
    %1112 = vmatprep.subr.mxu0 0.0
    %1113 = vmatpush1.msra.mxu0 0.0
    %1114 = vmatprep.subr.mxu0 %v323
    %1115 = vmatpush1.msra.mxu0 %v322
    %1116 = vmatprep.subr.mxu0 %v321
    %1117 = vmatpush1.msra.mxu0 %v320
    %1118 = vmatprep.subr.mxu0 %v319
    %1119 = vmatpush1.msra.mxu0 %v318
    %1120 = vmatprep.subr.mxu0 %v317
    %1121 = vmatpush1.msra.mxu0 %v316
    %1122 = vmatprep.subr.mxu0 %v315
    %1123 = vmatpush1.msra.mxu0 %v314
    %1124 = vmatprep.subr.mxu0 %v313
    %1125 = vmatpush1.msra.mxu0 %v312
    %1126 = vmatprep.subr.mxu0 %v311
    %1127 = vmatpush1.msra.mxu0 %v310
    %1128 = vmatprep.subr.mxu0 %v309
    %1129 = vmatpush1.msra.mxu0 %v308
    %1130 = vmatprep.subr.mxu0 0.0
    %1131 = vmatpush2.msra.mxu0 0.0
    %1132 = vmatprep.subr.mxu0 0.0
    %1133 = vmatpush2.msra.mxu0 0.0
    %1134 = vmatprep.subr.mxu0 0.0
    %1135 = vmatpush2.msra.mxu0 0.0
    %1136 = vmatprep.subr.mxu0 0.0
    %1137 = vmatpush2.msra.mxu0 0.0
    %1138 = vmatprep.subr.mxu0 0.0
    %1139 = vmatpush2.msra.mxu0 0.0
    %1140 = vmatprep.subr.mxu0 0.0
    %1141 = vmatpush2.msra.mxu0 0.0
    %1142 = vmatprep.subr.mxu0 0.0
    %1143 = vmatpush2.msra.mxu0 0.0
    %1144 = vmatprep.subr.mxu0 0.0
    %1145 = vmatpush2.msra.mxu0 0.0
    %1146 = vmatprep.subr.mxu0 0.0
    %1147 = vmatpush2.msra.mxu0 0.0
    %1148 = vmatprep.subr.mxu0 0.0
    %1149 = vmatpush2.msra.mxu0 0.0
    %1150 = vmatprep.subr.mxu0 0.0
    %1151 = vmatpush2.msra.mxu0 0.0
    %1152 = vmatprep.subr.mxu0 0.0
    %1153 = vmatpush2.msra.mxu0 0.0
    %1154 = vmatprep.subr.mxu0 0.0
    %1155 = vmatpush2.msra.mxu0 0.0
    %1156 = vmatprep.subr.mxu0 0.0
    %1157 = vmatpush2.msra.mxu0 0.0
    %1158 = vmatprep.subr.mxu0 0.0
    %1159 = vmatpush2.msra.mxu0 0.0
    %1160 = vmatprep.subr.mxu0 0.0
    %1161 = vmatpush2.msra.mxu0 0.0
    %1162 = vmatprep.mubr.f32.mxu0 0.0
    %1163 = vmatmul.mubr.f32.gmra.mxu0 %v1096
    %v1164 = vpop.f32.mrf.mxu0
    %v1165 = vadd.f32 0.0, %v1164
    %v1166 = vpop.f32.mrf.mxu0
    %v1167 = vadd.f32 0.0, %v1166
    %1168 = vdwg.mxu0
    %v1169 = vadd.f32 %v1094, %v1165
    %v1170 = vadd.f32 %v1095, %v1167
    %v1171 = vxor.u32 %v1169, 2147483648
    %v1172 = vmul.f32 %v1171, 1.442695
    %v1173 = vpow.pop %v1172
    %v1174 = vadd.f32 %v1173, 1.0
    %v1175 = vrcp.pop %v1174
    %v1176 = vmul.f32 1.0, %v1175
    %v1177 = vtanh.pop %v1170
    %v1178 = vxor.u32 %v1170, 2147483648
    %v1179 = vmul.f32 %v1178, 1.442695
    %v1180 = vpow.pop %v1179
    %v1181 = vadd.f32 %v1180, 1.0
    %v1182 = vrcp.pop %v1181
    %v1183 = vmul.f32 1.0, %v1182
    %v1184 = vmul.f32 %v1176, %v1082
    %v1185 = vmul.f32 %v1176, %v1177
    %1187 = vrot.lane.b32.xlu0 %v1185, 64
    %v1188 = vpop.permute.xlu0 %1187
    %v1190 = vadd.f32 %v1184, %v1188
    %v1191 = vtanh.pop %v1190
    %v1192 = vmul.f32 %v1183, %v1191
    %1194 = vrot.lane.b32.xlu0 %v1192, 64
    %v1195 = vpop.permute.xlu0 %1194
    %1197 = vst.msk [vmem:[%s434] sm:$0xff] %vm432, %v1195
    %1198 = vst.msk [vmem:[%s431] sm:$0xff] %vm435, %v1195
    %v1199 = vld [vmem:[#allocation11] sm:$0xff]
    %v1200 = vld [vmem:[#allocation11 + $0x8] sm:$0xff]
    %v1201 = vld [vmem:[#allocation11 + $0x10] sm:$0xff]
    %v1202 = vld [vmem:[#allocation11 + $0x18] sm:$0xff]
    %v1203 = vld [vmem:[#allocation11 + $0x20] sm:$0xff]
    %v1204 = vld [vmem:[#allocation11 + $0x28] sm:$0xff]
    %v1205 = vld [vmem:[#allocation11 + $0x30] sm:$0xff]
    %v1206 = vld [vmem:[#allocation11 + $0x38] sm:$0xff]
    %v1207 = vld [vmem:[#allocation11 + $0x40] sm:$0xff]
    %v1208 = vld [vmem:[#allocation11 + $0x48] sm:$0xff]
    %v1209 = vld [vmem:[#allocation11 + $0x50] sm:$0xff]
    %v1210 = vld [vmem:[#allocation11 + $0x58] sm:$0xff]
    %v1211 = vld [vmem:[#allocation11 + $0x60] sm:$0xff]
    %v1212 = vld [vmem:[#allocation11 + $0x68] sm:$0xff]
    %v1213 = vld [vmem:[#allocation11 + $0x70] sm:$0xff]
    %v1214 = vld [vmem:[#allocation11 + $0x78] sm:$0xff]
    %v1215 = vld [vmem:[#allocation11 + $0x80] sm:$0xff]
    %v1216 = vld [vmem:[#allocation11 + $0x88] sm:$0xff]
    %v1217 = vld [vmem:[#allocation11 + $0x90] sm:$0xff]
    %v1218 = vld [vmem:[#allocation11 + $0x98] sm:$0xff]
    %v1219 = vld [vmem:[#allocation11 + $0xa0] sm:$0xff]
    %v1220 = vld [vmem:[#allocation11 + $0xa8] sm:$0xff]
    %v1221 = vld [vmem:[#allocation11 + $0xb0] sm:$0xff]
    %v1222 = vld [vmem:[#allocation11 + $0xb8] sm:$0xff]
    %v1223 = vld [vmem:[#allocation11 + $0xc0] sm:$0xff]
    %v1224 = vld [vmem:[#allocation11 + $0xc8] sm:$0xff]
    %v1225 = vld [vmem:[#allocation11 + $0xd0] sm:$0xff]
    %v1226 = vld [vmem:[#allocation11 + $0xd8] sm:$0xff]
    %v1227 = vld [vmem:[#allocation11 + $0xe0] sm:$0xff]
    %v1228 = vld [vmem:[#allocation11 + $0xe8] sm:$0xff]
    %v1229 = vld [vmem:[#allocation11 + $0xf0] sm:$0xff]
    %v1230 = vld [vmem:[#allocation11 + $0xf8] sm:$0xff]
    %v1231 = vld [vmem:[#allocation11 + $0x100] sm:$0xff]
    %v1232 = vld [vmem:[#allocation11 + $0x108] sm:$0xff]
    %v1233 = vld [vmem:[#allocation11 + $0x110] sm:$0xff]
    %v1234 = vld [vmem:[#allocation11 + $0x118] sm:$0xff]
    %v1235 = vld [vmem:[#allocation11 + $0x120] sm:$0xff]
    %v1236 = vld [vmem:[#allocation11 + $0x128] sm:$0xff]
    %v1237 = vld [vmem:[#allocation11 + $0x130] sm:$0xff]
    %v1238 = vld [vmem:[#allocation11 + $0x138] sm:$0xff]
    %v1239 = vld [vmem:[#allocation11 + $0x140] sm:$0xff]
    %v1240 = vld [vmem:[#allocation11 + $0x148] sm:$0xff]
    %v1241 = vld [vmem:[#allocation11 + $0x150] sm:$0xff]
    %v1242 = vld [vmem:[#allocation11 + $0x158] sm:$0xff]
    %v1243 = vld [vmem:[#allocation11 + $0x160] sm:$0xff]
    %v1244 = vld [vmem:[#allocation11 + $0x168] sm:$0xff]
    %v1245 = vld [vmem:[#allocation11 + $0x170] sm:$0xff]
    %v1246 = vld [vmem:[#allocation11 + $0x178] sm:$0xff]
    %v1247 = vld [vmem:[#allocation11 + $0x180] sm:$0xff]
    %v1248 = vld [vmem:[#allocation11 + $0x188] sm:$0xff]
    %v1249 = vld [vmem:[#allocation11 + $0x190] sm:$0xff]
    %v1250 = vld [vmem:[#allocation11 + $0x198] sm:$0xff]
    %v1251 = vld [vmem:[#allocation11 + $0x1a0] sm:$0xff]
    %v1252 = vld [vmem:[#allocation11 + $0x1a8] sm:$0xff]
    %v1253 = vld [vmem:[#allocation11 + $0x1b0] sm:$0xff]
    %v1254 = vld [vmem:[#allocation11 + $0x1b8] sm:$0xff]
    %v1255 = vld [vmem:[#allocation11 + $0x1c0] sm:$0xff]
    %v1256 = vld [vmem:[#allocation11 + $0x1c8] sm:$0xff]
    %v1257 = vld [vmem:[#allocation11 + $0x1d0] sm:$0xff]
    %v1258 = vld [vmem:[#allocation11 + $0x1d8] sm:$0xff]
    %v1259 = vld [vmem:[#allocation11 + $0x1e0] sm:$0xff]
    %v1260 = vld [vmem:[#allocation11 + $0x1e8] sm:$0xff]
    %v1261 = vld [vmem:[#allocation11 + $0x1f0] sm:$0xff]
    %v1262 = vld [vmem:[#allocation11 + $0x1f8] sm:$0xff]
    %v1263 = vld [vmem:[#allocation11 + $0x200] sm:$0xff]
    %v1264 = vld [vmem:[#allocation11 + $0x208] sm:$0xff]
    %v1265 = vld [vmem:[#allocation11 + $0x210] sm:$0xff]
    %v1266 = vld [vmem:[#allocation11 + $0x218] sm:$0xff]
    %v1267 = vld [vmem:[#allocation11 + $0x220] sm:$0xff]
    %v1268 = vld [vmem:[#allocation11 + $0x228] sm:$0xff]
    %v1269 = vld [vmem:[#allocation11 + $0x230] sm:$0xff]
    %v1270 = vld [vmem:[#allocation11 + $0x238] sm:$0xff]
    %v1271 = vld [vmem:[#allocation11 + $0x240] sm:$0xff]
    %v1272 = vld [vmem:[#allocation11 + $0x248] sm:$0xff]
    %v1273 = vld [vmem:[#allocation11 + $0x250] sm:$0xff]
    %v1274 = vld [vmem:[#allocation11 + $0x258] sm:$0xff]
    %v1275 = vld [vmem:[#allocation11 + $0x260] sm:$0xff]
    %v1276 = vld [vmem:[#allocation11 + $0x268] sm:$0xff]
    %v1277 = vld [vmem:[#allocation11 + $0x270] sm:$0xff]
    %v1278 = vld [vmem:[#allocation11 + $0x278] sm:$0xff]
    %v1279 = vld [vmem:[#allocation3] sm:$0xff]
    %v1280 = vld [vmem:[#allocation3 + $0x8] sm:$0xff]
    %v1281 = vld [vmem:[#allocation3 + $0x10] sm:$0xff]
    %v1282 = vld [vmem:[#allocation3 + $0x18] sm:$0xff]
    %v1283 = vld [vmem:[#allocation3 + $0x20] sm:$0xff]
    %v1284 = vld [vmem:[#allocation3 + $0x28] sm:$0xff]
    %v1285 = vld [vmem:[#allocation3 + $0x30] sm:$0xff]
    %v1286 = vld [vmem:[#allocation3 + $0x38] sm:$0xff]
    %v1287 = vld [vmem:[%s5] sm:$0x3]
    %v1289 = vlaneseq
    %v1290 = vshrl.u32 %v1289, 7
    %v1291 = vsub.s32 0, %v1290
    %v1292 = vrot.slane %v1287, %v1291
    %v1293 = vlaneseq
    %v1294 = vshrl.u32 %v1293, 7
    %v1295 = vsub.s32 1, %v1294
    %v1296 = vrot.slane %v1287, %v1295
    %v1300 = vsel %vm84, %v1279, 0
    %v1303 = vsel %vm84, %v1280, 0
    %v1306 = vsel %vm84, %v1281, 0
    %v1309 = vsel %vm84, %v1282, 0
    %v1312 = vsel %vm84, %v1283, 0
    %v1315 = vsel %vm84, %v1284, 0
    %v1318 = vsel %vm84, %v1285, 0
    %v1321 = vsel %vm84, %v1286, 0
    %1323 = vmatprep.subr.mxu0 0.0
    %1324 = vmatpush1.msra.mxu0 0.0
    %1325 = vmatprep.subr.mxu0 0.0
    %1326 = vmatpush1.msra.mxu0 0.0
    %1327 = vmatprep.subr.mxu0 0.0
    %1328 = vmatpush1.msra.mxu0 0.0
    %1329 = vmatprep.subr.mxu0 0.0
    %1330 = vmatpush1.msra.mxu0 0.0
    %1331 = vmatprep.subr.mxu0 0.0
    %1332 = vmatpush1.msra.mxu0 0.0
    %1333 = vmatprep.subr.mxu0 0.0
    %1334 = vmatpush1.msra.mxu0 0.0
    %1335 = vmatprep.subr.mxu0 0.0
    %1336 = vmatpush1.msra.mxu0 0.0
    %1337 = vmatprep.subr.mxu0 0.0
    %1338 = vmatpush1.msra.mxu0 0.0
    %1339 = vmatprep.subr.mxu0 %v1214
    %1340 = vmatpush1.msra.mxu0 %v1213
    %1341 = vmatprep.subr.mxu0 %v1212
    %1342 = vmatpush1.msra.mxu0 %v1211
    %1343 = vmatprep.subr.mxu0 %v1210
    %1344 = vmatpush1.msra.mxu0 %v1209
    %1345 = vmatprep.subr.mxu0 %v1208
    %1346 = vmatpush1.msra.mxu0 %v1207
    %1347 = vmatprep.subr.mxu0 %v1206
    %1348 = vmatpush1.msra.mxu0 %v1205
    %1349 = vmatprep.subr.mxu0 %v1204
    %1350 = vmatpush1.msra.mxu0 %v1203
    %1351 = vmatprep.subr.mxu0 %v1202
    %1352 = vmatpush1.msra.mxu0 %v1201
    %1353 = vmatprep.subr.mxu0 %v1200
    %1354 = vmatpush1.msra.mxu0 %v1199
    %1355 = vmatprep.subr.mxu0 0.0
    %1356 = vmatpush2.msra.mxu0 0.0
    %1357 = vmatprep.subr.mxu0 0.0
    %1358 = vmatpush2.msra.mxu0 0.0
    %1359 = vmatprep.subr.mxu0 0.0
    %1360 = vmatpush2.msra.mxu0 0.0
    %1361 = vmatprep.subr.mxu0 0.0
    %1362 = vmatpush2.msra.mxu0 0.0
    %1363 = vmatprep.subr.mxu0 0.0
    %1364 = vmatpush2.msra.mxu0 0.0
    %1365 = vmatprep.subr.mxu0 0.0
    %1366 = vmatpush2.msra.mxu0 0.0
    %1367 = vmatprep.subr.mxu0 0.0
    %1368 = vmatpush2.msra.mxu0 0.0
    %1369 = vmatprep.subr.mxu0 0.0
    %1370 = vmatpush2.msra.mxu0 0.0
    %1371 = vmatprep.subr.mxu0 0.0
    %1372 = vmatpush2.msra.mxu0 0.0
    %1373 = vmatprep.subr.mxu0 0.0
    %1374 = vmatpush2.msra.mxu0 0.0
    %1375 = vmatprep.subr.mxu0 0.0
    %1376 = vmatpush2.msra.mxu0 0.0
    %1377 = vmatprep.subr.mxu0 0.0
    %1378 = vmatpush2.msra.mxu0 0.0
    %1379 = vmatprep.subr.mxu0 0.0
    %1380 = vmatpush2.msra.mxu0 0.0
    %1381 = vmatprep.subr.mxu0 0.0
    %1382 = vmatpush2.msra.mxu0 0.0
    %1383 = vmatprep.subr.mxu0 0.0
    %1384 = vmatpush2.msra.mxu0 0.0
    %1385 = vmatprep.subr.mxu0 0.0
    %1386 = vmatpush2.msra.mxu0 0.0
    %1387 = vmatprep.mubr.f32.mxu0 0.0
    %1388 = vmatmul.mubr.f32.gmra.mxu0 %v1300
    %v1389 = vpop.f32.mrf.mxu0
    %v1390 = vadd.f32 %v1292, %v1389
    %v1391 = vpop.f32.mrf.mxu0
    %v1392 = vadd.f32 %v1296, %v1391
    %1393 = vmatprep.mubr.f32.mxu0 0.0
    %1394 = vmatmul.mubr.f32.gmra.mxu0 %v1303
    %v1395 = vpop.f32.mrf.mxu0
    %v1396 = vadd.f32 %v1292, %v1395
    %v1397 = vpop.f32.mrf.mxu0
    %v1398 = vadd.f32 %v1296, %v1397
    %1399 = vmatprep.mubr.f32.mxu0 0.0
    %1400 = vmatmul.mubr.f32.gmra.mxu0 %v1306
    %v1401 = vpop.f32.mrf.mxu0
    %v1402 = vadd.f32 %v1292, %v1401
    %v1403 = vpop.f32.mrf.mxu0
    %v1404 = vadd.f32 %v1296, %v1403
    %1405 = vmatprep.mubr.f32.mxu0 0.0
    %1406 = vmatmul.mubr.f32.gmra.mxu0 %v1309
    %v1407 = vpop.f32.mrf.mxu0
    %v1408 = vadd.f32 %v1292, %v1407
    %v1409 = vpop.f32.mrf.mxu0
    %v1410 = vadd.f32 %v1296, %v1409
    %1411 = vmatprep.mubr.f32.mxu0 0.0
    %1412 = vmatmul.mubr.f32.gmra.mxu0 %v1312
    %v1413 = vpop.f32.mrf.mxu0
    %v1414 = vadd.f32 %v1292, %v1413
    %v1415 = vpop.f32.mrf.mxu0
    %v1416 = vadd.f32 %v1296, %v1415
    %1417 = vmatprep.mubr.f32.mxu0 0.0
    %1418 = vmatmul.mubr.f32.gmra.mxu0 %v1315
    %v1419 = vpop.f32.mrf.mxu0
    %v1420 = vadd.f32 %v1292, %v1419
    %v1421 = vpop.f32.mrf.mxu0
    %v1422 = vadd.f32 %v1296, %v1421
    %1423 = vmatprep.mubr.f32.mxu0 0.0
    %1424 = vmatmul.mubr.f32.gmra.mxu0 %v1318
    %v1425 = vpop.f32.mrf.mxu0
    %v1426 = vadd.f32 %v1292, %v1425
    %v1427 = vpop.f32.mrf.mxu0
    %v1428 = vadd.f32 %v1296, %v1427
    %1429 = vmatprep.mubr.f32.mxu0 0.0
    %1430 = vmatmul.mubr.f32.gmra.mxu0 %v1321
    %v1431 = vpop.f32.mrf.mxu0
    %v1432 = vadd.f32 %v1292, %v1431
    %v1433 = vpop.f32.mrf.mxu0
    %v1434 = vadd.f32 %v1296, %v1433
    %1435 = vdwg.mxu0
    %v1436 = vld [vmem:[#allocation3 + $0x8] sm:$0xff]
    %v1437 = vld [vmem:[#allocation3 + $0x10] sm:$0xff]
    %v1438 = vld [vmem:[#allocation3 + $0x18] sm:$0xff]
    %v1439 = vld [vmem:[#allocation3 + $0x20] sm:$0xff]
    %v1440 = vld [vmem:[#allocation3 + $0x28] sm:$0xff]
    %v1441 = vld [vmem:[#allocation3 + $0x30] sm:$0xff]
    %v1442 = vld [vmem:[#allocation3 + $0x38] sm:$0xff]
    %v1443 = vld [vmem:[#allocation3 + $0x40] sm:$0xff]
    %v1445 = vsel %vm84, %v1436, 0
    %v1448 = vsel %vm84, %v1437, 0
    %v1451 = vsel %vm84, %v1438, 0
    %v1454 = vsel %vm84, %v1439, 0
    %v1457 = vsel %vm84, %v1440, 0
    %v1460 = vsel %vm84, %v1441, 0
    %v1463 = vsel %vm84, %v1442, 0
    %v1466 = vsel %vm84, %v1443, 0
    %1468 = vmatprep.subr.mxu0 0.0
    %1469 = vmatpush1.msra.mxu0 0.0
    %1470 = vmatprep.subr.mxu0 0.0
    %1471 = vmatpush1.msra.mxu0 0.0
    %1472 = vmatprep.subr.mxu0 0.0
    %1473 = vmatpush1.msra.mxu0 0.0
    %1474 = vmatprep.subr.mxu0 0.0
    %1475 = vmatpush1.msra.mxu0 0.0
    %1476 = vmatprep.subr.mxu0 0.0
    %1477 = vmatpush1.msra.mxu0 0.0
    %1478 = vmatprep.subr.mxu0 0.0
    %1479 = vmatpush1.msra.mxu0 0.0
    %1480 = vmatprep.subr.mxu0 0.0
    %1481 = vmatpush1.msra.mxu0 0.0
    %1482 = vmatprep.subr.mxu0 0.0
    %1483 = vmatpush1.msra.mxu0 0.0
    %1484 = vmatprep.subr.mxu0 %v1230
    %1485 = vmatpush1.msra.mxu0 %v1229
    %1486 = vmatprep.subr.mxu0 %v1228
    %1487 = vmatpush1.msra.mxu0 %v1227
    %1488 = vmatprep.subr.mxu0 %v1226
    %1489 = vmatpush1.msra.mxu0 %v1225
    %1490 = vmatprep.subr.mxu0 %v1224
    %1491 = vmatpush1.msra.mxu0 %v1223
    %1492 = vmatprep.subr.mxu0 %v1222
    %1493 = vmatpush1.msra.mxu0 %v1221
    %1494 = vmatprep.subr.mxu0 %v1220
    %1495 = vmatpush1.msra.mxu0 %v1219
    %1496 = vmatprep.subr.mxu0 %v1218
    %1497 = vmatpush1.msra.mxu0 %v1217
    %1498 = vmatprep.subr.mxu0 %v1216
    %1499 = vmatpush1.msra.mxu0 %v1215
    %1500 = vmatprep.subr.mxu0 0.0
    %1501 = vmatpush2.msra.mxu0 0.0
    %1502 = vmatprep.subr.mxu0 0.0
    %1503 = vmatpush2.msra.mxu0 0.0
    %1504 = vmatprep.subr.mxu0 0.0
    %1505 = vmatpush2.msra.mxu0 0.0
    %1506 = vmatprep.subr.mxu0 0.0
    %1507 = vmatpush2.msra.mxu0 0.0
    %1508 = vmatprep.subr.mxu0 0.0
    %1509 = vmatpush2.msra.mxu0 0.0
    %1510 = vmatprep.subr.mxu0 0.0
    %1511 = vmatpush2.msra.mxu0 0.0
    %1512 = vmatprep.subr.mxu0 0.0
    %1513 = vmatpush2.msra.mxu0 0.0
    %1514 = vmatprep.subr.mxu0 0.0
    %1515 = vmatpush2.msra.mxu0 0.0
    %1516 = vmatprep.subr.mxu0 0.0
    %1517 = vmatpush2.msra.mxu0 0.0
    %1518 = vmatprep.subr.mxu0 0.0
    %1519 = vmatpush2.msra.mxu0 0.0
    %1520 = vmatprep.subr.mxu0 0.0
    %1521 = vmatpush2.msra.mxu0 0.0
    %1522 = vmatprep.subr.mxu0 0.0
    %1523 = vmatpush2.msra.mxu0 0.0
    %1524 = vmatprep.subr.mxu0 0.0
    %1525 = vmatpush2.msra.mxu0 0.0
    %1526 = vmatprep.subr.mxu0 0.0
    %1527 = vmatpush2.msra.mxu0 0.0
    %1528 = vmatprep.subr.mxu0 0.0
    %1529 = vmatpush2.msra.mxu0 0.0
    %1530 = vmatprep.subr.mxu0 0.0
    %1531 = vmatpush2.msra.mxu0 0.0
    %1532 = vmatprep.mubr.f32.mxu0 0.0
    %1533 = vmatmul.mubr.f32.gmra.mxu0 %v1445
    %v1534 = vpop.f32.mrf.mxu0
    %v1535 = vadd.f32 0.0, %v1534
    %v1536 = vpop.f32.mrf.mxu0
    %v1537 = vadd.f32 0.0, %v1536
    %1538 = vmatprep.mubr.f32.mxu0 0.0
    %1539 = vmatmul.mubr.f32.gmra.mxu0 %v1448
    %v1540 = vpop.f32.mrf.mxu0
    %v1541 = vadd.f32 0.0, %v1540
    %v1542 = vpop.f32.mrf.mxu0
    %v1543 = vadd.f32 0.0, %v1542
    %1544 = vmatprep.mubr.f32.mxu0 0.0
    %1545 = vmatmul.mubr.f32.gmra.mxu0 %v1451
    %v1546 = vpop.f32.mrf.mxu0
    %v1547 = vadd.f32 0.0, %v1546
    %v1548 = vpop.f32.mrf.mxu0
    %v1549 = vadd.f32 0.0, %v1548
    %1550 = vmatprep.mubr.f32.mxu0 0.0
    %1551 = vmatmul.mubr.f32.gmra.mxu0 %v1454
    %v1552 = vpop.f32.mrf.mxu0
    %v1553 = vadd.f32 0.0, %v1552
    %v1554 = vpop.f32.mrf.mxu0
    %v1555 = vadd.f32 0.0, %v1554
    %1556 = vmatprep.mubr.f32.mxu0 0.0
    %1557 = vmatmul.mubr.f32.gmra.mxu0 %v1457
    %v1558 = vpop.f32.mrf.mxu0
    %v1559 = vadd.f32 0.0, %v1558
    %v1560 = vpop.f32.mrf.mxu0
    %v1561 = vadd.f32 0.0, %v1560
    %1562 = vmatprep.mubr.f32.mxu0 0.0
    %1563 = vmatmul.mubr.f32.gmra.mxu0 %v1460
    %v1564 = vpop.f32.mrf.mxu0
    %v1565 = vadd.f32 0.0, %v1564
    %v1566 = vpop.f32.mrf.mxu0
    %v1567 = vadd.f32 0.0, %v1566
    %1568 = vmatprep.mubr.f32.mxu0 0.0
    %1569 = vmatmul.mubr.f32.gmra.mxu0 %v1463
    %v1570 = vpop.f32.mrf.mxu0
    %v1571 = vadd.f32 0.0, %v1570
    %v1572 = vpop.f32.mrf.mxu0
    %v1573 = vadd.f32 0.0, %v1572
    %1574 = vmatprep.mubr.f32.mxu0 0.0
    %1575 = vmatmul.mubr.f32.gmra.mxu0 %v1466
    %v1576 = vpop.f32.mrf.mxu0
    %v1577 = vadd.f32 0.0, %v1576
    %v1578 = vpop.f32.mrf.mxu0
    %v1579 = vadd.f32 0.0, %v1578
    %1580 = vdwg.mxu0
    %v1581 = vadd.f32 %v1390, %v1535
    %v1582 = vadd.f32 %v1392, %v1537
    %v1583 = vadd.f32 %v1396, %v1541
    %v1584 = vadd.f32 %v1398, %v1543
    %v1585 = vadd.f32 %v1402, %v1547
    %v1586 = vadd.f32 %v1404, %v1549
    %v1587 = vadd.f32 %v1408, %v1553
    %v1588 = vadd.f32 %v1410, %v1555
    %v1589 = vadd.f32 %v1414, %v1559
    %v1590 = vadd.f32 %v1416, %v1561
    %v1591 = vadd.f32 %v1420, %v1565
    %v1592 = vadd.f32 %v1422, %v1567
    %v1593 = vadd.f32 %v1426, %v1571
    %v1594 = vadd.f32 %v1428, %v1573
    %v1595 = vadd.f32 %v1432, %v1577
    %v1596 = vadd.f32 %v1434, %v1579
    %v1597 = vld [vmem:[#allocation3 + $0x10] sm:$0xff]
    %v1598 = vld [vmem:[#allocation3 + $0x18] sm:$0xff]
    %v1599 = vld [vmem:[#allocation3 + $0x20] sm:$0xff]
    %v1600 = vld [vmem:[#allocation3 + $0x28] sm:$0xff]
    %v1601 = vld [vmem:[#allocation3 + $0x30] sm:$0xff]
    %v1602 = vld [vmem:[#allocation3 + $0x38] sm:$0xff]
    %v1603 = vld [vmem:[#allocation3 + $0x40] sm:$0xff]
    %v1604 = vld [vmem:[#allocation3 + $0x48] sm:$0xff]
    %v1606 = vsel %vm84, %v1597, 0
    %v1609 = vsel %vm84, %v1598, 0
    %v1612 = vsel %vm84, %v1599, 0
    %v1615 = vsel %vm84, %v1600, 0
    %v1618 = vsel %vm84, %v1601, 0
    %v1621 = vsel %vm84, %v1602, 0
    %v1624 = vsel %vm84, %v1603, 0
    %v1627 = vsel %vm84, %v1604, 0
    %1629 = vmatprep.subr.mxu0 0.0
    %1630 = vmatpush1.msra.mxu0 0.0
    %1631 = vmatprep.subr.mxu0 0.0
    %1632 = vmatpush1.msra.mxu0 0.0
    %1633 = vmatprep.subr.mxu0 0.0
    %1634 = vmatpush1.msra.mxu0 0.0
    %1635 = vmatprep.subr.mxu0 0.0
    %1636 = vmatpush1.msra.mxu0 0.0
    %1637 = vmatprep.subr.mxu0 0.0
    %1638 = vmatpush1.msra.mxu0 0.0
    %1639 = vmatprep.subr.mxu0 0.0
    %1640 = vmatpush1.msra.mxu0 0.0
    %1641 = vmatprep.subr.mxu0 0.0
    %1642 = vmatpush1.msra.mxu0 0.0
    %1643 = vmatprep.subr.mxu0 0.0
    %1644 = vmatpush1.msra.mxu0 0.0
    %1645 = vmatprep.subr.mxu0 %v1246
    %1646 = vmatpush1.msra.mxu0 %v1245
    %1647 = vmatprep.subr.mxu0 %v1244
    %1648 = vmatpush1.msra.mxu0 %v1243
    %1649 = vmatprep.subr.mxu0 %v1242
    %1650 = vmatpush1.msra.mxu0 %v1241
    %1651 = vmatprep.subr.mxu0 %v1240
    %1652 = vmatpush1.msra.mxu0 %v1239
    %1653 = vmatprep.subr.mxu0 %v1238
    %1654 = vmatpush1.msra.mxu0 %v1237
    %1655 = vmatprep.subr.mxu0 %v1236
    %1656 = vmatpush1.msra.mxu0 %v1235
    %1657 = vmatprep.subr.mxu0 %v1234
    %1658 = vmatpush1.msra.mxu0 %v1233
    %1659 = vmatprep.subr.mxu0 %v1232
    %1660 = vmatpush1.msra.mxu0 %v1231
    %1661 = vmatprep.subr.mxu0 0.0
    %1662 = vmatpush2.msra.mxu0 0.0
    %1663 = vmatprep.subr.mxu0 0.0
    %1664 = vmatpush2.msra.mxu0 0.0
    %1665 = vmatprep.subr.mxu0 0.0
    %1666 = vmatpush2.msra.mxu0 0.0
    %1667 = vmatprep.subr.mxu0 0.0
    %1668 = vmatpush2.msra.mxu0 0.0
    %1669 = vmatprep.subr.mxu0 0.0
    %1670 = vmatpush2.msra.mxu0 0.0
    %1671 = vmatprep.subr.mxu0 0.0
    %1672 = vmatpush2.msra.mxu0 0.0
    %1673 = vmatprep.subr.mxu0 0.0
    %1674 = vmatpush2.msra.mxu0 0.0
    %1675 = vmatprep.subr.mxu0 0.0
    %1676 = vmatpush2.msra.mxu0 0.0
    %1677 = vmatprep.subr.mxu0 0.0
    %1678 = vmatpush2.msra.mxu0 0.0
    %1679 = vmatprep.subr.mxu0 0.0
    %1680 = vmatpush2.msra.mxu0 0.0
    %1681 = vmatprep.subr.mxu0 0.0
    %1682 = vmatpush2.msra.mxu0 0.0
    %1683 = vmatprep.subr.mxu0 0.0
    %1684 = vmatpush2.msra.mxu0 0.0
    %1685 = vmatprep.subr.mxu0 0.0
    %1686 = vmatpush2.msra.mxu0 0.0
    %1687 = vmatprep.subr.mxu0 0.0
    %1688 = vmatpush2.msra.mxu0 0.0
    %1689 = vmatprep.subr.mxu0 0.0
    %1690 = vmatpush2.msra.mxu0 0.0
    %1691 = vmatprep.subr.mxu0 0.0
    %1692 = vmatpush2.msra.mxu0 0.0
    %1693 = vmatprep.mubr.f32.mxu0 0.0
    %1694 = vmatmul.mubr.f32.gmra.mxu0 %v1606
    %v1695 = vpop.f32.mrf.mxu0
    %v1696 = vadd.f32 0.0, %v1695
    %v1697 = vpop.f32.mrf.mxu0
    %v1698 = vadd.f32 0.0, %v1697
    %1699 = vmatprep.mubr.f32.mxu0 0.0
    %1700 = vmatmul.mubr.f32.gmra.mxu0 %v1609
    %v1701 = vpop.f32.mrf.mxu0
    %v1702 = vadd.f32 0.0, %v1701
    %v1703 = vpop.f32.mrf.mxu0
    %v1704 = vadd.f32 0.0, %v1703
    %1705 = vmatprep.mubr.f32.mxu0 0.0
    %1706 = vmatmul.mubr.f32.gmra.mxu0 %v1612
    %v1707 = vpop.f32.mrf.mxu0
    %v1708 = vadd.f32 0.0, %v1707
    %v1709 = vpop.f32.mrf.mxu0
    %v1710 = vadd.f32 0.0, %v1709
    %1711 = vmatprep.mubr.f32.mxu0 0.0
    %1712 = vmatmul.mubr.f32.gmra.mxu0 %v1615
    %v1713 = vpop.f32.mrf.mxu0
    %v1714 = vadd.f32 0.0, %v1713
    %v1715 = vpop.f32.mrf.mxu0
    %v1716 = vadd.f32 0.0, %v1715
    %1717 = vmatprep.mubr.f32.mxu0 0.0
    %1718 = vmatmul.mubr.f32.gmra.mxu0 %v1618
    %v1719 = vpop.f32.mrf.mxu0
    %v1720 = vadd.f32 0.0, %v1719
    %v1721 = vpop.f32.mrf.mxu0
    %v1722 = vadd.f32 0.0, %v1721
    %1723 = vmatprep.mubr.f32.mxu0 0.0
    %1724 = vmatmul.mubr.f32.gmra.mxu0 %v1621
    %v1725 = vpop.f32.mrf.mxu0
    %v1726 = vadd.f32 0.0, %v1725
    %v1727 = vpop.f32.mrf.mxu0
    %v1728 = vadd.f32 0.0, %v1727
    %1729 = vmatprep.mubr.f32.mxu0 0.0
    %1730 = vmatmul.mubr.f32.gmra.mxu0 %v1624
    %v1731 = vpop.f32.mrf.mxu0
    %v1732 = vadd.f32 0.0, %v1731
    %v1733 = vpop.f32.mrf.mxu0
    %v1734 = vadd.f32 0.0, %v1733
    %1735 = vmatprep.mubr.f32.mxu0 0.0
    %1736 = vmatmul.mubr.f32.gmra.mxu0 %v1627
    %v1737 = vpop.f32.mrf.mxu0
    %v1738 = vadd.f32 0.0, %v1737
    %v1739 = vpop.f32.mrf.mxu0
    %v1740 = vadd.f32 0.0, %v1739
    %1741 = vdwg.mxu0
    %v1742 = vadd.f32 %v1581, %v1696
    %v1743 = vadd.f32 %v1582, %v1698
    %v1744 = vadd.f32 %v1583, %v1702
    %v1745 = vadd.f32 %v1584, %v1704
    %v1746 = vadd.f32 %v1585, %v1708
    %v1747 = vadd.f32 %v1586, %v1710
    %v1748 = vadd.f32 %v1587, %v1714
    %v1749 = vadd.f32 %v1588, %v1716
    %v1750 = vadd.f32 %v1589, %v1720
    %v1751 = vadd.f32 %v1590, %v1722
    %v1752 = vadd.f32 %v1591, %v1726
    %v1753 = vadd.f32 %v1592, %v1728
    %v1754 = vadd.f32 %v1593, %v1732
    %v1755 = vadd.f32 %v1594, %v1734
    %v1756 = vadd.f32 %v1595, %v1738
    %v1757 = vadd.f32 %v1596, %v1740
    %v1758 = vld [vmem:[#allocation3 + $0x18] sm:$0xff]
    %v1759 = vld [vmem:[#allocation3 + $0x20] sm:$0xff]
    %v1760 = vld [vmem:[#allocation3 + $0x28] sm:$0xff]
    %v1761 = vld [vmem:[#allocation3 + $0x30] sm:$0xff]
    %v1762 = vld [vmem:[#allocation3 + $0x38] sm:$0xff]
    %v1763 = vld [vmem:[#allocation3 + $0x40] sm:$0xff]
    %v1764 = vld [vmem:[#allocation3 + $0x48] sm:$0xff]
    %v1765 = vld [vmem:[#allocation3 + $0x50] sm:$0xff]
    %v1767 = vsel %vm84, %v1758, 0
    %v1770 = vsel %vm84, %v1759, 0
    %v1773 = vsel %vm84, %v1760, 0
    %v1776 = vsel %vm84, %v1761, 0
    %v1779 = vsel %vm84, %v1762, 0
    %v1782 = vsel %vm84, %v1763, 0
    %v1785 = vsel %vm84, %v1764, 0
    %v1788 = vsel %vm84, %v1765, 0
    %1790 = vmatprep.subr.mxu0 0.0
    %1791 = vmatpush1.msra.mxu0 0.0
    %1792 = vmatprep.subr.mxu0 0.0
    %1793 = vmatpush1.msra.mxu0 0.0
    %1794 = vmatprep.subr.mxu0 0.0
    %1795 = vmatpush1.msra.mxu0 0.0
    %1796 = vmatprep.subr.mxu0 0.0
    %1797 = vmatpush1.msra.mxu0 0.0
    %1798 = vmatprep.subr.mxu0 0.0
    %1799 = vmatpush1.msra.mxu0 0.0
    %1800 = vmatprep.subr.mxu0 0.0
    %1801 = vmatpush1.msra.mxu0 0.0
    %1802 = vmatprep.subr.mxu0 0.0
    %1803 = vmatpush1.msra.mxu0 0.0
    %1804 = vmatprep.subr.mxu0 0.0
    %1805 = vmatpush1.msra.mxu0 0.0
    %1806 = vmatprep.subr.mxu0 %v1262
    %1807 = vmatpush1.msra.mxu0 %v1261
    %1808 = vmatprep.subr.mxu0 %v1260
    %1809 = vmatpush1.msra.mxu0 %v1259
    %1810 = vmatprep.subr.mxu0 %v1258
    %1811 = vmatpush1.msra.mxu0 %v1257
    %1812 = vmatprep.subr.mxu0 %v1256
    %1813 = vmatpush1.msra.mxu0 %v1255
    %1814 = vmatprep.subr.mxu0 %v1254
    %1815 = vmatpush1.msra.mxu0 %v1253
    %1816 = vmatprep.subr.mxu0 %v1252
    %1817 = vmatpush1.msra.mxu0 %v1251
    %1818 = vmatprep.subr.mxu0 %v1250
    %1819 = vmatpush1.msra.mxu0 %v1249
    %1820 = vmatprep.subr.mxu0 %v1248
    %1821 = vmatpush1.msra.mxu0 %v1247
    %1822 = vmatprep.subr.mxu0 0.0
    %1823 = vmatpush2.msra.mxu0 0.0
    %1824 = vmatprep.subr.mxu0 0.0
    %1825 = vmatpush2.msra.mxu0 0.0
    %1826 = vmatprep.subr.mxu0 0.0
    %1827 = vmatpush2.msra.mxu0 0.0
    %1828 = vmatprep.subr.mxu0 0.0
    %1829 = vmatpush2.msra.mxu0 0.0
    %1830 = vmatprep.subr.mxu0 0.0
    %1831 = vmatpush2.msra.mxu0 0.0
    %1832 = vmatprep.subr.mxu0 0.0
    %1833 = vmatpush2.msra.mxu0 0.0
    %1834 = vmatprep.subr.mxu0 0.0
    %1835 = vmatpush2.msra.mxu0 0.0
    %1836 = vmatprep.subr.mxu0 0.0
    %1837 = vmatpush2.msra.mxu0 0.0
    %1838 = vmatprep.subr.mxu0 0.0
    %1839 = vmatpush2.msra.mxu0 0.0
    %1840 = vmatprep.subr.mxu0 0.0
    %1841 = vmatpush2.msra.mxu0 0.0
    %1842 = vmatprep.subr.mxu0 0.0
    %1843 = vmatpush2.msra.mxu0 0.0
    %1844 = vmatprep.subr.mxu0 0.0
    %1845 = vmatpush2.msra.mxu0 0.0
    %1846 = vmatprep.subr.mxu0 0.0
    %1847 = vmatpush2.msra.mxu0 0.0
    %1848 = vmatprep.subr.mxu0 0.0
    %1849 = vmatpush2.msra.mxu0 0.0
    %1850 = vmatprep.subr.mxu0 0.0
    %1851 = vmatpush2.msra.mxu0 0.0
    %1852 = vmatprep.subr.mxu0 0.0
    %1853 = vmatpush2.msra.mxu0 0.0
    %1854 = vmatprep.mubr.f32.mxu0 0.0
    %1855 = vmatmul.mubr.f32.gmra.mxu0 %v1767
    %v1856 = vpop.f32.mrf.mxu0
    %v1857 = vadd.f32 0.0, %v1856
    %v1858 = vpop.f32.mrf.mxu0
    %v1859 = vadd.f32 0.0, %v1858
    %1860 = vmatprep.mubr.f32.mxu0 0.0
    %1861 = vmatmul.mubr.f32.gmra.mxu0 %v1770
    %v1862 = vpop.f32.mrf.mxu0
    %v1863 = vadd.f32 0.0, %v1862
    %v1864 = vpop.f32.mrf.mxu0
    %v1865 = vadd.f32 0.0, %v1864
    %1866 = vmatprep.mubr.f32.mxu0 0.0
    %1867 = vmatmul.mubr.f32.gmra.mxu0 %v1773
    %v1868 = vpop.f32.mrf.mxu0
    %v1869 = vadd.f32 0.0, %v1868
    %v1870 = vpop.f32.mrf.mxu0
    %v1871 = vadd.f32 0.0, %v1870
    %1872 = vmatprep.mubr.f32.mxu0 0.0
    %1873 = vmatmul.mubr.f32.gmra.mxu0 %v1776
    %v1874 = vpop.f32.mrf.mxu0
    %v1875 = vadd.f32 0.0, %v1874
    %v1876 = vpop.f32.mrf.mxu0
    %v1877 = vadd.f32 0.0, %v1876
    %1878 = vmatprep.mubr.f32.mxu0 0.0
    %1879 = vmatmul.mubr.f32.gmra.mxu0 %v1779
    %v1880 = vpop.f32.mrf.mxu0
    %v1881 = vadd.f32 0.0, %v1880
    %v1882 = vpop.f32.mrf.mxu0
    %v1883 = vadd.f32 0.0, %v1882
    %1884 = vmatprep.mubr.f32.mxu0 0.0
    %1885 = vmatmul.mubr.f32.gmra.mxu0 %v1782
    %v1886 = vpop.f32.mrf.mxu0
    %v1887 = vadd.f32 0.0, %v1886
    %v1888 = vpop.f32.mrf.mxu0
    %v1889 = vadd.f32 0.0, %v1888
    %1890 = vmatprep.mubr.f32.mxu0 0.0
    %1891 = vmatmul.mubr.f32.gmra.mxu0 %v1785
    %v1892 = vpop.f32.mrf.mxu0
    %v1893 = vadd.f32 0.0, %v1892
    %v1894 = vpop.f32.mrf.mxu0
    %v1895 = vadd.f32 0.0, %v1894
    %1896 = vmatprep.mubr.f32.mxu0 0.0
    %1897 = vmatmul.mubr.f32.gmra.mxu0 %v1788
    %v1898 = vpop.f32.mrf.mxu0
    %v1899 = vadd.f32 0.0, %v1898
    %v1900 = vpop.f32.mrf.mxu0
    %v1901 = vadd.f32 0.0, %v1900
    %1902 = vdwg.mxu0
    %v1903 = vadd.f32 %v1742, %v1857
    %v1904 = vadd.f32 %v1743, %v1859
    %v1905 = vadd.f32 %v1744, %v1863
    %v1906 = vadd.f32 %v1745, %v1865
    %v1907 = vadd.f32 %v1746, %v1869
    %v1908 = vadd.f32 %v1747, %v1871
    %v1909 = vadd.f32 %v1748, %v1875
    %v1910 = vadd.f32 %v1749, %v1877
    %v1911 = vadd.f32 %v1750, %v1881
    %v1912 = vadd.f32 %v1751, %v1883
    %v1913 = vadd.f32 %v1752, %v1887
    %v1914 = vadd.f32 %v1753, %v1889
    %v1915 = vadd.f32 %v1754, %v1893
    %v1916 = vadd.f32 %v1755, %v1895
    %v1917 = vadd.f32 %v1756, %v1899
    %v1918 = vadd.f32 %v1757, %v1901
    %v1919 = vld [vmem:[#allocation3 + $0x20] sm:$0xff]
    %v1920 = vld [vmem:[#allocation3 + $0x28] sm:$0xff]
    %v1921 = vld [vmem:[#allocation3 + $0x30] sm:$0xff]
    %v1922 = vld [vmem:[#allocation3 + $0x38] sm:$0xff]
    %v1923 = vld [vmem:[#allocation3 + $0x40] sm:$0xff]
    %v1924 = vld [vmem:[#allocation3 + $0x48] sm:$0xff]
    %v1925 = vld [vmem:[#allocation3 + $0x50] sm:$0xff]
    %v1926 = vld [vmem:[#allocation3 + $0x58] sm:$0xff]
    %v1928 = vsel %vm84, %v1919, 0
    %v1931 = vsel %vm84, %v1920, 0
    %v1934 = vsel %vm84, %v1921, 0
    %v1937 = vsel %vm84, %v1922, 0
    %v1940 = vsel %vm84, %v1923, 0
    %v1943 = vsel %vm84, %v1924, 0
    %v1946 = vsel %vm84, %v1925, 0
    %v1949 = vsel %vm84, %v1926, 0
    %1951 = vmatprep.subr.mxu0 0.0
    %1952 = vmatpush1.msra.mxu0 0.0
    %1953 = vmatprep.subr.mxu0 0.0
    %1954 = vmatpush1.msra.mxu0 0.0
    %1955 = vmatprep.subr.mxu0 0.0
    %1956 = vmatpush1.msra.mxu0 0.0
    %1957 = vmatprep.subr.mxu0 0.0
    %1958 = vmatpush1.msra.mxu0 0.0
    %1959 = vmatprep.subr.mxu0 0.0
    %1960 = vmatpush1.msra.mxu0 0.0
    %1961 = vmatprep.subr.mxu0 0.0
    %1962 = vmatpush1.msra.mxu0 0.0
    %1963 = vmatprep.subr.mxu0 0.0
    %1964 = vmatpush1.msra.mxu0 0.0
    %1965 = vmatprep.subr.mxu0 0.0
    %1966 = vmatpush1.msra.mxu0 0.0
    %1967 = vmatprep.subr.mxu0 %v1278
    %1968 = vmatpush1.msra.mxu0 %v1277
    %1969 = vmatprep.subr.mxu0 %v1276
    %1970 = vmatpush1.msra.mxu0 %v1275
    %1971 = vmatprep.subr.mxu0 %v1274
    %1972 = vmatpush1.msra.mxu0 %v1273
    %1973 = vmatprep.subr.mxu0 %v1272
    %1974 = vmatpush1.msra.mxu0 %v1271
    %1975 = vmatprep.subr.mxu0 %v1270
    %1976 = vmatpush1.msra.mxu0 %v1269
    %1977 = vmatprep.subr.mxu0 %v1268
    %1978 = vmatpush1.msra.mxu0 %v1267
    %1979 = vmatprep.subr.mxu0 %v1266
    %1980 = vmatpush1.msra.mxu0 %v1265
    %1981 = vmatprep.subr.mxu0 %v1264
    %1982 = vmatpush1.msra.mxu0 %v1263
    %1983 = vmatprep.subr.mxu0 0.0
    %1984 = vmatpush2.msra.mxu0 0.0
    %1985 = vmatprep.subr.mxu0 0.0
    %1986 = vmatpush2.msra.mxu0 0.0
    %1987 = vmatprep.subr.mxu0 0.0
    %1988 = vmatpush2.msra.mxu0 0.0
    %1989 = vmatprep.subr.mxu0 0.0
    %1990 = vmatpush2.msra.mxu0 0.0
    %1991 = vmatprep.subr.mxu0 0.0
    %1992 = vmatpush2.msra.mxu0 0.0
    %1993 = vmatprep.subr.mxu0 0.0
    %1994 = vmatpush2.msra.mxu0 0.0
    %1995 = vmatprep.subr.mxu0 0.0
    %1996 = vmatpush2.msra.mxu0 0.0
    %1997 = vmatprep.subr.mxu0 0.0
    %1998 = vmatpush2.msra.mxu0 0.0
    %1999 = vmatprep.subr.mxu0 0.0
    %2000 = vmatpush2.msra.mxu0 0.0
    %2001 = vmatprep.subr.mxu0 0.0
    %2002 = vmatpush2.msra.mxu0 0.0
    %2003 = vmatprep.subr.mxu0 0.0
    %2004 = vmatpush2.msra.mxu0 0.0
    %2005 = vmatprep.subr.mxu0 0.0
    %2006 = vmatpush2.msra.mxu0 0.0
    %2007 = vmatprep.subr.mxu0 0.0
    %2008 = vmatpush2.msra.mxu0 0.0
    %2009 = vmatprep.subr.mxu0 0.0
    %2010 = vmatpush2.msra.mxu0 0.0
    %2011 = vmatprep.subr.mxu0 0.0
    %2012 = vmatpush2.msra.mxu0 0.0
    %2013 = vmatprep.subr.mxu0 0.0
    %2014 = vmatpush2.msra.mxu0 0.0
    %2015 = vmatprep.mubr.f32.mxu0 0.0
    %2016 = vmatmul.mubr.f32.gmra.mxu0 %v1928
    %v2017 = vpop.f32.mrf.mxu0
    %v2018 = vadd.f32 0.0, %v2017
    %v2019 = vpop.f32.mrf.mxu0
    %v2020 = vadd.f32 0.0, %v2019
    %2021 = vmatprep.mubr.f32.mxu0 0.0
    %2022 = vmatmul.mubr.f32.gmra.mxu0 %v1931
    %v2023 = vpop.f32.mrf.mxu0
    %v2024 = vadd.f32 0.0, %v2023
    %v2025 = vpop.f32.mrf.mxu0
    %v2026 = vadd.f32 0.0, %v2025
    %2027 = vmatprep.mubr.f32.mxu0 0.0
    %2028 = vmatmul.mubr.f32.gmra.mxu0 %v1934
    %v2029 = vpop.f32.mrf.mxu0
    %v2030 = vadd.f32 0.0, %v2029
    %v2031 = vpop.f32.mrf.mxu0
    %v2032 = vadd.f32 0.0, %v2031
    %2033 = vmatprep.mubr.f32.mxu0 0.0
    %2034 = vmatmul.mubr.f32.gmra.mxu0 %v1937
    %v2035 = vpop.f32.mrf.mxu0
    %v2036 = vadd.f32 0.0, %v2035
    %v2037 = vpop.f32.mrf.mxu0
    %v2038 = vadd.f32 0.0, %v2037
    %2039 = vmatprep.mubr.f32.mxu0 0.0
    %2040 = vmatmul.mubr.f32.gmra.mxu0 %v1940
    %v2041 = vpop.f32.mrf.mxu0
    %v2042 = vadd.f32 0.0, %v2041
    %v2043 = vpop.f32.mrf.mxu0
    %v2044 = vadd.f32 0.0, %v2043
    %2045 = vmatprep.mubr.f32.mxu0 0.0
    %2046 = vmatmul.mubr.f32.gmra.mxu0 %v1943
    %v2047 = vpop.f32.mrf.mxu0
    %v2048 = vadd.f32 0.0, %v2047
    %v2049 = vpop.f32.mrf.mxu0
    %v2050 = vadd.f32 0.0, %v2049
    %2051 = vmatprep.mubr.f32.mxu0 0.0
    %2052 = vmatmul.mubr.f32.gmra.mxu0 %v1946
    %v2053 = vpop.f32.mrf.mxu0
    %v2054 = vadd.f32 0.0, %v2053
    %v2055 = vpop.f32.mrf.mxu0
    %v2056 = vadd.f32 0.0, %v2055
    %2057 = vmatprep.mubr.f32.mxu0 0.0
    %2058 = vmatmul.mubr.f32.gmra.mxu0 %v1949
    %v2059 = vpop.f32.mrf.mxu0
    %v2060 = vadd.f32 0.0, %v2059
    %v2061 = vpop.f32.mrf.mxu0
    %v2062 = vadd.f32 0.0, %v2061
    %2063 = vdwg.mxu0
    %v2064 = vadd.f32 %v1903, %v2018
    %v2065 = vadd.f32 %v1904, %v2020
    %v2066 = vadd.f32 %v1905, %v2024
    %v2067 = vadd.f32 %v1906, %v2026
    %v2068 = vadd.f32 %v1907, %v2030
    %v2069 = vadd.f32 %v1908, %v2032
    %v2070 = vadd.f32 %v1909, %v2036
    %v2071 = vadd.f32 %v1910, %v2038
    %v2072 = vadd.f32 %v1911, %v2042
    %v2073 = vadd.f32 %v1912, %v2044
    %v2074 = vadd.f32 %v1913, %v2048
    %v2075 = vadd.f32 %v1914, %v2050
    %v2076 = vadd.f32 %v1915, %v2054
    %v2077 = vadd.f32 %v1916, %v2056
    %v2078 = vadd.f32 %v1917, %v2060
    %v2079 = vadd.f32 %v1918, %v2062
    %v2080 = vmax.f32 %v2064, 0.0
    %v2081 = vmax.f32 %v2065, 0.0
    %v2082 = vmax.f32 %v2066, 0.0
    %v2083 = vmax.f32 %v2067, 0.0
    %v2084 = vmax.f32 %v2068, 0.0
    %v2085 = vmax.f32 %v2069, 0.0
    %v2086 = vmax.f32 %v2070, 0.0
    %v2087 = vmax.f32 %v2071, 0.0
    %v2088 = vmax.f32 %v2072, 0.0
    %v2089 = vmax.f32 %v2073, 0.0
    %v2090 = vmax.f32 %v2074, 0.0
    %v2091 = vmax.f32 %v2075, 0.0
    %v2092 = vmax.f32 %v2076, 0.0
    %v2093 = vmax.f32 %v2077, 0.0
    %v2094 = vmax.f32 %v2078, 0.0
    %v2095 = vmax.f32 %v2079, 0.0
    %v2096 = vmax.f32 %v2080, %v2084
    %v2097 = vmax.f32 %v2082, %v2086
    %v2098 = vmax.f32 %v2096, %v2088
    %v2099 = vmax.f32 %v2097, %v2090
    %v2100 = vmax.f32 %v2098, %v2092
    %v2101 = vmax.f32 %v2099, %v2094
    %v2102 = vmax.f32 %v2100, %v2101
    %v2103 = vmax.f32 %v2081, %v2085
    %v2104 = vmax.f32 %v2083, %v2087
    %v2105 = vmax.f32 %v2103, %v2089
    %v2106 = vmax.f32 %v2104, %v2091
    %v2107 = vmax.f32 %v2105, %v2093
    %v2108 = vmax.f32 %v2106, %v2095
    %v2109 = vmax.f32 %v2107, %v2108
    %v2110 = vld [vmem:[%s6] sm:$0xff]
    %v2111 = vld [vmem:[%s6 + $0x8] sm:$0xff]
    %v2112 = vld [vmem:[%s6 + $0x10] sm:$0xff]
    %v2113 = vld [vmem:[%s6 + $0x18] sm:$0xff]
    %v2114 = vld [vmem:[%s6 + $0x20] sm:$0xff]
    %v2115 = vld [vmem:[%s6 + $0x28] sm:$0xff]
    %v2116 = vld [vmem:[%s6 + $0x30] sm:$0xff]
    %v2117 = vld [vmem:[%s6 + $0x38] sm:$0xff]
    %v2118 = vld [vmem:[%s6 + $0x40] sm:$0xff]
    %v2119 = vld [vmem:[%s6 + $0x48] sm:$0xff]
    %v2120 = vld [vmem:[%s6 + $0x50] sm:$0xff]
    %v2121 = vld [vmem:[%s6 + $0x58] sm:$0xff]
    %v2122 = vld [vmem:[%s6 + $0x60] sm:$0xff]
    %v2123 = vld [vmem:[%s6 + $0x68] sm:$0xff]
    %v2124 = vld [vmem:[%s6 + $0x70] sm:$0xff]
    %v2125 = vld [vmem:[%s6 + $0x78] sm:$0xff]
    %v2126 = vld [vmem:[%s6 + $0x80] sm:$0xff]
    %v2127 = vld [vmem:[%s6 + $0x88] sm:$0xff]
    %v2128 = vld [vmem:[%s6 + $0x90] sm:$0xff]
    %v2129 = vld [vmem:[%s6 + $0x98] sm:$0xff]
    %v2130 = vld [vmem:[%s6 + $0xa0] sm:$0xff]
    %v2131 = vld [vmem:[%s6 + $0xa8] sm:$0xff]
    %v2132 = vld [vmem:[%s6 + $0xb0] sm:$0xff]
    %v2133 = vld [vmem:[%s6 + $0xb8] sm:$0xff]
    %v2134 = vld [vmem:[%s6 + $0xc0] sm:$0xff]
    %v2135 = vld [vmem:[%s6 + $0xc8] sm:$0xff]
    %v2136 = vld [vmem:[%s6 + $0xd0] sm:$0xff]
    %v2137 = vld [vmem:[%s6 + $0xd8] sm:$0xff]
    %v2138 = vld [vmem:[%s6 + $0xe0] sm:$0xff]
    %v2139 = vld [vmem:[%s6 + $0xe8] sm:$0xff]
    %v2140 = vld [vmem:[%s6 + $0xf0] sm:$0xff]
    %v2141 = vld [vmem:[%s6 + $0xf8] sm:$0xff]
    %v2142 = vld [vmem:[#allocation3] sm:$0xff]
    %v2143 = vld [vmem:[%s7] sm:$0x1]
    %v2145 = vlaneseq
    %v2146 = vshrl.u32 %v2145, 7
    %v2147 = vsub.s32 0, %v2146
    %v2148 = vrot.slane %v2143, %v2147
    %v2151 = vsel %vm84, %v2142, 0
    %2153 = vmatprep.subr.mxu0 0.0
    %2154 = vmatpush1.msra.mxu0 0.0
    %2155 = vmatprep.subr.mxu0 0.0
    %2156 = vmatpush1.msra.mxu0 0.0
    %2157 = vmatprep.subr.mxu0 0.0
    %2158 = vmatpush1.msra.mxu0 0.0
    %2159 = vmatprep.subr.mxu0 0.0
    %2160 = vmatpush1.msra.mxu0 0.0
    %2161 = vmatprep.subr.mxu0 0.0
    %2162 = vmatpush1.msra.mxu0 0.0
    %2163 = vmatprep.subr.mxu0 0.0
    %2164 = vmatpush1.msra.mxu0 0.0
    %2165 = vmatprep.subr.mxu0 0.0
    %2166 = vmatpush1.msra.mxu0 0.0
    %2167 = vmatprep.subr.mxu0 0.0
    %2168 = vmatpush1.msra.mxu0 0.0
    %2169 = vmatprep.subr.mxu0 0.0
    %2170 = vmatpush1.msra.mxu0 %v2117
    %2171 = vmatprep.subr.mxu0 0.0
    %2172 = vmatpush1.msra.mxu0 %v2116
    %2173 = vmatprep.subr.mxu0 0.0
    %2174 = vmatpush1.msra.mxu0 %v2115
    %2175 = vmatprep.subr.mxu0 0.0
    %2176 = vmatpush1.msra.mxu0 %v2114
    %2177 = vmatprep.subr.mxu0 0.0
    %2178 = vmatpush1.msra.mxu0 %v2113
    %2179 = vmatprep.subr.mxu0 0.0
    %2180 = vmatpush1.msra.mxu0 %v2112
    %2181 = vmatprep.subr.mxu0 0.0
    %2182 = vmatpush1.msra.mxu0 %v2111
    %2183 = vmatprep.subr.mxu0 0.0
    %2184 = vmatpush1.msra.mxu0 %v2110
    %2185 = vmatprep.subr.mxu0 0.0
    %2186 = vmatpush2.msra.mxu0 0.0
    %2187 = vmatprep.subr.mxu0 0.0
    %2188 = vmatpush2.msra.mxu0 0.0
    %2189 = vmatprep.subr.mxu0 0.0
    %2190 = vmatpush2.msra.mxu0 0.0
    %2191 = vmatprep.subr.mxu0 0.0
    %2192 = vmatpush2.msra.mxu0 0.0
    %2193 = vmatprep.subr.mxu0 0.0
    %2194 = vmatpush2.msra.mxu0 0.0
    %2195 = vmatprep.subr.mxu0 0.0
    %2196 = vmatpush2.msra.mxu0 0.0
    %2197 = vmatprep.subr.mxu0 0.0
    %2198 = vmatpush2.msra.mxu0 0.0
    %2199 = vmatprep.subr.mxu0 0.0
    %2200 = vmatpush2.msra.mxu0 0.0
    %2201 = vmatprep.subr.mxu0 0.0
    %2202 = vmatpush2.msra.mxu0 0.0
    %2203 = vmatprep.subr.mxu0 0.0
    %2204 = vmatpush2.msra.mxu0 0.0
    %2205 = vmatprep.subr.mxu0 0.0
    %2206 = vmatpush2.msra.mxu0 0.0
    %2207 = vmatprep.subr.mxu0 0.0
    %2208 = vmatpush2.msra.mxu0 0.0
    %2209 = vmatprep.subr.mxu0 0.0
    %2210 = vmatpush2.msra.mxu0 0.0
    %2211 = vmatprep.subr.mxu0 0.0
    %2212 = vmatpush2.msra.mxu0 0.0
    %2213 = vmatprep.subr.mxu0 0.0
    %2214 = vmatpush2.msra.mxu0 0.0
    %2215 = vmatprep.subr.mxu0 0.0
    %2216 = vmatpush2.msra.mxu0 0.0
    %2217 = vmatprep.mubr.f32.mxu0 0.0
    %2218 = vmatmul.mubr.f32.gmra.mxu0 %v2151
    %v2219 = vpop.f32.mrf.mxu0
    %v2220 = vadd.f32 %v2148, %v2219
    %v2221 = vpop.f32.mrf.mxu0
    %2222 = vmatprep.mubr.f32.mxu0 0.0
    %2223 = vmatmul.mubr.f32.gmra.mxu0 %v1445
    %v2224 = vpop.f32.mrf.mxu0
    %v2225 = vadd.f32 %v2148, %v2224
    %v2226 = vpop.f32.mrf.mxu0
    %2227 = vmatprep.mubr.f32.mxu0 0.0
    %2228 = vmatmul.mubr.f32.gmra.mxu0 %v1448
    %v2229 = vpop.f32.mrf.mxu0
    %v2230 = vadd.f32 %v2148, %v2229
    %v2231 = vpop.f32.mrf.mxu0
    %2232 = vmatprep.mubr.f32.mxu0 0.0
    %2233 = vmatmul.mubr.f32.gmra.mxu0 %v1451
    %v2234 = vpop.f32.mrf.mxu0
    %v2235 = vadd.f32 %v2148, %v2234
    %v2236 = vpop.f32.mrf.mxu0
    %2237 = vmatprep.mubr.f32.mxu0 0.0
    %2238 = vmatmul.mubr.f32.gmra.mxu0 %v1454
    %v2239 = vpop.f32.mrf.mxu0
    %v2240 = vadd.f32 %v2148, %v2239
    %v2241 = vpop.f32.mrf.mxu0
    %2242 = vmatprep.mubr.f32.mxu0 0.0
    %2243 = vmatmul.mubr.f32.gmra.mxu0 %v1457
    %v2244 = vpop.f32.mrf.mxu0
    %v2245 = vadd.f32 %v2148, %v2244
    %v2246 = vpop.f32.mrf.mxu0
    %2247 = vmatprep.mubr.f32.mxu0 0.0
    %2248 = vmatmul.mubr.f32.gmra.mxu0 %v1460
    %v2249 = vpop.f32.mrf.mxu0
    %v2250 = vadd.f32 %v2148, %v2249
    %v2251 = vpop.f32.mrf.mxu0
    %2252 = vmatprep.mubr.f32.mxu0 0.0
    %2253 = vmatmul.mubr.f32.gmra.mxu0 %v1463
    %v2254 = vpop.f32.mrf.mxu0
    %v2255 = vadd.f32 %v2148, %v2254
    %v2256 = vpop.f32.mrf.mxu0
    %2257 = vmatprep.mubr.f32.mxu0 0.0
    %2258 = vmatmul.mubr.f32.gmra.mxu0 %v1466
    %v2259 = vpop.f32.mrf.mxu0
    %v2260 = vadd.f32 %v2148, %v2259
    %v2261 = vpop.f32.mrf.mxu0
    %2262 = vdwg.mxu0
    %v2263 = vld [vmem:[#allocation3 + $0x8] sm:$0xff]
    %v2265 = vsel %vm84, %v2263, 0
    %2267 = vmatprep.subr.mxu0 0.0
    %2268 = vmatpush1.msra.mxu0 0.0
    %2269 = vmatprep.subr.mxu0 0.0
    %2270 = vmatpush1.msra.mxu0 0.0
    %2271 = vmatprep.subr.mxu0 0.0
    %2272 = vmatpush1.msra.mxu0 0.0
    %2273 = vmatprep.subr.mxu0 0.0
    %2274 = vmatpush1.msra.mxu0 0.0
    %2275 = vmatprep.subr.mxu0 0.0
    %2276 = vmatpush1.msra.mxu0 0.0
    %2277 = vmatprep.subr.mxu0 0.0
    %2278 = vmatpush1.msra.mxu0 0.0
    %2279 = vmatprep.subr.mxu0 0.0
    %2280 = vmatpush1.msra.mxu0 0.0
    %2281 = vmatprep.subr.mxu0 0.0
    %2282 = vmatpush1.msra.mxu0 0.0
    %2283 = vmatprep.subr.mxu0 0.0
    %2284 = vmatpush1.msra.mxu0 %v2125
    %2285 = vmatprep.subr.mxu0 0.0
    %2286 = vmatpush1.msra.mxu0 %v2124
    %2287 = vmatprep.subr.mxu0 0.0
    %2288 = vmatpush1.msra.mxu0 %v2123
    %2289 = vmatprep.subr.mxu0 0.0
    %2290 = vmatpush1.msra.mxu0 %v2122
    %2291 = vmatprep.subr.mxu0 0.0
    %2292 = vmatpush1.msra.mxu0 %v2121
    %2293 = vmatprep.subr.mxu0 0.0
    %2294 = vmatpush1.msra.mxu0 %v2120
    %2295 = vmatprep.subr.mxu0 0.0
    %2296 = vmatpush1.msra.mxu0 %v2119
    %2297 = vmatprep.subr.mxu0 0.0
    %2298 = vmatpush1.msra.mxu0 %v2118
    %2299 = vmatprep.subr.mxu0 0.0
    %2300 = vmatpush2.msra.mxu0 0.0
    %2301 = vmatprep.subr.mxu0 0.0
    %2302 = vmatpush2.msra.mxu0 0.0
    %2303 = vmatprep.subr.mxu0 0.0
    %2304 = vmatpush2.msra.mxu0 0.0
    %2305 = vmatprep.subr.mxu0 0.0
    %2306 = vmatpush2.msra.mxu0 0.0
    %2307 = vmatprep.subr.mxu0 0.0
    %2308 = vmatpush2.msra.mxu0 0.0
    %2309 = vmatprep.subr.mxu0 0.0
    %2310 = vmatpush2.msra.mxu0 0.0
    %2311 = vmatprep.subr.mxu0 0.0
    %2312 = vmatpush2.msra.mxu0 0.0
    %2313 = vmatprep.subr.mxu0 0.0
    %2314 = vmatpush2.msra.mxu0 0.0
    %2315 = vmatprep.subr.mxu0 0.0
    %2316 = vmatpush2.msra.mxu0 0.0
    %2317 = vmatprep.subr.mxu0 0.0
    %2318 = vmatpush2.msra.mxu0 0.0
    %2319 = vmatprep.subr.mxu0 0.0
    %2320 = vmatpush2.msra.mxu0 0.0
    %2321 = vmatprep.subr.mxu0 0.0
    %2322 = vmatpush2.msra.mxu0 0.0
    %2323 = vmatprep.subr.mxu0 0.0
    %2324 = vmatpush2.msra.mxu0 0.0
    %2325 = vmatprep.subr.mxu0 0.0
    %2326 = vmatpush2.msra.mxu0 0.0
    %2327 = vmatprep.subr.mxu0 0.0
    %2328 = vmatpush2.msra.mxu0 0.0
    %2329 = vmatprep.subr.mxu0 0.0
    %2330 = vmatpush2.msra.mxu0 0.0
    %2331 = vmatprep.mubr.f32.mxu0 0.0
    %2332 = vmatmul.mubr.f32.gmra.mxu0 %v2265
    %v2333 = vpop.f32.mrf.mxu0
    %v2334 = vadd.f32 0.0, %v2333
    %v2335 = vpop.f32.mrf.mxu0
    %2336 = vmatprep.mubr.f32.mxu0 0.0
    %2337 = vmatmul.mubr.f32.gmra.mxu0 %v1606
    %v2338 = vpop.f32.mrf.mxu0
    %v2339 = vadd.f32 0.0, %v2338
    %v2340 = vpop.f32.mrf.mxu0
    %2341 = vmatprep.mubr.f32.mxu0 0.0
    %2342 = vmatmul.mubr.f32.gmra.mxu0 %v1609
    %v2343 = vpop.f32.mrf.mxu0
    %v2344 = vadd.f32 0.0, %v2343
    %v2345 = vpop.f32.mrf.mxu0
    %2346 = vmatprep.mubr.f32.mxu0 0.0
    %2347 = vmatmul.mubr.f32.gmra.mxu0 %v1612
    %v2348 = vpop.f32.mrf.mxu0
    %v2349 = vadd.f32 0.0, %v2348
    %v2350 = vpop.f32.mrf.mxu0
    %2351 = vmatprep.mubr.f32.mxu0 0.0
    %2352 = vmatmul.mubr.f32.gmra.mxu0 %v1615
    %v2353 = vpop.f32.mrf.mxu0
    %v2354 = vadd.f32 0.0, %v2353
    %v2355 = vpop.f32.mrf.mxu0
    %2356 = vmatprep.mubr.f32.mxu0 0.0
    %2357 = vmatmul.mubr.f32.gmra.mxu0 %v1618
    %v2358 = vpop.f32.mrf.mxu0
    %v2359 = vadd.f32 0.0, %v2358
    %v2360 = vpop.f32.mrf.mxu0
    %2361 = vmatprep.mubr.f32.mxu0 0.0
    %2362 = vmatmul.mubr.f32.gmra.mxu0 %v1621
    %v2363 = vpop.f32.mrf.mxu0
    %v2364 = vadd.f32 0.0, %v2363
    %v2365 = vpop.f32.mrf.mxu0
    %2366 = vmatprep.mubr.f32.mxu0 0.0
    %2367 = vmatmul.mubr.f32.gmra.mxu0 %v1624
    %v2368 = vpop.f32.mrf.mxu0
    %v2369 = vadd.f32 0.0, %v2368
    %v2370 = vpop.f32.mrf.mxu0
    %2371 = vmatprep.mubr.f32.mxu0 0.0
    %2372 = vmatmul.mubr.f32.gmra.mxu0 %v1627
    %v2373 = vpop.f32.mrf.mxu0
    %v2374 = vadd.f32 0.0, %v2373
    %v2375 = vpop.f32.mrf.mxu0
    %2376 = vdwg.mxu0
    %v2377 = vadd.f32 %v2220, %v2334
    %v2378 = vadd.f32 %v2225, %v2339
    %v2379 = vadd.f32 %v2230, %v2344
    %v2380 = vadd.f32 %v2235, %v2349
    %v2381 = vadd.f32 %v2240, %v2354
    %v2382 = vadd.f32 %v2245, %v2359
    %v2383 = vadd.f32 %v2250, %v2364
    %v2384 = vadd.f32 %v2255, %v2369
    %v2385 = vadd.f32 %v2260, %v2374
    %v2386 = vld [vmem:[#allocation3 + $0x10] sm:$0xff]
    %v2388 = vsel %vm84, %v2386, 0
    %2390 = vmatprep.subr.mxu0 0.0
    %2391 = vmatpush1.msra.mxu0 0.0
    %2392 = vmatprep.subr.mxu0 0.0
    %2393 = vmatpush1.msra.mxu0 0.0
    %2394 = vmatprep.subr.mxu0 0.0
    %2395 = vmatpush1.msra.mxu0 0.0
    %2396 = vmatprep.subr.mxu0 0.0
    %2397 = vmatpush1.msra.mxu0 0.0
    %2398 = vmatprep.subr.mxu0 0.0
    %2399 = vmatpush1.msra.mxu0 0.0
    %2400 = vmatprep.subr.mxu0 0.0
    %2401 = vmatpush1.msra.mxu0 0.0
    %2402 = vmatprep.subr.mxu0 0.0
    %2403 = vmatpush1.msra.mxu0 0.0
    %2404 = vmatprep.subr.mxu0 0.0
    %2405 = vmatpush1.msra.mxu0 0.0
    %2406 = vmatprep.subr.mxu0 0.0
    %2407 = vmatpush1.msra.mxu0 %v2133
    %2408 = vmatprep.subr.mxu0 0.0
    %2409 = vmatpush1.msra.mxu0 %v2132
    %2410 = vmatprep.subr.mxu0 0.0
    %2411 = vmatpush1.msra.mxu0 %v2131
    %2412 = vmatprep.subr.mxu0 0.0
    %2413 = vmatpush1.msra.mxu0 %v2130
    %2414 = vmatprep.subr.mxu0 0.0
    %2415 = vmatpush1.msra.mxu0 %v2129
    %2416 = vmatprep.subr.mxu0 0.0
    %2417 = vmatpush1.msra.mxu0 %v2128
    %2418 = vmatprep.subr.mxu0 0.0
    %2419 = vmatpush1.msra.mxu0 %v2127
    %2420 = vmatprep.subr.mxu0 0.0
    %2421 = vmatpush1.msra.mxu0 %v2126
    %2422 = vmatprep.subr.mxu0 0.0
    %2423 = vmatpush2.msra.mxu0 0.0
    %2424 = vmatprep.subr.mxu0 0.0
    %2425 = vmatpush2.msra.mxu0 0.0
    %2426 = vmatprep.subr.mxu0 0.0
    %2427 = vmatpush2.msra.mxu0 0.0
    %2428 = vmatprep.subr.mxu0 0.0
    %2429 = vmatpush2.msra.mxu0 0.0
    %2430 = vmatprep.subr.mxu0 0.0
    %2431 = vmatpush2.msra.mxu0 0.0
    %2432 = vmatprep.subr.mxu0 0.0
    %2433 = vmatpush2.msra.mxu0 0.0
    %2434 = vmatprep.subr.mxu0 0.0
    %2435 = vmatpush2.msra.mxu0 0.0
    %2436 = vmatprep.subr.mxu0 0.0
    %2437 = vmatpush2.msra.mxu0 0.0
    %2438 = vmatprep.subr.mxu0 0.0
    %2439 = vmatpush2.msra.mxu0 0.0
    %2440 = vmatprep.subr.mxu0 0.0
    %2441 = vmatpush2.msra.mxu0 0.0
    %2442 = vmatprep.subr.mxu0 0.0
    %2443 = vmatpush2.msra.mxu0 0.0
    %2444 = vmatprep.subr.mxu0 0.0
    %2445 = vmatpush2.msra.mxu0 0.0
    %2446 = vmatprep.subr.mxu0 0.0
    %2447 = vmatpush2.msra.mxu0 0.0
    %2448 = vmatprep.subr.mxu0 0.0
    %2449 = vmatpush2.msra.mxu0 0.0
    %2450 = vmatprep.subr.mxu0 0.0
    %2451 = vmatpush2.msra.mxu0 0.0
    %2452 = vmatprep.subr.mxu0 0.0
    %2453 = vmatpush2.msra.mxu0 0.0
    %2454 = vmatprep.mubr.f32.mxu0 0.0
    %2455 = vmatmul.mubr.f32.gmra.mxu0 %v2388
    %v2456 = vpop.f32.mrf.mxu0
    %v2457 = vadd.f32 0.0, %v2456
    %v2458 = vpop.f32.mrf.mxu0
    %2459 = vmatprep.mubr.f32.mxu0 0.0
    %2460 = vmatmul.mubr.f32.gmra.mxu0 %v1767
    %v2461 = vpop.f32.mrf.mxu0
    %v2462 = vadd.f32 0.0, %v2461
    %v2463 = vpop.f32.mrf.mxu0
    %2464 = vmatprep.mubr.f32.mxu0 0.0
    %2465 = vmatmul.mubr.f32.gmra.mxu0 %v1770
    %v2466 = vpop.f32.mrf.mxu0
    %v2467 = vadd.f32 0.0, %v2466
    %v2468 = vpop.f32.mrf.mxu0
    %2469 = vmatprep.mubr.f32.mxu0 0.0
    %2470 = vmatmul.mubr.f32.gmra.mxu0 %v1773
    %v2471 = vpop.f32.mrf.mxu0
    %v2472 = vadd.f32 0.0, %v2471
    %v2473 = vpop.f32.mrf.mxu0
    %2474 = vmatprep.mubr.f32.mxu0 0.0
    %2475 = vmatmul.mubr.f32.gmra.mxu0 %v1776
    %v2476 = vpop.f32.mrf.mxu0
    %v2477 = vadd.f32 0.0, %v2476
    %v2478 = vpop.f32.mrf.mxu0
    %2479 = vmatprep.mubr.f32.mxu0 0.0
    %2480 = vmatmul.mubr.f32.gmra.mxu0 %v1779
    %v2481 = vpop.f32.mrf.mxu0
    %v2482 = vadd.f32 0.0, %v2481
    %v2483 = vpop.f32.mrf.mxu0
    %2484 = vmatprep.mubr.f32.mxu0 0.0
    %2485 = vmatmul.mubr.f32.gmra.mxu0 %v1782
    %v2486 = vpop.f32.mrf.mxu0
    %v2487 = vadd.f32 0.0, %v2486
    %v2488 = vpop.f32.mrf.mxu0
    %2489 = vmatprep.mubr.f32.mxu0 0.0
    %2490 = vmatmul.mubr.f32.gmra.mxu0 %v1785
    %v2491 = vpop.f32.mrf.mxu0
    %v2492 = vadd.f32 0.0, %v2491
    %v2493 = vpop.f32.mrf.mxu0
    %2494 = vmatprep.mubr.f32.mxu0 0.0
    %2495 = vmatmul.mubr.f32.gmra.mxu0 %v1788
    %v2496 = vpop.f32.mrf.mxu0
    %v2497 = vadd.f32 0.0, %v2496
    %v2498 = vpop.f32.mrf.mxu0
    %2499 = vdwg.mxu0
    %v2500 = vadd.f32 %v2377, %v2457
    %v2501 = vadd.f32 %v2378, %v2462
    %v2502 = vadd.f32 %v2379, %v2467
    %v2503 = vadd.f32 %v2380, %v2472
    %v2504 = vadd.f32 %v2381, %v2477
    %v2505 = vadd.f32 %v2382, %v2482
    %v2506 = vadd.f32 %v2383, %v2487
    %v2507 = vadd.f32 %v2384, %v2492
    %v2508 = vadd.f32 %v2385, %v2497
    %v2509 = vld [vmem:[#allocation3 + $0x18] sm:$0xff]
    %v2511 = vsel %vm84, %v2509, 0
    %2513 = vmatprep.subr.mxu0 0.0
    %2514 = vmatpush1.msra.mxu0 0.0
    %2515 = vmatprep.subr.mxu0 0.0
    %2516 = vmatpush1.msra.mxu0 0.0
    %2517 = vmatprep.subr.mxu0 0.0
    %2518 = vmatpush1.msra.mxu0 0.0
    %2519 = vmatprep.subr.mxu0 0.0
    %2520 = vmatpush1.msra.mxu0 0.0
    %2521 = vmatprep.subr.mxu0 0.0
    %2522 = vmatpush1.msra.mxu0 0.0
    %2523 = vmatprep.subr.mxu0 0.0
    %2524 = vmatpush1.msra.mxu0 0.0
    %2525 = vmatprep.subr.mxu0 0.0
    %2526 = vmatpush1.msra.mxu0 0.0
    %2527 = vmatprep.subr.mxu0 0.0
    %2528 = vmatpush1.msra.mxu0 0.0
    %2529 = vmatprep.subr.mxu0 0.0
    %2530 = vmatpush1.msra.mxu0 %v2141
    %2531 = vmatprep.subr.mxu0 0.0
    %2532 = vmatpush1.msra.mxu0 %v2140
    %2533 = vmatprep.subr.mxu0 0.0
    %2534 = vmatpush1.msra.mxu0 %v2139
    %2535 = vmatprep.subr.mxu0 0.0
    %2536 = vmatpush1.msra.mxu0 %v2138
    %2537 = vmatprep.subr.mxu0 0.0
    %2538 = vmatpush1.msra.mxu0 %v2137
    %2539 = vmatprep.subr.mxu0 0.0
    %2540 = vmatpush1.msra.mxu0 %v2136
    %2541 = vmatprep.subr.mxu0 0.0
    %2542 = vmatpush1.msra.mxu0 %v2135
    %2543 = vmatprep.subr.mxu0 0.0
    %2544 = vmatpush1.msra.mxu0 %v2134
    %2545 = vmatprep.subr.mxu0 0.0
    %2546 = vmatpush2.msra.mxu0 0.0
    %2547 = vmatprep.subr.mxu0 0.0
    %2548 = vmatpush2.msra.mxu0 0.0
    %2549 = vmatprep.subr.mxu0 0.0
    %2550 = vmatpush2.msra.mxu0 0.0
    %2551 = vmatprep.subr.mxu0 0.0
    %2552 = vmatpush2.msra.mxu0 0.0
    %2553 = vmatprep.subr.mxu0 0.0
    %2554 = vmatpush2.msra.mxu0 0.0
    %2555 = vmatprep.subr.mxu0 0.0
    %2556 = vmatpush2.msra.mxu0 0.0
    %2557 = vmatprep.subr.mxu0 0.0
    %2558 = vmatpush2.msra.mxu0 0.0
    %2559 = vmatprep.subr.mxu0 0.0
    %2560 = vmatpush2.msra.mxu0 0.0
    %2561 = vmatprep.subr.mxu0 0.0
    %2562 = vmatpush2.msra.mxu0 0.0
    %2563 = vmatprep.subr.mxu0 0.0
    %2564 = vmatpush2.msra.mxu0 0.0
    %2565 = vmatprep.subr.mxu0 0.0
    %2566 = vmatpush2.msra.mxu0 0.0
    %2567 = vmatprep.subr.mxu0 0.0
    %2568 = vmatpush2.msra.mxu0 0.0
    %2569 = vmatprep.subr.mxu0 0.0
    %2570 = vmatpush2.msra.mxu0 0.0
    %2571 = vmatprep.subr.mxu0 0.0
    %2572 = vmatpush2.msra.mxu0 0.0
    %2573 = vmatprep.subr.mxu0 0.0
    %2574 = vmatpush2.msra.mxu0 0.0
    %2575 = vmatprep.subr.mxu0 0.0
    %2576 = vmatpush2.msra.mxu0 0.0
    %2577 = vmatprep.mubr.f32.mxu0 0.0
    %2578 = vmatmul.mubr.f32.gmra.mxu0 %v2511
    %v2579 = vpop.f32.mrf.mxu0
    %v2580 = vadd.f32 0.0, %v2579
    %v2581 = vpop.f32.mrf.mxu0
    %2582 = vmatprep.mubr.f32.mxu0 0.0
    %2583 = vmatmul.mubr.f32.gmra.mxu0 %v1928
    %v2584 = vpop.f32.mrf.mxu0
    %v2585 = vadd.f32 0.0, %v2584
    %v2586 = vpop.f32.mrf.mxu0
    %2587 = vmatprep.mubr.f32.mxu0 0.0
    %2588 = vmatmul.mubr.f32.gmra.mxu0 %v1931
    %v2589 = vpop.f32.mrf.mxu0
    %v2590 = vadd.f32 0.0, %v2589
    %v2591 = vpop.f32.mrf.mxu0
    %2592 = vmatprep.mubr.f32.mxu0 0.0
    %2593 = vmatmul.mubr.f32.gmra.mxu0 %v1934
    %v2594 = vpop.f32.mrf.mxu0
    %v2595 = vadd.f32 0.0, %v2594
    %v2596 = vpop.f32.mrf.mxu0
    %2597 = vmatprep.mubr.f32.mxu0 0.0
    %2598 = vmatmul.mubr.f32.gmra.mxu0 %v1937
    %v2599 = vpop.f32.mrf.mxu0
    %v2600 = vadd.f32 0.0, %v2599
    %v2601 = vpop.f32.mrf.mxu0
    %2602 = vmatprep.mubr.f32.mxu0 0.0
    %2603 = vmatmul.mubr.f32.gmra.mxu0 %v1940
    %v2604 = vpop.f32.mrf.mxu0
    %v2605 = vadd.f32 0.0, %v2604
    %v2606 = vpop.f32.mrf.mxu0
    %2607 = vmatprep.mubr.f32.mxu0 0.0
    %2608 = vmatmul.mubr.f32.gmra.mxu0 %v1943
    %v2609 = vpop.f32.mrf.mxu0
    %v2610 = vadd.f32 0.0, %v2609
    %v2611 = vpop.f32.mrf.mxu0
    %2612 = vmatprep.mubr.f32.mxu0 0.0
    %2613 = vmatmul.mubr.f32.gmra.mxu0 %v1946
    %v2614 = vpop.f32.mrf.mxu0
    %v2615 = vadd.f32 0.0, %v2614
    %v2616 = vpop.f32.mrf.mxu0
    %2617 = vmatprep.mubr.f32.mxu0 0.0
    %2618 = vmatmul.mubr.f32.gmra.mxu0 %v1949
    %v2619 = vpop.f32.mrf.mxu0
    %v2620 = vadd.f32 0.0, %v2619
    %v2621 = vpop.f32.mrf.mxu0
    %2622 = vdwg.mxu0
    %v2623 = vadd.f32 %v2500, %v2580
    %v2624 = vadd.f32 %v2501, %v2585
    %v2625 = vadd.f32 %v2502, %v2590
    %v2626 = vadd.f32 %v2503, %v2595
    %v2627 = vadd.f32 %v2504, %v2600
    %v2628 = vadd.f32 %v2505, %v2605
    %v2629 = vadd.f32 %v2506, %v2610
    %v2630 = vadd.f32 %v2507, %v2615
    %v2631 = vadd.f32 %v2508, %v2620
    %v2632 = vmax.f32 %v2623, 0.0
    %v2633 = vmax.f32 %v2624, 0.0
    %v2634 = vmax.f32 %v2625, 0.0
    %v2635 = vmax.f32 %v2626, 0.0
    %v2636 = vmax.f32 %v2627, 0.0
    %v2637 = vmax.f32 %v2628, 0.0
    %v2638 = vmax.f32 %v2629, 0.0
    %v2639 = vmax.f32 %v2630, 0.0
    %v2640 = vmax.f32 %v2631, 0.0
    %v2641 = vmax.f32 %v2632, %v2636
    %v2642 = vmax.f32 %v2633, %v2637
    %v2643 = vmax.f32 %v2634, %v2638
    %v2644 = vmax.f32 %v2635, %v2639
    %v2645 = vmax.f32 %v2641, %v2640
    %v2646 = vmax.f32 %v2645, %v2642
    %v2647 = vmax.f32 %v2643, %v2644
    %v2648 = vmax.f32 %v2646, %v2647
    %v2649 = vld [vmem:[%s8] sm:$0xff]
    %v2650 = vld [vmem:[%s8 + $0x8] sm:$0xff]
    %v2651 = vld [vmem:[%s8 + $0x10] sm:$0xff]
    %v2652 = vld [vmem:[%s8 + $0x18] sm:$0xff]
    %v2653 = vld [vmem:[%s8 + $0x20] sm:$0xff]
    %v2654 = vld [vmem:[%s8 + $0x28] sm:$0xff]
    %v2655 = vld [vmem:[%s8 + $0x30] sm:$0xff]
    %v2656 = vld [vmem:[%s8 + $0x38] sm:$0xff]
    %v2657 = vld [vmem:[%s8 + $0x40] sm:$0xff]
    %v2658 = vld [vmem:[%s8 + $0x48] sm:$0xff]
    %v2659 = vld [vmem:[%s8 + $0x50] sm:$0xff]
    %v2660 = vld [vmem:[%s8 + $0x58] sm:$0xff]
    %v2661 = vld [vmem:[%s8 + $0x60] sm:$0xff]
    %v2662 = vld [vmem:[%s8 + $0x68] sm:$0xff]
    %v2663 = vld [vmem:[%s8 + $0x70] sm:$0xff]
    %v2664 = vld [vmem:[%s8 + $0x78] sm:$0xff]
    %v2665 = vld [vmem:[%s8 + $0x80] sm:$0xff]
    %v2666 = vld [vmem:[%s8 + $0x88] sm:$0xff]
    %v2667 = vld [vmem:[%s8 + $0x90] sm:$0xff]
    %v2668 = vld [vmem:[%s8 + $0x98] sm:$0xff]
    %v2669 = vld [vmem:[%s8 + $0xa0] sm:$0xff]
    %v2670 = vld [vmem:[%s8 + $0xa8] sm:$0xff]
    %v2671 = vld [vmem:[%s8 + $0xb0] sm:$0xff]
    %v2672 = vld [vmem:[%s8 + $0xb8] sm:$0xff]
    %v2673 = vld [vmem:[%s8 + $0xc0] sm:$0xff]
    %v2674 = vld [vmem:[%s8 + $0xc8] sm:$0xff]
    %v2675 = vld [vmem:[%s8 + $0xd0] sm:$0xff]
    %v2676 = vld [vmem:[%s8 + $0xd8] sm:$0xff]
    %v2677 = vld [vmem:[%s8 + $0xe0] sm:$0xff]
    %v2678 = vld [vmem:[%s8 + $0xe8] sm:$0xff]
    %v2679 = vld [vmem:[%s8 + $0xf0] sm:$0xff]
    %v2680 = vld [vmem:[%s8 + $0xf8] sm:$0xff]
    %v2681 = vld [vmem:[%s9] sm:$0xff]
    %v2682 = vld [vmem:[%s9 + $0x8] sm:$0xff]
    %v2683 = vld [vmem:[%s9 + $0x10] sm:$0xff]
    %v2684 = vld [vmem:[%s9 + $0x18] sm:$0xff]
    %v2685 = vld [vmem:[%s9 + $0x20] sm:$0xff]
    %v2686 = vld [vmem:[%s9 + $0x28] sm:$0xff]
    %v2687 = vld [vmem:[%s9 + $0x30] sm:$0xff]
    %v2688 = vld [vmem:[%s9 + $0x38] sm:$0xff]
    %v2689 = vld [vmem:[%s9 + $0x40] sm:$0xff]
    %v2690 = vld [vmem:[%s9 + $0x48] sm:$0xff]
    %v2691 = vld [vmem:[%s9 + $0x50] sm:$0xff]
    %v2692 = vld [vmem:[%s9 + $0x58] sm:$0xff]
    %v2693 = vld [vmem:[%s9 + $0x60] sm:$0xff]
    %v2694 = vld [vmem:[%s9 + $0x68] sm:$0xff]
    %v2695 = vld [vmem:[%s9 + $0x70] sm:$0xff]
    %v2696 = vld [vmem:[%s9 + $0x78] sm:$0xff]
    %2697 = vmatprep.subr.mxu0 0.0
    %2698 = vmatpush1.msra.mxu0 %v2696
    %2699 = vmatprep.subr.mxu0 0.0
    %2700 = vmatpush1.msra.mxu0 %v2695
    %2701 = vmatprep.subr.mxu0 0.0
    %2702 = vmatpush1.msra.mxu0 %v2694
    %2703 = vmatprep.subr.mxu0 0.0
    %2704 = vmatpush1.msra.mxu0 %v2693
    %2705 = vmatprep.subr.mxu0 0.0
    %2706 = vmatpush1.msra.mxu0 %v2692
    %2707 = vmatprep.subr.mxu0 0.0
    %2708 = vmatpush1.msra.mxu0 %v2691
    %2709 = vmatprep.subr.mxu0 0.0
    %2710 = vmatpush1.msra.mxu0 %v2690
    %2711 = vmatprep.subr.mxu0 0.0
    %2712 = vmatpush1.msra.mxu0 %v2689
    %2713 = vmatprep.subr.mxu0 0.0
    %2714 = vmatpush1.msra.mxu0 %v2688
    %2715 = vmatprep.subr.mxu0 0.0
    %2716 = vmatpush1.msra.mxu0 %v2687
    %2717 = vmatprep.subr.mxu0 0.0
    %2718 = vmatpush1.msra.mxu0 %v2686
    %2719 = vmatprep.subr.mxu0 0.0
    %2720 = vmatpush1.msra.mxu0 %v2685
    %2721 = vmatprep.subr.mxu0 0.0
    %2722 = vmatpush1.msra.mxu0 %v2684
    %2723 = vmatprep.subr.mxu0 0.0
    %2724 = vmatpush1.msra.mxu0 %v2683
    %2725 = vmatprep.subr.mxu0 0.0
    %2726 = vmatpush1.msra.mxu0 %v2682
    %2727 = vmatprep.subr.mxu0 0.0
    %2728 = vmatpush1.msra.mxu0 %v2681
    %2729 = vmatprep.subr.mxu0 0.0
    %2730 = vmatpush2.msra.mxu0 0.0
    %2731 = vmatprep.subr.mxu0 0.0
    %2732 = vmatpush2.msra.mxu0 0.0
    %2733 = vmatprep.subr.mxu0 0.0
    %2734 = vmatpush2.msra.mxu0 0.0
    %2735 = vmatprep.subr.mxu0 0.0
    %2736 = vmatpush2.msra.mxu0 0.0
    %2737 = vmatprep.subr.mxu0 0.0
    %2738 = vmatpush2.msra.mxu0 0.0
    %2739 = vmatprep.subr.mxu0 0.0
    %2740 = vmatpush2.msra.mxu0 0.0
    %2741 = vmatprep.subr.mxu0 0.0
    %2742 = vmatpush2.msra.mxu0 0.0
    %2743 = vmatprep.subr.mxu0 0.0
    %2744 = vmatpush2.msra.mxu0 0.0
    %2745 = vmatprep.subr.mxu0 0.0
    %2746 = vmatpush2.msra.mxu0 0.0
    %2747 = vmatprep.subr.mxu0 0.0
    %2748 = vmatpush2.msra.mxu0 0.0
    %2749 = vmatprep.subr.mxu0 0.0
    %2750 = vmatpush2.msra.mxu0 0.0
    %2751 = vmatprep.subr.mxu0 0.0
    %2752 = vmatpush2.msra.mxu0 0.0
    %2753 = vmatprep.subr.mxu0 0.0
    %2754 = vmatpush2.msra.mxu0 0.0
    %2755 = vmatprep.subr.mxu0 0.0
    %2756 = vmatpush2.msra.mxu0 0.0
    %2757 = vmatprep.subr.mxu0 0.0
    %2758 = vmatpush2.msra.mxu0 0.0
    %2759 = vmatprep.subr.mxu0 0.0
    %2760 = vmatpush2.msra.mxu0 0.0
    %2761 = vmatprep.mubr.f32.mxu0 0.0
    %2762 = vmatmul.mubr.f32.gmra.mxu0 %v2648
    %v2763 = vpop.f32.mrf.mxu0
    %v2764 = vadd.f32 0.0, %v2763
    %v2765 = vpop.f32.mrf.mxu0
    %2766 = vdwg.mxu0
    %2767 = vmatprep.subr.mxu0 0.0
    %2768 = vmatpush1.msra.mxu0 %v2664
    %2769 = vmatprep.subr.mxu0 0.0
    %2770 = vmatpush1.msra.mxu0 %v2663
    %2771 = vmatprep.subr.mxu0 0.0
    %2772 = vmatpush1.msra.mxu0 %v2662
    %2773 = vmatprep.subr.mxu0 0.0
    %2774 = vmatpush1.msra.mxu0 %v2661
    %2775 = vmatprep.subr.mxu0 0.0
    %2776 = vmatpush1.msra.mxu0 %v2660
    %2777 = vmatprep.subr.mxu0 0.0
    %2778 = vmatpush1.msra.mxu0 %v2659
    %2779 = vmatprep.subr.mxu0 0.0
    %2780 = vmatpush1.msra.mxu0 %v2658
    %2781 = vmatprep.subr.mxu0 0.0
    %2782 = vmatpush1.msra.mxu0 %v2657
    %2783 = vmatprep.subr.mxu0 0.0
    %2784 = vmatpush1.msra.mxu0 %v2656
    %2785 = vmatprep.subr.mxu0 0.0
    %2786 = vmatpush1.msra.mxu0 %v2655
    %2787 = vmatprep.subr.mxu0 0.0
    %2788 = vmatpush1.msra.mxu0 %v2654
    %2789 = vmatprep.subr.mxu0 0.0
    %2790 = vmatpush1.msra.mxu0 %v2653
    %2791 = vmatprep.subr.mxu0 0.0
    %2792 = vmatpush1.msra.mxu0 %v2652
    %2793 = vmatprep.subr.mxu0 0.0
    %2794 = vmatpush1.msra.mxu0 %v2651
    %2795 = vmatprep.subr.mxu0 0.0
    %2796 = vmatpush1.msra.mxu0 %v2650
    %2797 = vmatprep.subr.mxu0 0.0
    %2798 = vmatpush1.msra.mxu0 %v2649
    %2799 = vmatprep.subr.mxu0 0.0
    %2800 = vmatpush2.msra.mxu0 %v2680
    %2801 = vmatprep.subr.mxu0 0.0
    %2802 = vmatpush2.msra.mxu0 %v2679
    %2803 = vmatprep.subr.mxu0 0.0
    %2804 = vmatpush2.msra.mxu0 %v2678
    %2805 = vmatprep.subr.mxu0 0.0
    %2806 = vmatpush2.msra.mxu0 %v2677
    %2807 = vmatprep.subr.mxu0 0.0
    %2808 = vmatpush2.msra.mxu0 %v2676
    %2809 = vmatprep.subr.mxu0 0.0
    %2810 = vmatpush2.msra.mxu0 %v2675
    %2811 = vmatprep.subr.mxu0 0.0
    %2812 = vmatpush2.msra.mxu0 %v2674
    %2813 = vmatprep.subr.mxu0 0.0
    %2814 = vmatpush2.msra.mxu0 %v2673
    %2815 = vmatprep.subr.mxu0 0.0
    %2816 = vmatpush2.msra.mxu0 %v2672
    %2817 = vmatprep.subr.mxu0 0.0
    %2818 = vmatpush2.msra.mxu0 %v2671
    %2819 = vmatprep.subr.mxu0 0.0
    %2820 = vmatpush2.msra.mxu0 %v2670
    %2821 = vmatprep.subr.mxu0 0.0
    %2822 = vmatpush2.msra.mxu0 %v2669
    %2823 = vmatprep.subr.mxu0 0.0
    %2824 = vmatpush2.msra.mxu0 %v2668
    %2825 = vmatprep.subr.mxu0 0.0
    %2826 = vmatpush2.msra.mxu0 %v2667
    %2827 = vmatprep.subr.mxu0 0.0
    %2828 = vmatpush2.msra.mxu0 %v2666
    %2829 = vmatprep.subr.mxu0 0.0
    %2830 = vmatpush2.msra.mxu0 %v2665
    %2831 = vmatprep.mubr.f32.mxu0 %v2109
    %2832 = vmatmul.mubr.f32.gmra.mxu0 %v2102
    %v2833 = vpop.f32.mrf.mxu0
    %v2834 = vadd.f32 %v2764, %v2833
    %v2835 = vpop.f32.mrf.mxu0
    %2836 = vdwg.mxu0
    %v2837 = vld [vmem:[%s10] sm:$0x1]
    %v2839 = vlaneseq
    %v2840 = vshrl.u32 %v2839, 7
    %v2841 = vsub.s32 0, %v2840
    %v2842 = vrot.slane %v2837, %v2841
    %v2844 = vadd.f32 %v2834, %v2842
    %vm2845 = vcmask 17408
    %2846 = vst.msk [vmem:[#allocation12] sm:$0x3] %vm2845, %v2844
    // Predicated region
    $region54: #{tpu_custom_call.1} parent=1 // pred_check
      _
    $region55: #{tpu_custom_call.1} parent=1 // pred_check_branch
      %2848 = sbr.rel (0) target = $region57
    $region56: #{tpu_custom_call.1} parent=1 // pred_region
      %s2850 = ssub.s32 32, 32
      %2851 = vsyncadd [#allocation8], %s2850
      %s2853 = sshll.u32 [#allocation12], 4
      %s2854 = int_to_ptr.vmem [resolvable:$true] %s2853
      %2856 = dma.vmem_to_hbm [thread:$0]  %s2854, 32, %s11, [#allocation8]
    $region57: #{tpu_custom_call.1} parent=1 // pred_fallthru
      _
    // Predicated region
    $region58: #{tpu_custom_call.1} parent=1 // pred_check
      _
    $region59: #{tpu_custom_call.1} parent=1 // pred_check_branch
      %2858 = sbr.rel (0) target = $region61
    $region60: #{tpu_custom_call.1} parent=1 // pred_region
      %2859 = dma.done [#allocation8], 32
    $region61: #{tpu_custom_call.1} parent=1 // pred_fallthru
      _
    %2860 = vsyncpa [#allocation7], 1
    %2861 = vsyncpa [#allocation10], 1
    %2862 = vsyncpa [#allocation8], 1

</llo_original>
